<compile_context>
chip_gen: v7x
topology: tpu7x:2x2x1
jax: 0.10.0
libtpu: 0.0.40
codegen_flags: <defaults>
</compile_context>

<pallas_src>
import functools

import jax
import jax.numpy as jnp
from jax.experimental import pallas as pl
from jax.experimental.pallas import tpu as pltpu

# ----------------------------- small BERT config -----------------------------
VOCAB = 128          # vocab_size          (bert-base-cased: 28996)
HIDDEN = 32          # hidden_size         (bert-base: 768)
HEADS = 4            # num_attention_heads (bert-base: 12)
HEAD_DIM = HIDDEN // HEADS
INTERMEDIATE = 64    # intermediate_size   (bert-base: 3072)
LAYERS = 2           # num_hidden_layers   (bert-base: 12)
MAX_POS = 32         # max_position_embeddings
TYPE_VOCAB = 2
NUM_CLASSES = 3
LN_EPS = 1e-12

BATCH = 2
SEQ = 8


# ------------------------------ in-kernel helpers ------------------------------
def _layernorm(x, g, b):
    mean = jnp.mean(x, axis=-1, keepdims=True)
    var = jnp.mean((x - mean) ** 2, axis=-1, keepdims=True)
    return (x - mean) * jax.lax.rsqrt(var + LN_EPS) * g + b


def _gelu(x):
    # TODO(synk): PyTorch BERT uses erf-GELU; tanh approximation differs by ~1e-3.
    return 0.5 * x * (1.0 + jnp.tanh(0.7978845608028654 * (x + 0.044715 * x * x * x)))


# ------------------------------- fused Pallas kernel -------------------------------
def _bert_forward_kernel(emb_ref, mask_ref,
                         eg_ref, eb_ref,
                         wqkv_ref, bqkv_ref, wo_ref, bo_ref,
                         l1g_ref, l1b_ref, w1_ref, b1_ref, w2_ref, b2_ref,
                         l2g_ref, l2b_ref,
                         pw_ref, pb_ref, cw_ref, cb_ref,
                         o_ref, *, batch, seq, heads, head_dim, layers):
    """Embedding-LN -> LAYERS x encoder layer -> pooler(tanh) -> classifier, fully in VMEM."""
    H = heads * head_dim
    scale = 1.0 / (head_dim ** 0.5)

    # Embedding LayerNorm (the word/pos/type gather+sum happens in the JAX wrapper).
    h = _layernorm(emb_ref[...].astype(jnp.float32), eg_ref[...], eb_ref[...])   # (B*S, H)
    mask = mask_ref[...].astype(jnp.float32)                                     # (B, S)

    # Encoder stack: static Python loop, per-layer weights indexed off the stacked refs.
    for l in range(layers):
        # Fused QKV projection with the concatenated (H, 3H) weight.
        qkv = jnp.dot(h, wqkv_ref[l], preferred_element_type=jnp.float32) + bqkv_ref[l]
        q, k, v = qkv[:, :H], qkv[:, H:2 * H], qkv[:, 2 * H:]

        # All heads / all batches inside the kernel (static unroll over tiny matmuls).
        ctx_heads = []
        for hd in range(heads):
            c0, c1 = hd * head_dim, (hd + 1) * head_dim
            rows = []
            for b in range(batch):
                r0, r1 = b * seq, (b + 1) * seq
                qb, kb, vb = q[r0:r1, c0:c1], k[r0:r1, c0:c1], v[r0:r1, c0:c1]
                s = jnp.dot(qb, kb.T, preferred_element_type=jnp.float32) * scale
                s = s + mask[b:b + 1, :]
                s = s - jnp.max(s, axis=-1, keepdims=True)
                p = jnp.exp(s)
                p = p * pl.reciprocal(jnp.sum(p, axis=-1, keepdims=True), approx=True)
                rows.append(jnp.dot(p, vb, preferred_element_type=jnp.float32))
            ctx_heads.append(jnp.concatenate(rows, axis=0))          # (B*S, D)
        ctx = jnp.concatenate(ctx_heads, axis=1)                     # (B*S, H)

        # Output projection + first residual LayerNorm.
        attn_out = jnp.dot(ctx, wo_ref[l], preferred_element_type=jnp.float32) + bo_ref[l]
        h1 = _layernorm(attn_out + h, l1g_ref[l], l1b_ref[l])

        # Feed-forward + second residual LayerNorm.
        ff = _gelu(jnp.dot(h1, w1_ref[l], preferred_element_type=jnp.float32) + b1_ref[l])
        ff = jnp.dot(ff, w2_ref[l], preferred_element_type=jnp.float32) + b2_ref[l]
        h = _layernorm(ff + h1, l2g_ref[l], l2b_ref[l])

    # Pooler: take the [CLS] (first) token of every sequence, dense + tanh.
    cls = jnp.concatenate([h[b * seq:b * seq + 1, :] for b in range(batch)], axis=0)
    pooled = jnp.tanh(jnp.dot(cls, pw_ref[...], preferred_element_type=jnp.float32)
                      + pb_ref[...])
    # Dropout(p=0.5) is identity in eval mode.
    logits = jnp.dot(pooled, cw_ref[...], preferred_element_type=jnp.float32) + cb_ref[...]
    o_ref[...] = logits.astype(o_ref.dtype)


# ------------------------------- kernel wrapper -------------------------------
def _spec(shape):
    n = len(shape)
    return pl.BlockSpec(shape, lambda i, _n=n: (0,) * _n)


def bert_fused(emb, mask_bias, p, *, batch, seq):
    kernel = functools.partial(_bert_forward_kernel, batch=batch, seq=seq,
                               heads=HEADS, head_dim=HEAD_DIM, layers=LAYERS)
    args = (emb, mask_bias,
            p["emb_ln_g"], p["emb_ln_b"],
            p["wqkv"], p["bqkv"], p["wo"], p["bo"],
            p["ln1_g"], p["ln1_b"], p["w1"], p["b1"], p["w2"], p["b2"],
            p["ln2_g"], p["ln2_b"],
            p["pool_w"], p["pool_b"], p["cls_w"], p["cls_b"])
    return pl.pallas_call(
        kernel,
        out_shape=jax.ShapeDtypeStruct((batch, NUM_CLASSES), jnp.float32),
        grid=(1,),
        in_specs=[_spec(a.shape) for a in args],
        out_specs=_spec((batch, NUM_CLASSES)),
        compiler_params=pltpu.CompilerParams(dimension_semantics=("arbitrary",)),
    )(*args)


# ------------------------------ parameter setup ------------------------------
def init_params(key):
    def nrm(k, shape):
        return (0.02 * jax.random.normal(k, shape)).astype(jnp.float32)

    keys = iter(jax.random.split(key, 8 + LAYERS * 8))
    p = {
        "word_emb": nrm(next(keys), (VOCAB, HIDDEN)),
        "pos_emb": nrm(next(keys), (MAX_POS, HIDDEN)),
        "type_emb": nrm(next(keys), (TYPE_VOCAB, HIDDEN)),
        "emb_ln_g": jnp.ones((1, HIDDEN), jnp.float32),
        "emb_ln_b": jnp.zeros((1, HIDDEN), jnp.float32),
        "pool_w": nrm(next(keys), (HIDDEN, HIDDEN)),
        "pool_b": jnp.zeros((1, HIDDEN), jnp.float32),
        "cls_w": nrm(next(keys), (HIDDEN, NUM_CLASSES)),
        "cls_b": jnp.zeros((1, NUM_CLASSES), jnp.float32),
    }
    wqkv, wo, w1, w2 = [], [], [], []
    for _ in range(LAYERS):
        wq = nrm(next(keys), (HIDDEN, HIDDEN))
        wk = nrm(next(keys), (HIDDEN, HIDDEN))
        wv = nrm(next(keys), (HIDDEN, HIDDEN))
        # Q/K/V weights concatenated once at init -> single (H, 3H) matmul in-kernel.
        wqkv.append(jnp.concatenate([wq, wk, wv], axis=1))
        wo.append(nrm(next(keys), (HIDDEN, HIDDEN)))
        w1.append(nrm(next(keys), (HIDDEN, INTERMEDIATE)))
        w2.append(nrm(next(keys), (INTERMEDIATE, HIDDEN)))
    p["wqkv"] = jnp.stack(wqkv)
    p["bqkv"] = jnp.zeros((LAYERS, 1, 3 * HIDDEN), jnp.float32)
    p["wo"] = jnp.stack(wo)
    p["bo"] = jnp.zeros((LAYERS, 1, HIDDEN), jnp.float32)
    p["ln1_g"] = jnp.ones((LAYERS, 1, HIDDEN), jnp.float32)
    p["ln1_b"] = jnp.zeros((LAYERS, 1, HIDDEN), jnp.float32)
    p["w1"] = jnp.stack(w1)
    p["b1"] = jnp.zeros((LAYERS, 1, INTERMEDIATE), jnp.float32)
    p["w2"] = jnp.stack(w2)
    p["b2"] = jnp.zeros((LAYERS, 1, HIDDEN), jnp.float32)
    p["ln2_g"] = jnp.ones((LAYERS, 1, HIDDEN), jnp.float32)
    p["ln2_b"] = jnp.zeros((LAYERS, 1, HIDDEN), jnp.float32)
    return p


# ------------------------------- forward (glue) -------------------------------
@jax.jit
def bert_classifier_forward(params, input_ids, attention_mask):
    B, S = input_ids.shape
    # Embedding gather + sum is plain-JAX glue (data-dependent gather); everything else
    # runs inside the single fused Pallas kernel.
    word = jnp.take(params["word_emb"], input_ids, axis=0)             # (B, S, H)
    pos = params["pos_emb"][:S][None, :, :]                            # (1, S, H)
    tok = params["type_emb"][0][None, None, :]                         # token_type_ids = 0
    emb = (word + pos + tok).reshape(B * S, HIDDEN).astype(jnp.float32)

    # Extended attention mask: (1 - mask) * -10000, shape (B, S) additive bias.
    mask_bias = (1.0 - attention_mask.astype(jnp.float32)) * -10000.0

    return bert_fused(emb, mask_bias, params, batch=B, seq=S)


if __name__ == "__main__":
    key = jax.random.PRNGKey(0)
    pkey, ikey = jax.random.split(key)
    params = init_params(pkey)

    input_ids = jax.random.randint(ikey, (BATCH, SEQ), 0, VOCAB, dtype=jnp.int32)
    attention_mask = jnp.ones((BATCH, SEQ), dtype=jnp.int32)
    # make it interesting: mask the tail of the second sequence
    attention_mask = attention_mask.at[1, SEQ - 2:].set(0)

    logits = bert_classifier_forward(params, input_ids, attention_mask)
    logits = jax.block_until_ready(logits)
    assert logits.shape == (BATCH, NUM_CLASSES) and logits.dtype == jnp.float32
    print("KERNEL_OK")
</pallas_src>

<mosaic_0001>
module attributes {stable_mosaic.version = 11 : i64} {
  func.func @_bert_forward_kernel(%arg0: i32, %arg1: memref<16x32xf32, #tpu.memory_space<vmem>>, %arg2: memref<2x8xf32, #tpu.memory_space<vmem>>, %arg3: memref<1x32xf32, #tpu.memory_space<vmem>>, %arg4: memref<1x32xf32, #tpu.memory_space<vmem>>, %arg5: memref<2x32x96xf32, #tpu.memory_space<vmem>>, %arg6: memref<2x1x96xf32, #tpu.memory_space<vmem>>, %arg7: memref<2x32x32xf32, #tpu.memory_space<vmem>>, %arg8: memref<2x1x32xf32, #tpu.memory_space<vmem>>, %arg9: memref<2x1x32xf32, #tpu.memory_space<vmem>>, %arg10: memref<2x1x32xf32, #tpu.memory_space<vmem>>, %arg11: memref<2x32x64xf32, #tpu.memory_space<vmem>>, %arg12: memref<2x1x64xf32, #tpu.memory_space<vmem>>, %arg13: memref<2x64x32xf32, #tpu.memory_space<vmem>>, %arg14: memref<2x1x32xf32, #tpu.memory_space<vmem>>, %arg15: memref<2x1x32xf32, #tpu.memory_space<vmem>>, %arg16: memref<2x1x32xf32, #tpu.memory_space<vmem>>, %arg17: memref<32x32xf32, #tpu.memory_space<vmem>>, %arg18: memref<1x32xf32, #tpu.memory_space<vmem>>, %arg19: memref<32x3xf32, #tpu.memory_space<vmem>>, %arg20: memref<1x3xf32, #tpu.memory_space<vmem>>, %arg21: memref<2x3xf32, #tpu.memory_space<vmem>>) attributes {dimension_semantics = [#tpu.dimension_semantics<arbitrary>], iteration_bounds = array<i64: 1>, scalar_prefetch = 0 : i64, scratch_operands = 0 : i64, tpu.core_type = #tpu.core_type<tc>, window_params = [{pipeline_mode = #tpu.pipeline_mode<synchronous>, transform_indices = @transform_0, window_bounds = array<i64: 16, 32>}, {pipeline_mode = #tpu.pipeline_mode<synchronous>, transform_indices = @transform_1, window_bounds = array<i64: 2, 8>}, {pipeline_mode = #tpu.pipeline_mode<synchronous>, transform_indices = @transform_2, window_bounds = array<i64: 1, 32>}, {pipeline_mode = #tpu.pipeline_mode<synchronous>, transform_indices = @transform_3, window_bounds = array<i64: 1, 32>}, {pipeline_mode = #tpu.pipeline_mode<synchronous>, transform_indices = @transform_4, window_bounds = array<i64: 2, 32, 96>}, {pipeline_mode = #tpu.pipeline_mode<synchronous>, transform_indices = @transform_5, window_bounds = array<i64: 2, 1, 96>}, {pipeline_mode = #tpu.pipeline_mode<synchronous>, transform_indices = @transform_6, window_bounds = array<i64: 2, 32, 32>}, {pipeline_mode = #tpu.pipeline_mode<synchronous>, transform_indices = @transform_7, window_bounds = array<i64: 2, 1, 32>}, {pipeline_mode = #tpu.pipeline_mode<synchronous>, transform_indices = @transform_8, window_bounds = array<i64: 2, 1, 32>}, {pipeline_mode = #tpu.pipeline_mode<synchronous>, transform_indices = @transform_9, window_bounds = array<i64: 2, 1, 32>}, {pipeline_mode = #tpu.pipeline_mode<synchronous>, transform_indices = @transform_10, window_bounds = array<i64: 2, 32, 64>}, {pipeline_mode = #tpu.pipeline_mode<synchronous>, transform_indices = @transform_11, window_bounds = array<i64: 2, 1, 64>}, {pipeline_mode = #tpu.pipeline_mode<synchronous>, transform_indices = @transform_12, window_bounds = array<i64: 2, 64, 32>}, {pipeline_mode = #tpu.pipeline_mode<synchronous>, transform_indices = @transform_13, window_bounds = array<i64: 2, 1, 32>}, {pipeline_mode = #tpu.pipeline_mode<synchronous>, transform_indices = @transform_14, window_bounds = array<i64: 2, 1, 32>}, {pipeline_mode = #tpu.pipeline_mode<synchronous>, transform_indices = @transform_15, window_bounds = array<i64: 2, 1, 32>}, {pipeline_mode = #tpu.pipeline_mode<synchronous>, transform_indices = @transform_16, window_bounds = array<i64: 32, 32>}, {pipeline_mode = #tpu.pipeline_mode<synchronous>, transform_indices = @transform_17, window_bounds = array<i64: 1, 32>}, {pipeline_mode = #tpu.pipeline_mode<synchronous>, transform_indices = @transform_18, window_bounds = array<i64: 32, 3>}, {pipeline_mode = #tpu.pipeline_mode<synchronous>, transform_indices = @transform_19, window_bounds = array<i64: 1, 3>}, {pipeline_mode = #tpu.pipeline_mode<synchronous>, transform_indices = @transform_20, window_bounds = array<i64: 2, 3>}]} {
    %c0 = arith.constant 0 : index
    %c0_0 = arith.constant 0 : index
    %0 = vector.load %arg1[%c0, %c0_0] : memref<16x32xf32, #tpu.memory_space<vmem>>, vector<16x32xf32>
    %c0_1 = arith.constant 0 : index
    %c0_2 = arith.constant 0 : index
    %1 = vector.load %arg3[%c0_1, %c0_2] : memref<1x32xf32, #tpu.memory_space<vmem>>, vector<1x32xf32>
    %c0_3 = arith.constant 0 : index
    %c0_4 = arith.constant 0 : index
    %2 = vector.load %arg4[%c0_3, %c0_4] : memref<1x32xf32, #tpu.memory_space<vmem>>, vector<1x32xf32>
    %cst = arith.constant dense<0.000000e+00> : vector<16xf32>
    %3 = vector.multi_reduction <add>, %0, %cst [1] : vector<16x32xf32> to vector<16xf32>
    %4 = vector.shape_cast %3 : vector<16xf32> to vector<16x1xf32>
    %cst_5 = arith.constant 3.200000e+01 : f32
    %5 = vector.broadcast %cst_5 : f32 to vector<16x1xf32>
    %6 = arith.divf %4, %5 : vector<16x1xf32>
    %7 = vector.broadcast %6 : vector<16x1xf32> to vector<16x32xf32>
    %8 = arith.subf %0, %7 : vector<16x32xf32>
    %9 = arith.mulf %8, %8 : vector<16x32xf32>
    %cst_6 = arith.constant dense<0.000000e+00> : vector<16xf32>
    %10 = vector.multi_reduction <add>, %9, %cst_6 [1] : vector<16x32xf32> to vector<16xf32>
    %11 = vector.shape_cast %10 : vector<16xf32> to vector<16x1xf32>
    %cst_7 = arith.constant 3.200000e+01 : f32
    %12 = vector.broadcast %cst_7 : f32 to vector<16x1xf32>
    %13 = arith.divf %11, %12 : vector<16x1xf32>
    %14 = vector.broadcast %6 : vector<16x1xf32> to vector<16x32xf32>
    %15 = arith.subf %0, %14 : vector<16x32xf32>
    %cst_8 = arith.constant 9.99999996E-13 : f32
    %16 = vector.broadcast %cst_8 : f32 to vector<16x1xf32>
    %17 = arith.addf %13, %16 : vector<16x1xf32>
    %18 = math.rsqrt %17 : vector<16x1xf32>
    %19 = vector.broadcast %18 : vector<16x1xf32> to vector<16x32xf32>
    %20 = arith.mulf %15, %19 : vector<16x32xf32>
    %21 = vector.broadcast %1 : vector<1x32xf32> to vector<16x32xf32>
    %22 = arith.mulf %20, %21 : vector<16x32xf32>
    %23 = vector.broadcast %2 : vector<1x32xf32> to vector<16x32xf32>
    %24 = arith.addf %22, %23 : vector<16x32xf32>
    %c0_9 = arith.constant 0 : index
    %c0_10 = arith.constant 0 : index
    %25 = vector.load %arg2[%c0_9, %c0_10] : memref<2x8xf32, #tpu.memory_space<vmem>>, vector<2x8xf32>
    %c0_11 = arith.constant 0 : index
    %c0_12 = arith.constant 0 : index
    %c0_13 = arith.constant 0 : index
    %26 = vector.load %arg5[%c0_11, %c0_12, %c0_13] : memref<2x32x96xf32, #tpu.memory_space<vmem>>, vector<1x32x96xf32>
    %27 = vector.shape_cast %26 : vector<1x32x96xf32> to vector<32x96xf32>
    %cst_14 = arith.constant dense<0.000000e+00> : vector<16x96xf32>
    %28 = tpu.matmul %24, %27, %cst_14 {dimension_numbers = #tpu.dot_dimension_numbers<[1], [0], [0], [1], [0, 0, 1, 1], [], []>} : vector<16x32xf32>, vector<32x96xf32>, vector<16x96xf32> -> vector<16x96xf32>
    %c0_15 = arith.constant 0 : index
    %c0_16 = arith.constant 0 : index
    %c0_17 = arith.constant 0 : index
    %29 = vector.load %arg6[%c0_15, %c0_16, %c0_17] : memref<2x1x96xf32, #tpu.memory_space<vmem>>, vector<1x1x96xf32>
    %30 = vector.shape_cast %29 : vector<1x1x96xf32> to vector<1x96xf32>
    %31 = vector.broadcast %30 : vector<1x96xf32> to vector<16x96xf32>
    %32 = arith.addf %28, %31 : vector<16x96xf32>
    %33 = vector.extract_strided_slice %32 {offsets = [0, 0], sizes = [16, 32], strides = [1, 1]} : vector<16x96xf32> to vector<16x32xf32>
    %34 = vector.extract_strided_slice %32 {offsets = [0, 32], sizes = [16, 32], strides = [1, 1]} : vector<16x96xf32> to vector<16x32xf32>
    %35 = vector.extract_strided_slice %32 {offsets = [0, 64], sizes = [16, 32], strides = [1, 1]} : vector<16x96xf32> to vector<16x32xf32>
    %36 = vector.extract_strided_slice %33 {offsets = [0, 0], sizes = [8, 8], strides = [1, 1]} : vector<16x32xf32> to vector<8x8xf32>
    %37 = vector.extract_strided_slice %34 {offsets = [0, 0], sizes = [8, 8], strides = [1, 1]} : vector<16x32xf32> to vector<8x8xf32>
    %38 = vector.extract_strided_slice %35 {offsets = [0, 0], sizes = [8, 8], strides = [1, 1]} : vector<16x32xf32> to vector<8x8xf32>
    %39 = tpu.transpose %37, [1, 0] : vector<8x8xf32> -> vector<8x8xf32>
    %cst_18 = arith.constant dense<0.000000e+00> : vector<8x8xf32>
    %40 = tpu.matmul %36, %39, %cst_18 {dimension_numbers = #tpu.dot_dimension_numbers<[1], [0], [0], [1], [0, 0, 1, 1], [], []>} : vector<8x8xf32>, vector<8x8xf32>, vector<8x8xf32> -> vector<8x8xf32>
    %cst_19 = arith.constant 0.353553385 : f32
    %41 = vector.broadcast %cst_19 : f32 to vector<8x8xf32>
    %42 = arith.mulf %40, %41 : vector<8x8xf32>
    %43 = vector.extract_strided_slice %25 {offsets = [0, 0], sizes = [1, 8], strides = [1, 1]} : vector<2x8xf32> to vector<1x8xf32>
    %44 = vector.broadcast %43 : vector<1x8xf32> to vector<8x8xf32>
    %45 = arith.addf %42, %44 : vector<8x8xf32>
    %cst_20 = arith.constant dense<0xFF800000> : vector<8xf32>
    %46 = vector.multi_reduction <maximumf>, %45, %cst_20 [1] : vector<8x8xf32> to vector<8xf32>
    %47 = vector.shape_cast %46 : vector<8xf32> to vector<8x1xf32>
    %48 = vector.broadcast %47 : vector<8x1xf32> to vector<8x8xf32>
    %49 = arith.subf %45, %48 : vector<8x8xf32>
    %50 = math.exp %49 : vector<8x8xf32>
    %cst_21 = arith.constant dense<0.000000e+00> : vector<8xf32>
    %51 = vector.multi_reduction <add>, %50, %cst_21 [1] : vector<8x8xf32> to vector<8xf32>
    %52 = vector.shape_cast %51 : vector<8xf32> to vector<8x1xf32>
    %53 = tpu.reciprocal %52 {approx = true} : vector<8x1xf32> -> vector<8x1xf32>
    %54 = vector.broadcast %53 : vector<8x1xf32> to vector<8x8xf32>
    %55 = arith.mulf %50, %54 : vector<8x8xf32>
    %cst_22 = arith.constant dense<0.000000e+00> : vector<8x8xf32>
    %56 = tpu.matmul %55, %38, %cst_22 {dimension_numbers = #tpu.dot_dimension_numbers<[1], [0], [0], [1], [0, 0, 1, 1], [], []>} : vector<8x8xf32>, vector<8x8xf32>, vector<8x8xf32> -> vector<8x8xf32>
    %57 = vector.extract_strided_slice %33 {offsets = [8, 0], sizes = [8, 8], strides = [1, 1]} : vector<16x32xf32> to vector<8x8xf32>
    %58 = vector.extract_strided_slice %34 {offsets = [8, 0], sizes = [8, 8], strides = [1, 1]} : vector<16x32xf32> to vector<8x8xf32>
    %59 = vector.extract_strided_slice %35 {offsets = [8, 0], sizes = [8, 8], strides = [1, 1]} : vector<16x32xf32> to vector<8x8xf32>
    %60 = tpu.transpose %58, [1, 0] : vector<8x8xf32> -> vector<8x8xf32>
    %cst_23 = arith.constant dense<0.000000e+00> : vector<8x8xf32>
    %61 = tpu.matmul %57, %60, %cst_23 {dimension_numbers = #tpu.dot_dimension_numbers<[1], [0], [0], [1], [0, 0, 1, 1], [], []>} : vector<8x8xf32>, vector<8x8xf32>, vector<8x8xf32> -> vector<8x8xf32>
    %cst_24 = arith.constant 0.353553385 : f32
    %62 = vector.broadcast %cst_24 : f32 to vector<8x8xf32>
    %63 = arith.mulf %61, %62 : vector<8x8xf32>
    %64 = vector.extract_strided_slice %25 {offsets = [1, 0], sizes = [1, 8], strides = [1, 1]} : vector<2x8xf32> to vector<1x8xf32>
    %65 = vector.broadcast %64 : vector<1x8xf32> to vector<8x8xf32>
    %66 = arith.addf %63, %65 : vector<8x8xf32>
    %cst_25 = arith.constant dense<0xFF800000> : vector<8xf32>
    %67 = vector.multi_reduction <maximumf>, %66, %cst_25 [1] : vector<8x8xf32> to vector<8xf32>
    %68 = vector.shape_cast %67 : vector<8xf32> to vector<8x1xf32>
    %69 = vector.broadcast %68 : vector<8x1xf32> to vector<8x8xf32>
    %70 = arith.subf %66, %69 : vector<8x8xf32>
    %71 = math.exp %70 : vector<8x8xf32>
    %cst_26 = arith.constant dense<0.000000e+00> : vector<8xf32>
    %72 = vector.multi_reduction <add>, %71, %cst_26 [1] : vector<8x8xf32> to vector<8xf32>
    %73 = vector.shape_cast %72 : vector<8xf32> to vector<8x1xf32>
    %74 = tpu.reciprocal %73 {approx = true} : vector<8x1xf32> -> vector<8x1xf32>
    %75 = vector.broadcast %74 : vector<8x1xf32> to vector<8x8xf32>
    %76 = arith.mulf %71, %75 : vector<8x8xf32>
    %cst_27 = arith.constant dense<0.000000e+00> : vector<8x8xf32>
    %77 = tpu.matmul %76, %59, %cst_27 {dimension_numbers = #tpu.dot_dimension_numbers<[1], [0], [0], [1], [0, 0, 1, 1], [], []>} : vector<8x8xf32>, vector<8x8xf32>, vector<8x8xf32> -> vector<8x8xf32>
    %78 = tpu.concatenate %56, %77 in 0 : vector<8x8xf32>, vector<8x8xf32> -> vector<16x8xf32>
    %79 = vector.extract_strided_slice %33 {offsets = [0, 8], sizes = [8, 8], strides = [1, 1]} : vector<16x32xf32> to vector<8x8xf32>
    %80 = vector.extract_strided_slice %34 {offsets = [0, 8], sizes = [8, 8], strides = [1, 1]} : vector<16x32xf32> to vector<8x8xf32>
    %81 = vector.extract_strided_slice %35 {offsets = [0, 8], sizes = [8, 8], strides = [1, 1]} : vector<16x32xf32> to vector<8x8xf32>
    %82 = tpu.transpose %80, [1, 0] : vector<8x8xf32> -> vector<8x8xf32>
    %cst_28 = arith.constant dense<0.000000e+00> : vector<8x8xf32>
    %83 = tpu.matmul %79, %82, %cst_28 {dimension_numbers = #tpu.dot_dimension_numbers<[1], [0], [0], [1], [0, 0, 1, 1], [], []>} : vector<8x8xf32>, vector<8x8xf32>, vector<8x8xf32> -> vector<8x8xf32>
    %cst_29 = arith.constant 0.353553385 : f32
    %84 = vector.broadcast %cst_29 : f32 to vector<8x8xf32>
    %85 = arith.mulf %83, %84 : vector<8x8xf32>
    %86 = vector.extract_strided_slice %25 {offsets = [0, 0], sizes = [1, 8], strides = [1, 1]} : vector<2x8xf32> to vector<1x8xf32>
    %87 = vector.broadcast %86 : vector<1x8xf32> to vector<8x8xf32>
    %88 = arith.addf %85, %87 : vector<8x8xf32>
    %cst_30 = arith.constant dense<0xFF800000> : vector<8xf32>
    %89 = vector.multi_reduction <maximumf>, %88, %cst_30 [1] : vector<8x8xf32> to vector<8xf32>
    %90 = vector.shape_cast %89 : vector<8xf32> to vector<8x1xf32>
    %91 = vector.broadcast %90 : vector<8x1xf32> to vector<8x8xf32>
    %92 = arith.subf %88, %91 : vector<8x8xf32>
    %93 = math.exp %92 : vector<8x8xf32>
    %cst_31 = arith.constant dense<0.000000e+00> : vector<8xf32>
    %94 = vector.multi_reduction <add>, %93, %cst_31 [1] : vector<8x8xf32> to vector<8xf32>
    %95 = vector.shape_cast %94 : vector<8xf32> to vector<8x1xf32>
    %96 = tpu.reciprocal %95 {approx = true} : vector<8x1xf32> -> vector<8x1xf32>
    %97 = vector.broadcast %96 : vector<8x1xf32> to vector<8x8xf32>
    %98 = arith.mulf %93, %97 : vector<8x8xf32>
    %cst_32 = arith.constant dense<0.000000e+00> : vector<8x8xf32>
    %99 = tpu.matmul %98, %81, %cst_32 {dimension_numbers = #tpu.dot_dimension_numbers<[1], [0], [0], [1], [0, 0, 1, 1], [], []>} : vector<8x8xf32>, vector<8x8xf32>, vector<8x8xf32> -> vector<8x8xf32>
    %100 = vector.extract_strided_slice %33 {offsets = [8, 8], sizes = [8, 8], strides = [1, 1]} : vector<16x32xf32> to vector<8x8xf32>
    %101 = vector.extract_strided_slice %34 {offsets = [8, 8], sizes = [8, 8], strides = [1, 1]} : vector<16x32xf32> to vector<8x8xf32>
    %102 = vector.extract_strided_slice %35 {offsets = [8, 8], sizes = [8, 8], strides = [1, 1]} : vector<16x32xf32> to vector<8x8xf32>
    %103 = tpu.transpose %101, [1, 0] : vector<8x8xf32> -> vector<8x8xf32>
    %cst_33 = arith.constant dense<0.000000e+00> : vector<8x8xf32>
    %104 = tpu.matmul %100, %103, %cst_33 {dimension_numbers = #tpu.dot_dimension_numbers<[1], [0], [0], [1], [0, 0, 1, 1], [], []>} : vector<8x8xf32>, vector<8x8xf32>, vector<8x8xf32> -> vector<8x8xf32>
    %cst_34 = arith.constant 0.353553385 : f32
    %105 = vector.broadcast %cst_34 : f32 to vector<8x8xf32>
    %106 = arith.mulf %104, %105 : vector<8x8xf32>
    %107 = vector.extract_strided_slice %25 {offsets = [1, 0], sizes = [1, 8], strides = [1, 1]} : vector<2x8xf32> to vector<1x8xf32>
    %108 = vector.broadcast %107 : vector<1x8xf32> to vector<8x8xf32>
    %109 = arith.addf %106, %108 : vector<8x8xf32>
    %cst_35 = arith.constant dense<0xFF800000> : vector<8xf32>
    %110 = vector.multi_reduction <maximumf>, %109, %cst_35 [1] : vector<8x8xf32> to vector<8xf32>
    %111 = vector.shape_cast %110 : vector<8xf32> to vector<8x1xf32>
    %112 = vector.broadcast %111 : vector<8x1xf32> to vector<8x8xf32>
    %113 = arith.subf %109, %112 : vector<8x8xf32>
    %114 = math.exp %113 : vector<8x8xf32>
    %cst_36 = arith.constant dense<0.000000e+00> : vector<8xf32>
    %115 = vector.multi_reduction <add>, %114, %cst_36 [1] : vector<8x8xf32> to vector<8xf32>
    %116 = vector.shape_cast %115 : vector<8xf32> to vector<8x1xf32>
    %117 = tpu.reciprocal %116 {approx = true} : vector<8x1xf32> -> vector<8x1xf32>
    %118 = vector.broadcast %117 : vector<8x1xf32> to vector<8x8xf32>
    %119 = arith.mulf %114, %118 : vector<8x8xf32>
    %cst_37 = arith.constant dense<0.000000e+00> : vector<8x8xf32>
    %120 = tpu.matmul %119, %102, %cst_37 {dimension_numbers = #tpu.dot_dimension_numbers<[1], [0], [0], [1], [0, 0, 1, 1], [], []>} : vector<8x8xf32>, vector<8x8xf32>, vector<8x8xf32> -> vector<8x8xf32>
    %121 = tpu.concatenate %99, %120 in 0 : vector<8x8xf32>, vector<8x8xf32> -> vector<16x8xf32>
    %122 = vector.extract_strided_slice %33 {offsets = [0, 16], sizes = [8, 8], strides = [1, 1]} : vector<16x32xf32> to vector<8x8xf32>
    %123 = vector.extract_strided_slice %34 {offsets = [0, 16], sizes = [8, 8], strides = [1, 1]} : vector<16x32xf32> to vector<8x8xf32>
    %124 = vector.extract_strided_slice %35 {offsets = [0, 16], sizes = [8, 8], strides = [1, 1]} : vector<16x32xf32> to vector<8x8xf32>
    %125 = tpu.transpose %123, [1, 0] : vector<8x8xf32> -> vector<8x8xf32>
    %cst_38 = arith.constant dense<0.000000e+00> : vector<8x8xf32>
    %126 = tpu.matmul %122, %125, %cst_38 {dimension_numbers = #tpu.dot_dimension_numbers<[1], [0], [0], [1], [0, 0, 1, 1], [], []>} : vector<8x8xf32>, vector<8x8xf32>, vector<8x8xf32> -> vector<8x8xf32>
    %cst_39 = arith.constant 0.353553385 : f32
    %127 = vector.broadcast %cst_39 : f32 to vector<8x8xf32>
    %128 = arith.mulf %126, %127 : vector<8x8xf32>
    %129 = vector.extract_strided_slice %25 {offsets = [0, 0], sizes = [1, 8], strides = [1, 1]} : vector<2x8xf32> to vector<1x8xf32>
    %130 = vector.broadcast %129 : vector<1x8xf32> to vector<8x8xf32>
    %131 = arith.addf %128, %130 : vector<8x8xf32>
    %cst_40 = arith.constant dense<0xFF800000> : vector<8xf32>
    %132 = vector.multi_reduction <maximumf>, %131, %cst_40 [1] : vector<8x8xf32> to vector<8xf32>
    %133 = vector.shape_cast %132 : vector<8xf32> to vector<8x1xf32>
    %134 = vector.broadcast %133 : vector<8x1xf32> to vector<8x8xf32>
    %135 = arith.subf %131, %134 : vector<8x8xf32>
    %136 = math.exp %135 : vector<8x8xf32>
    %cst_41 = arith.constant dense<0.000000e+00> : vector<8xf32>
    %137 = vector.multi_reduction <add>, %136, %cst_41 [1] : vector<8x8xf32> to vector<8xf32>
    %138 = vector.shape_cast %137 : vector<8xf32> to vector<8x1xf32>
    %139 = tpu.reciprocal %138 {approx = true} : vector<8x1xf32> -> vector<8x1xf32>
    %140 = vector.broadcast %139 : vector<8x1xf32> to vector<8x8xf32>
    %141 = arith.mulf %136, %140 : vector<8x8xf32>
    %cst_42 = arith.constant dense<0.000000e+00> : vector<8x8xf32>
    %142 = tpu.matmul %141, %124, %cst_42 {dimension_numbers = #tpu.dot_dimension_numbers<[1], [0], [0], [1], [0, 0, 1, 1], [], []>} : vector<8x8xf32>, vector<8x8xf32>, vector<8x8xf32> -> vector<8x8xf32>
    %143 = vector.extract_strided_slice %33 {offsets = [8, 16], sizes = [8, 8], strides = [1, 1]} : vector<16x32xf32> to vector<8x8xf32>
    %144 = vector.extract_strided_slice %34 {offsets = [8, 16], sizes = [8, 8], strides = [1, 1]} : vector<16x32xf32> to vector<8x8xf32>
    %145 = vector.extract_strided_slice %35 {offsets = [8, 16], sizes = [8, 8], strides = [1, 1]} : vector<16x32xf32> to vector<8x8xf32>
    %146 = tpu.transpose %144, [1, 0] : vector<8x8xf32> -> vector<8x8xf32>
    %cst_43 = arith.constant dense<0.000000e+00> : vector<8x8xf32>
    %147 = tpu.matmul %143, %146, %cst_43 {dimension_numbers = #tpu.dot_dimension_numbers<[1], [0], [0], [1], [0, 0, 1, 1], [], []>} : vector<8x8xf32>, vector<8x8xf32>, vector<8x8xf32> -> vector<8x8xf32>
    %cst_44 = arith.constant 0.353553385 : f32
    %148 = vector.broadcast %cst_44 : f32 to vector<8x8xf32>
    %149 = arith.mulf %147, %148 : vector<8x8xf32>
    %150 = vector.extract_strided_slice %25 {offsets = [1, 0], sizes = [1, 8], strides = [1, 1]} : vector<2x8xf32> to vector<1x8xf32>
    %151 = vector.broadcast %150 : vector<1x8xf32> to vector<8x8xf32>
    %152 = arith.addf %149, %151 : vector<8x8xf32>
    %cst_45 = arith.constant dense<0xFF800000> : vector<8xf32>
    %153 = vector.multi_reduction <maximumf>, %152, %cst_45 [1] : vector<8x8xf32> to vector<8xf32>
    %154 = vector.shape_cast %153 : vector<8xf32> to vector<8x1xf32>
    %155 = vector.broadcast %154 : vector<8x1xf32> to vector<8x8xf32>
    %156 = arith.subf %152, %155 : vector<8x8xf32>
    %157 = math.exp %156 : vector<8x8xf32>
    %cst_46 = arith.constant dense<0.000000e+00> : vector<8xf32>
    %158 = vector.multi_reduction <add>, %157, %cst_46 [1] : vector<8x8xf32> to vector<8xf32>
    %159 = vector.shape_cast %158 : vector<8xf32> to vector<8x1xf32>
    %160 = tpu.reciprocal %159 {approx = true} : vector<8x1xf32> -> vector<8x1xf32>
    %161 = vector.broadcast %160 : vector<8x1xf32> to vector<8x8xf32>
    %162 = arith.mulf %157, %161 : vector<8x8xf32>
    %cst_47 = arith.constant dense<0.000000e+00> : vector<8x8xf32>
    %163 = tpu.matmul %162, %145, %cst_47 {dimension_numbers = #tpu.dot_dimension_numbers<[1], [0], [0], [1], [0, 0, 1, 1], [], []>} : vector<8x8xf32>, vector<8x8xf32>, vector<8x8xf32> -> vector<8x8xf32>
    %164 = tpu.concatenate %142, %163 in 0 : vector<8x8xf32>, vector<8x8xf32> -> vector<16x8xf32>
    %165 = vector.extract_strided_slice %33 {offsets = [0, 24], sizes = [8, 8], strides = [1, 1]} : vector<16x32xf32> to vector<8x8xf32>
    %166 = vector.extract_strided_slice %34 {offsets = [0, 24], sizes = [8, 8], strides = [1, 1]} : vector<16x32xf32> to vector<8x8xf32>
    %167 = vector.extract_strided_slice %35 {offsets = [0, 24], sizes = [8, 8], strides = [1, 1]} : vector<16x32xf32> to vector<8x8xf32>
    %168 = tpu.transpose %166, [1, 0] : vector<8x8xf32> -> vector<8x8xf32>
    %cst_48 = arith.constant dense<0.000000e+00> : vector<8x8xf32>
    %169 = tpu.matmul %165, %168, %cst_48 {dimension_numbers = #tpu.dot_dimension_numbers<[1], [0], [0], [1], [0, 0, 1, 1], [], []>} : vector<8x8xf32>, vector<8x8xf32>, vector<8x8xf32> -> vector<8x8xf32>
    %cst_49 = arith.constant 0.353553385 : f32
    %170 = vector.broadcast %cst_49 : f32 to vector<8x8xf32>
    %171 = arith.mulf %169, %170 : vector<8x8xf32>
    %172 = vector.extract_strided_slice %25 {offsets = [0, 0], sizes = [1, 8], strides = [1, 1]} : vector<2x8xf32> to vector<1x8xf32>
    %173 = vector.broadcast %172 : vector<1x8xf32> to vector<8x8xf32>
    %174 = arith.addf %171, %173 : vector<8x8xf32>
    %cst_50 = arith.constant dense<0xFF800000> : vector<8xf32>
    %175 = vector.multi_reduction <maximumf>, %174, %cst_50 [1] : vector<8x8xf32> to vector<8xf32>
    %176 = vector.shape_cast %175 : vector<8xf32> to vector<8x1xf32>
    %177 = vector.broadcast %176 : vector<8x1xf32> to vector<8x8xf32>
    %178 = arith.subf %174, %177 : vector<8x8xf32>
    %179 = math.exp %178 : vector<8x8xf32>
    %cst_51 = arith.constant dense<0.000000e+00> : vector<8xf32>
    %180 = vector.multi_reduction <add>, %179, %cst_51 [1] : vector<8x8xf32> to vector<8xf32>
    %181 = vector.shape_cast %180 : vector<8xf32> to vector<8x1xf32>
    %182 = tpu.reciprocal %181 {approx = true} : vector<8x1xf32> -> vector<8x1xf32>
    %183 = vector.broadcast %182 : vector<8x1xf32> to vector<8x8xf32>
    %184 = arith.mulf %179, %183 : vector<8x8xf32>
    %cst_52 = arith.constant dense<0.000000e+00> : vector<8x8xf32>
    %185 = tpu.matmul %184, %167, %cst_52 {dimension_numbers = #tpu.dot_dimension_numbers<[1], [0], [0], [1], [0, 0, 1, 1], [], []>} : vector<8x8xf32>, vector<8x8xf32>, vector<8x8xf32> -> vector<8x8xf32>
    %186 = vector.extract_strided_slice %33 {offsets = [8, 24], sizes = [8, 8], strides = [1, 1]} : vector<16x32xf32> to vector<8x8xf32>
    %187 = vector.extract_strided_slice %34 {offsets = [8, 24], sizes = [8, 8], strides = [1, 1]} : vector<16x32xf32> to vector<8x8xf32>
    %188 = vector.extract_strided_slice %35 {offsets = [8, 24], sizes = [8, 8], strides = [1, 1]} : vector<16x32xf32> to vector<8x8xf32>
    %189 = tpu.transpose %187, [1, 0] : vector<8x8xf32> -> vector<8x8xf32>
    %cst_53 = arith.constant dense<0.000000e+00> : vector<8x8xf32>
    %190 = tpu.matmul %186, %189, %cst_53 {dimension_numbers = #tpu.dot_dimension_numbers<[1], [0], [0], [1], [0, 0, 1, 1], [], []>} : vector<8x8xf32>, vector<8x8xf32>, vector<8x8xf32> -> vector<8x8xf32>
    %cst_54 = arith.constant 0.353553385 : f32
    %191 = vector.broadcast %cst_54 : f32 to vector<8x8xf32>
    %192 = arith.mulf %190, %191 : vector<8x8xf32>
    %193 = vector.extract_strided_slice %25 {offsets = [1, 0], sizes = [1, 8], strides = [1, 1]} : vector<2x8xf32> to vector<1x8xf32>
    %194 = vector.broadcast %193 : vector<1x8xf32> to vector<8x8xf32>
    %195 = arith.addf %192, %194 : vector<8x8xf32>
    %cst_55 = arith.constant dense<0xFF800000> : vector<8xf32>
    %196 = vector.multi_reduction <maximumf>, %195, %cst_55 [1] : vector<8x8xf32> to vector<8xf32>
    %197 = vector.shape_cast %196 : vector<8xf32> to vector<8x1xf32>
    %198 = vector.broadcast %197 : vector<8x1xf32> to vector<8x8xf32>
    %199 = arith.subf %195, %198 : vector<8x8xf32>
    %200 = math.exp %199 : vector<8x8xf32>
    %cst_56 = arith.constant dense<0.000000e+00> : vector<8xf32>
    %201 = vector.multi_reduction <add>, %200, %cst_56 [1] : vector<8x8xf32> to vector<8xf32>
    %202 = vector.shape_cast %201 : vector<8xf32> to vector<8x1xf32>
    %203 = tpu.reciprocal %202 {approx = true} : vector<8x1xf32> -> vector<8x1xf32>
    %204 = vector.broadcast %203 : vector<8x1xf32> to vector<8x8xf32>
    %205 = arith.mulf %200, %204 : vector<8x8xf32>
    %cst_57 = arith.constant dense<0.000000e+00> : vector<8x8xf32>
    %206 = tpu.matmul %205, %188, %cst_57 {dimension_numbers = #tpu.dot_dimension_numbers<[1], [0], [0], [1], [0, 0, 1, 1], [], []>} : vector<8x8xf32>, vector<8x8xf32>, vector<8x8xf32> -> vector<8x8xf32>
    %207 = tpu.concatenate %185, %206 in 0 : vector<8x8xf32>, vector<8x8xf32> -> vector<16x8xf32>
    %208 = tpu.concatenate %78, %121, %164, %207 in 1 : vector<16x8xf32>, vector<16x8xf32>, vector<16x8xf32>, vector<16x8xf32> -> vector<16x32xf32>
    %c0_58 = arith.constant 0 : index
    %c0_59 = arith.constant 0 : index
    %c0_60 = arith.constant 0 : index
    %209 = vector.load %arg7[%c0_58, %c0_59, %c0_60] : memref<2x32x32xf32, #tpu.memory_space<vmem>>, vector<1x32x32xf32>
    %210 = vector.shape_cast %209 : vector<1x32x32xf32> to vector<32x32xf32>
    %cst_61 = arith.constant dense<0.000000e+00> : vector<16x32xf32>
    %211 = tpu.matmul %208, %210, %cst_61 {dimension_numbers = #tpu.dot_dimension_numbers<[1], [0], [0], [1], [0, 0, 1, 1], [], []>} : vector<16x32xf32>, vector<32x32xf32>, vector<16x32xf32> -> vector<16x32xf32>
    %c0_62 = arith.constant 0 : index
    %c0_63 = arith.constant 0 : index
    %c0_64 = arith.constant 0 : index
    %212 = vector.load %arg8[%c0_62, %c0_63, %c0_64] : memref<2x1x32xf32, #tpu.memory_space<vmem>>, vector<1x1x32xf32>
    %213 = vector.shape_cast %212 : vector<1x1x32xf32> to vector<1x32xf32>
    %214 = vector.broadcast %213 : vector<1x32xf32> to vector<16x32xf32>
    %215 = arith.addf %211, %214 : vector<16x32xf32>
    %216 = arith.addf %215, %24 : vector<16x32xf32>
    %c0_65 = arith.constant 0 : index
    %c0_66 = arith.constant 0 : index
    %c0_67 = arith.constant 0 : index
    %217 = vector.load %arg9[%c0_65, %c0_66, %c0_67] : memref<2x1x32xf32, #tpu.memory_space<vmem>>, vector<1x1x32xf32>
    %218 = vector.shape_cast %217 : vector<1x1x32xf32> to vector<1x32xf32>
    %c0_68 = arith.constant 0 : index
    %c0_69 = arith.constant 0 : index
    %c0_70 = arith.constant 0 : index
    %219 = vector.load %arg10[%c0_68, %c0_69, %c0_70] : memref<2x1x32xf32, #tpu.memory_space<vmem>>, vector<1x1x32xf32>
    %220 = vector.shape_cast %219 : vector<1x1x32xf32> to vector<1x32xf32>
    %cst_71 = arith.constant dense<0.000000e+00> : vector<16xf32>
    %221 = vector.multi_reduction <add>, %216, %cst_71 [1] : vector<16x32xf32> to vector<16xf32>
    %222 = vector.shape_cast %221 : vector<16xf32> to vector<16x1xf32>
    %cst_72 = arith.constant 3.200000e+01 : f32
    %223 = vector.broadcast %cst_72 : f32 to vector<16x1xf32>
    %224 = arith.divf %222, %223 : vector<16x1xf32>
    %225 = vector.broadcast %224 : vector<16x1xf32> to vector<16x32xf32>
    %226 = arith.subf %216, %225 : vector<16x32xf32>
    %227 = arith.mulf %226, %226 : vector<16x32xf32>
    %cst_73 = arith.constant dense<0.000000e+00> : vector<16xf32>
    %228 = vector.multi_reduction <add>, %227, %cst_73 [1] : vector<16x32xf32> to vector<16xf32>
    %229 = vector.shape_cast %228 : vector<16xf32> to vector<16x1xf32>
    %cst_74 = arith.constant 3.200000e+01 : f32
    %230 = vector.broadcast %cst_74 : f32 to vector<16x1xf32>
    %231 = arith.divf %229, %230 : vector<16x1xf32>
    %232 = vector.broadcast %224 : vector<16x1xf32> to vector<16x32xf32>
    %233 = arith.subf %216, %232 : vector<16x32xf32>
    %cst_75 = arith.constant 9.99999996E-13 : f32
    %234 = vector.broadcast %cst_75 : f32 to vector<16x1xf32>
    %235 = arith.addf %231, %234 : vector<16x1xf32>
    %236 = math.rsqrt %235 : vector<16x1xf32>
    %237 = vector.broadcast %236 : vector<16x1xf32> to vector<16x32xf32>
    %238 = arith.mulf %233, %237 : vector<16x32xf32>
    %239 = vector.broadcast %218 : vector<1x32xf32> to vector<16x32xf32>
    %240 = arith.mulf %238, %239 : vector<16x32xf32>
    %241 = vector.broadcast %220 : vector<1x32xf32> to vector<16x32xf32>
    %242 = arith.addf %240, %241 : vector<16x32xf32>
    %c0_76 = arith.constant 0 : index
    %c0_77 = arith.constant 0 : index
    %c0_78 = arith.constant 0 : index
    %243 = vector.load %arg11[%c0_76, %c0_77, %c0_78] : memref<2x32x64xf32, #tpu.memory_space<vmem>>, vector<1x32x64xf32>
    %244 = vector.shape_cast %243 : vector<1x32x64xf32> to vector<32x64xf32>
    %cst_79 = arith.constant dense<0.000000e+00> : vector<16x64xf32>
    %245 = tpu.matmul %242, %244, %cst_79 {dimension_numbers = #tpu.dot_dimension_numbers<[1], [0], [0], [1], [0, 0, 1, 1], [], []>} : vector<16x32xf32>, vector<32x64xf32>, vector<16x64xf32> -> vector<16x64xf32>
    %c0_80 = arith.constant 0 : index
    %c0_81 = arith.constant 0 : index
    %c0_82 = arith.constant 0 : index
    %246 = vector.load %arg12[%c0_80, %c0_81, %c0_82] : memref<2x1x64xf32, #tpu.memory_space<vmem>>, vector<1x1x64xf32>
    %247 = vector.shape_cast %246 : vector<1x1x64xf32> to vector<1x64xf32>
    %248 = vector.broadcast %247 : vector<1x64xf32> to vector<16x64xf32>
    %249 = arith.addf %245, %248 : vector<16x64xf32>
    %cst_83 = arith.constant 5.000000e-01 : f32
    %250 = vector.broadcast %cst_83 : f32 to vector<16x64xf32>
    %251 = arith.mulf %250, %249 : vector<16x64xf32>
    %cst_84 = arith.constant 4.471500e-02 : f32
    %252 = vector.broadcast %cst_84 : f32 to vector<16x64xf32>
    %253 = arith.mulf %252, %249 : vector<16x64xf32>
    %254 = arith.mulf %253, %249 : vector<16x64xf32>
    %255 = arith.mulf %254, %249 : vector<16x64xf32>
    %256 = arith.addf %249, %255 : vector<16x64xf32>
    %cst_85 = arith.constant 0.797884583 : f32
    %257 = vector.broadcast %cst_85 : f32 to vector<16x64xf32>
    %258 = arith.mulf %257, %256 : vector<16x64xf32>
    %259 = math.tanh %258 : vector<16x64xf32>
    %cst_86 = arith.constant 1.000000e+00 : f32
    %260 = vector.broadcast %cst_86 : f32 to vector<16x64xf32>
    %261 = arith.addf %260, %259 : vector<16x64xf32>
    %262 = arith.mulf %251, %261 : vector<16x64xf32>
    %c0_87 = arith.constant 0 : index
    %c0_88 = arith.constant 0 : index
    %c0_89 = arith.constant 0 : index
    %263 = vector.load %arg13[%c0_87, %c0_88, %c0_89] : memref<2x64x32xf32, #tpu.memory_space<vmem>>, vector<1x64x32xf32>
    %264 = vector.shape_cast %263 : vector<1x64x32xf32> to vector<64x32xf32>
    %cst_90 = arith.constant dense<0.000000e+00> : vector<16x32xf32>
    %265 = tpu.matmul %262, %264, %cst_90 {dimension_numbers = #tpu.dot_dimension_numbers<[1], [0], [0], [1], [0, 0, 1, 1], [], []>} : vector<16x64xf32>, vector<64x32xf32>, vector<16x32xf32> -> vector<16x32xf32>
    %c0_91 = arith.constant 0 : index
    %c0_92 = arith.constant 0 : index
    %c0_93 = arith.constant 0 : index
    %266 = vector.load %arg14[%c0_91, %c0_92, %c0_93] : memref<2x1x32xf32, #tpu.memory_space<vmem>>, vector<1x1x32xf32>
    %267 = vector.shape_cast %266 : vector<1x1x32xf32> to vector<1x32xf32>
    %268 = vector.broadcast %267 : vector<1x32xf32> to vector<16x32xf32>
    %269 = arith.addf %265, %268 : vector<16x32xf32>
    %270 = arith.addf %269, %242 : vector<16x32xf32>
    %c0_94 = arith.constant 0 : index
    %c0_95 = arith.constant 0 : index
    %c0_96 = arith.constant 0 : index
    %271 = vector.load %arg15[%c0_94, %c0_95, %c0_96] : memref<2x1x32xf32, #tpu.memory_space<vmem>>, vector<1x1x32xf32>
    %272 = vector.shape_cast %271 : vector<1x1x32xf32> to vector<1x32xf32>
    %c0_97 = arith.constant 0 : index
    %c0_98 = arith.constant 0 : index
    %c0_99 = arith.constant 0 : index
    %273 = vector.load %arg16[%c0_97, %c0_98, %c0_99] : memref<2x1x32xf32, #tpu.memory_space<vmem>>, vector<1x1x32xf32>
    %274 = vector.shape_cast %273 : vector<1x1x32xf32> to vector<1x32xf32>
    %cst_100 = arith.constant dense<0.000000e+00> : vector<16xf32>
    %275 = vector.multi_reduction <add>, %270, %cst_100 [1] : vector<16x32xf32> to vector<16xf32>
    %276 = vector.shape_cast %275 : vector<16xf32> to vector<16x1xf32>
    %cst_101 = arith.constant 3.200000e+01 : f32
    %277 = vector.broadcast %cst_101 : f32 to vector<16x1xf32>
    %278 = arith.divf %276, %277 : vector<16x1xf32>
    %279 = vector.broadcast %278 : vector<16x1xf32> to vector<16x32xf32>
    %280 = arith.subf %270, %279 : vector<16x32xf32>
    %281 = arith.mulf %280, %280 : vector<16x32xf32>
    %cst_102 = arith.constant dense<0.000000e+00> : vector<16xf32>
    %282 = vector.multi_reduction <add>, %281, %cst_102 [1] : vector<16x32xf32> to vector<16xf32>
    %283 = vector.shape_cast %282 : vector<16xf32> to vector<16x1xf32>
    %cst_103 = arith.constant 3.200000e+01 : f32
    %284 = vector.broadcast %cst_103 : f32 to vector<16x1xf32>
    %285 = arith.divf %283, %284 : vector<16x1xf32>
    %286 = vector.broadcast %278 : vector<16x1xf32> to vector<16x32xf32>
    %287 = arith.subf %270, %286 : vector<16x32xf32>
    %cst_104 = arith.constant 9.99999996E-13 : f32
    %288 = vector.broadcast %cst_104 : f32 to vector<16x1xf32>
    %289 = arith.addf %285, %288 : vector<16x1xf32>
    %290 = math.rsqrt %289 : vector<16x1xf32>
    %291 = vector.broadcast %290 : vector<16x1xf32> to vector<16x32xf32>
    %292 = arith.mulf %287, %291 : vector<16x32xf32>
    %293 = vector.broadcast %272 : vector<1x32xf32> to vector<16x32xf32>
    %294 = arith.mulf %292, %293 : vector<16x32xf32>
    %295 = vector.broadcast %274 : vector<1x32xf32> to vector<16x32xf32>
    %296 = arith.addf %294, %295 : vector<16x32xf32>
    %c1 = arith.constant 1 : index
    %c0_105 = arith.constant 0 : index
    %c0_106 = arith.constant 0 : index
    %297 = vector.load %arg5[%c1, %c0_105, %c0_106] : memref<2x32x96xf32, #tpu.memory_space<vmem>>, vector<1x32x96xf32>
    %298 = vector.shape_cast %297 : vector<1x32x96xf32> to vector<32x96xf32>
    %cst_107 = arith.constant dense<0.000000e+00> : vector<16x96xf32>
    %299 = tpu.matmul %296, %298, %cst_107 {dimension_numbers = #tpu.dot_dimension_numbers<[1], [0], [0], [1], [0, 0, 1, 1], [], []>} : vector<16x32xf32>, vector<32x96xf32>, vector<16x96xf32> -> vector<16x96xf32>
    %c1_108 = arith.constant 1 : index
    %c0_109 = arith.constant 0 : index
    %c0_110 = arith.constant 0 : index
    %300 = vector.load %arg6[%c1_108, %c0_109, %c0_110] : memref<2x1x96xf32, #tpu.memory_space<vmem>>, vector<1x1x96xf32>
    %301 = vector.shape_cast %300 : vector<1x1x96xf32> to vector<1x96xf32>
    %302 = vector.broadcast %301 : vector<1x96xf32> to vector<16x96xf32>
    %303 = arith.addf %299, %302 : vector<16x96xf32>
    %304 = vector.extract_strided_slice %303 {offsets = [0, 0], sizes = [16, 32], strides = [1, 1]} : vector<16x96xf32> to vector<16x32xf32>
    %305 = vector.extract_strided_slice %303 {offsets = [0, 32], sizes = [16, 32], strides = [1, 1]} : vector<16x96xf32> to vector<16x32xf32>
    %306 = vector.extract_strided_slice %303 {offsets = [0, 64], sizes = [16, 32], strides = [1, 1]} : vector<16x96xf32> to vector<16x32xf32>
    %307 = vector.extract_strided_slice %304 {offsets = [0, 0], sizes = [8, 8], strides = [1, 1]} : vector<16x32xf32> to vector<8x8xf32>
    %308 = vector.extract_strided_slice %305 {offsets = [0, 0], sizes = [8, 8], strides = [1, 1]} : vector<16x32xf32> to vector<8x8xf32>
    %309 = vector.extract_strided_slice %306 {offsets = [0, 0], sizes = [8, 8], strides = [1, 1]} : vector<16x32xf32> to vector<8x8xf32>
    %310 = tpu.transpose %308, [1, 0] : vector<8x8xf32> -> vector<8x8xf32>
    %cst_111 = arith.constant dense<0.000000e+00> : vector<8x8xf32>
    %311 = tpu.matmul %307, %310, %cst_111 {dimension_numbers = #tpu.dot_dimension_numbers<[1], [0], [0], [1], [0, 0, 1, 1], [], []>} : vector<8x8xf32>, vector<8x8xf32>, vector<8x8xf32> -> vector<8x8xf32>
    %cst_112 = arith.constant 0.353553385 : f32
    %312 = vector.broadcast %cst_112 : f32 to vector<8x8xf32>
    %313 = arith.mulf %311, %312 : vector<8x8xf32>
    %314 = vector.extract_strided_slice %25 {offsets = [0, 0], sizes = [1, 8], strides = [1, 1]} : vector<2x8xf32> to vector<1x8xf32>
    %315 = vector.broadcast %314 : vector<1x8xf32> to vector<8x8xf32>
    %316 = arith.addf %313, %315 : vector<8x8xf32>
    %cst_113 = arith.constant dense<0xFF800000> : vector<8xf32>
    %317 = vector.multi_reduction <maximumf>, %316, %cst_113 [1] : vector<8x8xf32> to vector<8xf32>
    %318 = vector.shape_cast %317 : vector<8xf32> to vector<8x1xf32>
    %319 = vector.broadcast %318 : vector<8x1xf32> to vector<8x8xf32>
    %320 = arith.subf %316, %319 : vector<8x8xf32>
    %321 = math.exp %320 : vector<8x8xf32>
    %cst_114 = arith.constant dense<0.000000e+00> : vector<8xf32>
    %322 = vector.multi_reduction <add>, %321, %cst_114 [1] : vector<8x8xf32> to vector<8xf32>
    %323 = vector.shape_cast %322 : vector<8xf32> to vector<8x1xf32>
    %324 = tpu.reciprocal %323 {approx = true} : vector<8x1xf32> -> vector<8x1xf32>
    %325 = vector.broadcast %324 : vector<8x1xf32> to vector<8x8xf32>
    %326 = arith.mulf %321, %325 : vector<8x8xf32>
    %cst_115 = arith.constant dense<0.000000e+00> : vector<8x8xf32>
    %327 = tpu.matmul %326, %309, %cst_115 {dimension_numbers = #tpu.dot_dimension_numbers<[1], [0], [0], [1], [0, 0, 1, 1], [], []>} : vector<8x8xf32>, vector<8x8xf32>, vector<8x8xf32> -> vector<8x8xf32>
    %328 = vector.extract_strided_slice %304 {offsets = [8, 0], sizes = [8, 8], strides = [1, 1]} : vector<16x32xf32> to vector<8x8xf32>
    %329 = vector.extract_strided_slice %305 {offsets = [8, 0], sizes = [8, 8], strides = [1, 1]} : vector<16x32xf32> to vector<8x8xf32>
    %330 = vector.extract_strided_slice %306 {offsets = [8, 0], sizes = [8, 8], strides = [1, 1]} : vector<16x32xf32> to vector<8x8xf32>
    %331 = tpu.transpose %329, [1, 0] : vector<8x8xf32> -> vector<8x8xf32>
    %cst_116 = arith.constant dense<0.000000e+00> : vector<8x8xf32>
    %332 = tpu.matmul %328, %331, %cst_116 {dimension_numbers = #tpu.dot_dimension_numbers<[1], [0], [0], [1], [0, 0, 1, 1], [], []>} : vector<8x8xf32>, vector<8x8xf32>, vector<8x8xf32> -> vector<8x8xf32>
    %cst_117 = arith.constant 0.353553385 : f32
    %333 = vector.broadcast %cst_117 : f32 to vector<8x8xf32>
    %334 = arith.mulf %332, %333 : vector<8x8xf32>
    %335 = vector.extract_strided_slice %25 {offsets = [1, 0], sizes = [1, 8], strides = [1, 1]} : vector<2x8xf32> to vector<1x8xf32>
    %336 = vector.broadcast %335 : vector<1x8xf32> to vector<8x8xf32>
    %337 = arith.addf %334, %336 : vector<8x8xf32>
    %cst_118 = arith.constant dense<0xFF800000> : vector<8xf32>
    %338 = vector.multi_reduction <maximumf>, %337, %cst_118 [1] : vector<8x8xf32> to vector<8xf32>
    %339 = vector.shape_cast %338 : vector<8xf32> to vector<8x1xf32>
    %340 = vector.broadcast %339 : vector<8x1xf32> to vector<8x8xf32>
    %341 = arith.subf %337, %340 : vector<8x8xf32>
    %342 = math.exp %341 : vector<8x8xf32>
    %cst_119 = arith.constant dense<0.000000e+00> : vector<8xf32>
    %343 = vector.multi_reduction <add>, %342, %cst_119 [1] : vector<8x8xf32> to vector<8xf32>
    %344 = vector.shape_cast %343 : vector<8xf32> to vector<8x1xf32>
    %345 = tpu.reciprocal %344 {approx = true} : vector<8x1xf32> -> vector<8x1xf32>
    %346 = vector.broadcast %345 : vector<8x1xf32> to vector<8x8xf32>
    %347 = arith.mulf %342, %346 : vector<8x8xf32>
    %cst_120 = arith.constant dense<0.000000e+00> : vector<8x8xf32>
    %348 = tpu.matmul %347, %330, %cst_120 {dimension_numbers = #tpu.dot_dimension_numbers<[1], [0], [0], [1], [0, 0, 1, 1], [], []>} : vector<8x8xf32>, vector<8x8xf32>, vector<8x8xf32> -> vector<8x8xf32>
    %349 = tpu.concatenate %327, %348 in 0 : vector<8x8xf32>, vector<8x8xf32> -> vector<16x8xf32>
    %350 = vector.extract_strided_slice %304 {offsets = [0, 8], sizes = [8, 8], strides = [1, 1]} : vector<16x32xf32> to vector<8x8xf32>
    %351 = vector.extract_strided_slice %305 {offsets = [0, 8], sizes = [8, 8], strides = [1, 1]} : vector<16x32xf32> to vector<8x8xf32>
    %352 = vector.extract_strided_slice %306 {offsets = [0, 8], sizes = [8, 8], strides = [1, 1]} : vector<16x32xf32> to vector<8x8xf32>
    %353 = tpu.transpose %351, [1, 0] : vector<8x8xf32> -> vector<8x8xf32>
    %cst_121 = arith.constant dense<0.000000e+00> : vector<8x8xf32>
    %354 = tpu.matmul %350, %353, %cst_121 {dimension_numbers = #tpu.dot_dimension_numbers<[1], [0], [0], [1], [0, 0, 1, 1], [], []>} : vector<8x8xf32>, vector<8x8xf32>, vector<8x8xf32> -> vector<8x8xf32>
    %cst_122 = arith.constant 0.353553385 : f32
    %355 = vector.broadcast %cst_122 : f32 to vector<8x8xf32>
    %356 = arith.mulf %354, %355 : vector<8x8xf32>
    %357 = vector.extract_strided_slice %25 {offsets = [0, 0], sizes = [1, 8], strides = [1, 1]} : vector<2x8xf32> to vector<1x8xf32>
    %358 = vector.broadcast %357 : vector<1x8xf32> to vector<8x8xf32>
    %359 = arith.addf %356, %358 : vector<8x8xf32>
    %cst_123 = arith.constant dense<0xFF800000> : vector<8xf32>
    %360 = vector.multi_reduction <maximumf>, %359, %cst_123 [1] : vector<8x8xf32> to vector<8xf32>
    %361 = vector.shape_cast %360 : vector<8xf32> to vector<8x1xf32>
    %362 = vector.broadcast %361 : vector<8x1xf32> to vector<8x8xf32>
    %363 = arith.subf %359, %362 : vector<8x8xf32>
    %364 = math.exp %363 : vector<8x8xf32>
    %cst_124 = arith.constant dense<0.000000e+00> : vector<8xf32>
    %365 = vector.multi_reduction <add>, %364, %cst_124 [1] : vector<8x8xf32> to vector<8xf32>
    %366 = vector.shape_cast %365 : vector<8xf32> to vector<8x1xf32>
    %367 = tpu.reciprocal %366 {approx = true} : vector<8x1xf32> -> vector<8x1xf32>
    %368 = vector.broadcast %367 : vector<8x1xf32> to vector<8x8xf32>
    %369 = arith.mulf %364, %368 : vector<8x8xf32>
    %cst_125 = arith.constant dense<0.000000e+00> : vector<8x8xf32>
    %370 = tpu.matmul %369, %352, %cst_125 {dimension_numbers = #tpu.dot_dimension_numbers<[1], [0], [0], [1], [0, 0, 1, 1], [], []>} : vector<8x8xf32>, vector<8x8xf32>, vector<8x8xf32> -> vector<8x8xf32>
    %371 = vector.extract_strided_slice %304 {offsets = [8, 8], sizes = [8, 8], strides = [1, 1]} : vector<16x32xf32> to vector<8x8xf32>
    %372 = vector.extract_strided_slice %305 {offsets = [8, 8], sizes = [8, 8], strides = [1, 1]} : vector<16x32xf32> to vector<8x8xf32>
    %373 = vector.extract_strided_slice %306 {offsets = [8, 8], sizes = [8, 8], strides = [1, 1]} : vector<16x32xf32> to vector<8x8xf32>
    %374 = tpu.transpose %372, [1, 0] : vector<8x8xf32> -> vector<8x8xf32>
    %cst_126 = arith.constant dense<0.000000e+00> : vector<8x8xf32>
    %375 = tpu.matmul %371, %374, %cst_126 {dimension_numbers = #tpu.dot_dimension_numbers<[1], [0], [0], [1], [0, 0, 1, 1], [], []>} : vector<8x8xf32>, vector<8x8xf32>, vector<8x8xf32> -> vector<8x8xf32>
    %cst_127 = arith.constant 0.353553385 : f32
    %376 = vector.broadcast %cst_127 : f32 to vector<8x8xf32>
    %377 = arith.mulf %375, %376 : vector<8x8xf32>
    %378 = vector.extract_strided_slice %25 {offsets = [1, 0], sizes = [1, 8], strides = [1, 1]} : vector<2x8xf32> to vector<1x8xf32>
    %379 = vector.broadcast %378 : vector<1x8xf32> to vector<8x8xf32>
    %380 = arith.addf %377, %379 : vector<8x8xf32>
    %cst_128 = arith.constant dense<0xFF800000> : vector<8xf32>
    %381 = vector.multi_reduction <maximumf>, %380, %cst_128 [1] : vector<8x8xf32> to vector<8xf32>
    %382 = vector.shape_cast %381 : vector<8xf32> to vector<8x1xf32>
    %383 = vector.broadcast %382 : vector<8x1xf32> to vector<8x8xf32>
    %384 = arith.subf %380, %383 : vector<8x8xf32>
    %385 = math.exp %384 : vector<8x8xf32>
    %cst_129 = arith.constant dense<0.000000e+00> : vector<8xf32>
    %386 = vector.multi_reduction <add>, %385, %cst_129 [1] : vector<8x8xf32> to vector<8xf32>
    %387 = vector.shape_cast %386 : vector<8xf32> to vector<8x1xf32>
    %388 = tpu.reciprocal %387 {approx = true} : vector<8x1xf32> -> vector<8x1xf32>
    %389 = vector.broadcast %388 : vector<8x1xf32> to vector<8x8xf32>
    %390 = arith.mulf %385, %389 : vector<8x8xf32>
    %cst_130 = arith.constant dense<0.000000e+00> : vector<8x8xf32>
    %391 = tpu.matmul %390, %373, %cst_130 {dimension_numbers = #tpu.dot_dimension_numbers<[1], [0], [0], [1], [0, 0, 1, 1], [], []>} : vector<8x8xf32>, vector<8x8xf32>, vector<8x8xf32> -> vector<8x8xf32>
    %392 = tpu.concatenate %370, %391 in 0 : vector<8x8xf32>, vector<8x8xf32> -> vector<16x8xf32>
    %393 = vector.extract_strided_slice %304 {offsets = [0, 16], sizes = [8, 8], strides = [1, 1]} : vector<16x32xf32> to vector<8x8xf32>
    %394 = vector.extract_strided_slice %305 {offsets = [0, 16], sizes = [8, 8], strides = [1, 1]} : vector<16x32xf32> to vector<8x8xf32>
    %395 = vector.extract_strided_slice %306 {offsets = [0, 16], sizes = [8, 8], strides = [1, 1]} : vector<16x32xf32> to vector<8x8xf32>
    %396 = tpu.transpose %394, [1, 0] : vector<8x8xf32> -> vector<8x8xf32>
    %cst_131 = arith.constant dense<0.000000e+00> : vector<8x8xf32>
    %397 = tpu.matmul %393, %396, %cst_131 {dimension_numbers = #tpu.dot_dimension_numbers<[1], [0], [0], [1], [0, 0, 1, 1], [], []>} : vector<8x8xf32>, vector<8x8xf32>, vector<8x8xf32> -> vector<8x8xf32>
    %cst_132 = arith.constant 0.353553385 : f32
    %398 = vector.broadcast %cst_132 : f32 to vector<8x8xf32>
    %399 = arith.mulf %397, %398 : vector<8x8xf32>
    %400 = vector.extract_strided_slice %25 {offsets = [0, 0], sizes = [1, 8], strides = [1, 1]} : vector<2x8xf32> to vector<1x8xf32>
    %401 = vector.broadcast %400 : vector<1x8xf32> to vector<8x8xf32>
    %402 = arith.addf %399, %401 : vector<8x8xf32>
    %cst_133 = arith.constant dense<0xFF800000> : vector<8xf32>
    %403 = vector.multi_reduction <maximumf>, %402, %cst_133 [1] : vector<8x8xf32> to vector<8xf32>
    %404 = vector.shape_cast %403 : vector<8xf32> to vector<8x1xf32>
    %405 = vector.broadcast %404 : vector<8x1xf32> to vector<8x8xf32>
    %406 = arith.subf %402, %405 : vector<8x8xf32>
    %407 = math.exp %406 : vector<8x8xf32>
    %cst_134 = arith.constant dense<0.000000e+00> : vector<8xf32>
    %408 = vector.multi_reduction <add>, %407, %cst_134 [1] : vector<8x8xf32> to vector<8xf32>
    %409 = vector.shape_cast %408 : vector<8xf32> to vector<8x1xf32>
    %410 = tpu.reciprocal %409 {approx = true} : vector<8x1xf32> -> vector<8x1xf32>
    %411 = vector.broadcast %410 : vector<8x1xf32> to vector<8x8xf32>
    %412 = arith.mulf %407, %411 : vector<8x8xf32>
    %cst_135 = arith.constant dense<0.000000e+00> : vector<8x8xf32>
    %413 = tpu.matmul %412, %395, %cst_135 {dimension_numbers = #tpu.dot_dimension_numbers<[1], [0], [0], [1], [0, 0, 1, 1], [], []>} : vector<8x8xf32>, vector<8x8xf32>, vector<8x8xf32> -> vector<8x8xf32>
    %414 = vector.extract_strided_slice %304 {offsets = [8, 16], sizes = [8, 8], strides = [1, 1]} : vector<16x32xf32> to vector<8x8xf32>
    %415 = vector.extract_strided_slice %305 {offsets = [8, 16], sizes = [8, 8], strides = [1, 1]} : vector<16x32xf32> to vector<8x8xf32>
    %416 = vector.extract_strided_slice %306 {offsets = [8, 16], sizes = [8, 8], strides = [1, 1]} : vector<16x32xf32> to vector<8x8xf32>
    %417 = tpu.transpose %415, [1, 0] : vector<8x8xf32> -> vector<8x8xf32>
    %cst_136 = arith.constant dense<0.000000e+00> : vector<8x8xf32>
    %418 = tpu.matmul %414, %417, %cst_136 {dimension_numbers = #tpu.dot_dimension_numbers<[1], [0], [0], [1], [0, 0, 1, 1], [], []>} : vector<8x8xf32>, vector<8x8xf32>, vector<8x8xf32> -> vector<8x8xf32>
    %cst_137 = arith.constant 0.353553385 : f32
    %419 = vector.broadcast %cst_137 : f32 to vector<8x8xf32>
    %420 = arith.mulf %418, %419 : vector<8x8xf32>
    %421 = vector.extract_strided_slice %25 {offsets = [1, 0], sizes = [1, 8], strides = [1, 1]} : vector<2x8xf32> to vector<1x8xf32>
    %422 = vector.broadcast %421 : vector<1x8xf32> to vector<8x8xf32>
    %423 = arith.addf %420, %422 : vector<8x8xf32>
    %cst_138 = arith.constant dense<0xFF800000> : vector<8xf32>
    %424 = vector.multi_reduction <maximumf>, %423, %cst_138 [1] : vector<8x8xf32> to vector<8xf32>
    %425 = vector.shape_cast %424 : vector<8xf32> to vector<8x1xf32>
    %426 = vector.broadcast %425 : vector<8x1xf32> to vector<8x8xf32>
    %427 = arith.subf %423, %426 : vector<8x8xf32>
    %428 = math.exp %427 : vector<8x8xf32>
    %cst_139 = arith.constant dense<0.000000e+00> : vector<8xf32>
    %429 = vector.multi_reduction <add>, %428, %cst_139 [1] : vector<8x8xf32> to vector<8xf32>
    %430 = vector.shape_cast %429 : vector<8xf32> to vector<8x1xf32>
    %431 = tpu.reciprocal %430 {approx = true} : vector<8x1xf32> -> vector<8x1xf32>
    %432 = vector.broadcast %431 : vector<8x1xf32> to vector<8x8xf32>
    %433 = arith.mulf %428, %432 : vector<8x8xf32>
    %cst_140 = arith.constant dense<0.000000e+00> : vector<8x8xf32>
    %434 = tpu.matmul %433, %416, %cst_140 {dimension_numbers = #tpu.dot_dimension_numbers<[1], [0], [0], [1], [0, 0, 1, 1], [], []>} : vector<8x8xf32>, vector<8x8xf32>, vector<8x8xf32> -> vector<8x8xf32>
    %435 = tpu.concatenate %413, %434 in 0 : vector<8x8xf32>, vector<8x8xf32> -> vector<16x8xf32>
    %436 = vector.extract_strided_slice %304 {offsets = [0, 24], sizes = [8, 8], strides = [1, 1]} : vector<16x32xf32> to vector<8x8xf32>
    %437 = vector.extract_strided_slice %305 {offsets = [0, 24], sizes = [8, 8], strides = [1, 1]} : vector<16x32xf32> to vector<8x8xf32>
    %438 = vector.extract_strided_slice %306 {offsets = [0, 24], sizes = [8, 8], strides = [1, 1]} : vector<16x32xf32> to vector<8x8xf32>
    %439 = tpu.transpose %437, [1, 0] : vector<8x8xf32> -> vector<8x8xf32>
    %cst_141 = arith.constant dense<0.000000e+00> : vector<8x8xf32>
    %440 = tpu.matmul %436, %439, %cst_141 {dimension_numbers = #tpu.dot_dimension_numbers<[1], [0], [0], [1], [0, 0, 1, 1], [], []>} : vector<8x8xf32>, vector<8x8xf32>, vector<8x8xf32> -> vector<8x8xf32>
    %cst_142 = arith.constant 0.353553385 : f32
    %441 = vector.broadcast %cst_142 : f32 to vector<8x8xf32>
    %442 = arith.mulf %440, %441 : vector<8x8xf32>
    %443 = vector.extract_strided_slice %25 {offsets = [0, 0], sizes = [1, 8], strides = [1, 1]} : vector<2x8xf32> to vector<1x8xf32>
    %444 = vector.broadcast %443 : vector<1x8xf32> to vector<8x8xf32>
    %445 = arith.addf %442, %444 : vector<8x8xf32>
    %cst_143 = arith.constant dense<0xFF800000> : vector<8xf32>
    %446 = vector.multi_reduction <maximumf>, %445, %cst_143 [1] : vector<8x8xf32> to vector<8xf32>
    %447 = vector.shape_cast %446 : vector<8xf32> to vector<8x1xf32>
    %448 = vector.broadcast %447 : vector<8x1xf32> to vector<8x8xf32>
    %449 = arith.subf %445, %448 : vector<8x8xf32>
    %450 = math.exp %449 : vector<8x8xf32>
    %cst_144 = arith.constant dense<0.000000e+00> : vector<8xf32>
    %451 = vector.multi_reduction <add>, %450, %cst_144 [1] : vector<8x8xf32> to vector<8xf32>
    %452 = vector.shape_cast %451 : vector<8xf32> to vector<8x1xf32>
    %453 = tpu.reciprocal %452 {approx = true} : vector<8x1xf32> -> vector<8x1xf32>
    %454 = vector.broadcast %453 : vector<8x1xf32> to vector<8x8xf32>
    %455 = arith.mulf %450, %454 : vector<8x8xf32>
    %cst_145 = arith.constant dense<0.000000e+00> : vector<8x8xf32>
    %456 = tpu.matmul %455, %438, %cst_145 {dimension_numbers = #tpu.dot_dimension_numbers<[1], [0], [0], [1], [0, 0, 1, 1], [], []>} : vector<8x8xf32>, vector<8x8xf32>, vector<8x8xf32> -> vector<8x8xf32>
    %457 = vector.extract_strided_slice %304 {offsets = [8, 24], sizes = [8, 8], strides = [1, 1]} : vector<16x32xf32> to vector<8x8xf32>
    %458 = vector.extract_strided_slice %305 {offsets = [8, 24], sizes = [8, 8], strides = [1, 1]} : vector<16x32xf32> to vector<8x8xf32>
    %459 = vector.extract_strided_slice %306 {offsets = [8, 24], sizes = [8, 8], strides = [1, 1]} : vector<16x32xf32> to vector<8x8xf32>
    %460 = tpu.transpose %458, [1, 0] : vector<8x8xf32> -> vector<8x8xf32>
    %cst_146 = arith.constant dense<0.000000e+00> : vector<8x8xf32>
    %461 = tpu.matmul %457, %460, %cst_146 {dimension_numbers = #tpu.dot_dimension_numbers<[1], [0], [0], [1], [0, 0, 1, 1], [], []>} : vector<8x8xf32>, vector<8x8xf32>, vector<8x8xf32> -> vector<8x8xf32>
    %cst_147 = arith.constant 0.353553385 : f32
    %462 = vector.broadcast %cst_147 : f32 to vector<8x8xf32>
    %463 = arith.mulf %461, %462 : vector<8x8xf32>
    %464 = vector.extract_strided_slice %25 {offsets = [1, 0], sizes = [1, 8], strides = [1, 1]} : vector<2x8xf32> to vector<1x8xf32>
    %465 = vector.broadcast %464 : vector<1x8xf32> to vector<8x8xf32>
    %466 = arith.addf %463, %465 : vector<8x8xf32>
    %cst_148 = arith.constant dense<0xFF800000> : vector<8xf32>
    %467 = vector.multi_reduction <maximumf>, %466, %cst_148 [1] : vector<8x8xf32> to vector<8xf32>
    %468 = vector.shape_cast %467 : vector<8xf32> to vector<8x1xf32>
    %469 = vector.broadcast %468 : vector<8x1xf32> to vector<8x8xf32>
    %470 = arith.subf %466, %469 : vector<8x8xf32>
    %471 = math.exp %470 : vector<8x8xf32>
    %cst_149 = arith.constant dense<0.000000e+00> : vector<8xf32>
    %472 = vector.multi_reduction <add>, %471, %cst_149 [1] : vector<8x8xf32> to vector<8xf32>
    %473 = vector.shape_cast %472 : vector<8xf32> to vector<8x1xf32>
    %474 = tpu.reciprocal %473 {approx = true} : vector<8x1xf32> -> vector<8x1xf32>
    %475 = vector.broadcast %474 : vector<8x1xf32> to vector<8x8xf32>
    %476 = arith.mulf %471, %475 : vector<8x8xf32>
    %cst_150 = arith.constant dense<0.000000e+00> : vector<8x8xf32>
    %477 = tpu.matmul %476, %459, %cst_150 {dimension_numbers = #tpu.dot_dimension_numbers<[1], [0], [0], [1], [0, 0, 1, 1], [], []>} : vector<8x8xf32>, vector<8x8xf32>, vector<8x8xf32> -> vector<8x8xf32>
    %478 = tpu.concatenate %456, %477 in 0 : vector<8x8xf32>, vector<8x8xf32> -> vector<16x8xf32>
    %479 = tpu.concatenate %349, %392, %435, %478 in 1 : vector<16x8xf32>, vector<16x8xf32>, vector<16x8xf32>, vector<16x8xf32> -> vector<16x32xf32>
    %c1_151 = arith.constant 1 : index
    %c0_152 = arith.constant 0 : index
    %c0_153 = arith.constant 0 : index
    %480 = vector.load %arg7[%c1_151, %c0_152, %c0_153] : memref<2x32x32xf32, #tpu.memory_space<vmem>>, vector<1x32x32xf32>
    %481 = vector.shape_cast %480 : vector<1x32x32xf32> to vector<32x32xf32>
    %cst_154 = arith.constant dense<0.000000e+00> : vector<16x32xf32>
    %482 = tpu.matmul %479, %481, %cst_154 {dimension_numbers = #tpu.dot_dimension_numbers<[1], [0], [0], [1], [0, 0, 1, 1], [], []>} : vector<16x32xf32>, vector<32x32xf32>, vector<16x32xf32> -> vector<16x32xf32>
    %c1_155 = arith.constant 1 : index
    %c0_156 = arith.constant 0 : index
    %c0_157 = arith.constant 0 : index
    %483 = vector.load %arg8[%c1_155, %c0_156, %c0_157] : memref<2x1x32xf32, #tpu.memory_space<vmem>>, vector<1x1x32xf32>
    %484 = vector.shape_cast %483 : vector<1x1x32xf32> to vector<1x32xf32>
    %485 = vector.broadcast %484 : vector<1x32xf32> to vector<16x32xf32>
    %486 = arith.addf %482, %485 : vector<16x32xf32>
    %487 = arith.addf %486, %296 : vector<16x32xf32>
    %c1_158 = arith.constant 1 : index
    %c0_159 = arith.constant 0 : index
    %c0_160 = arith.constant 0 : index
    %488 = vector.load %arg9[%c1_158, %c0_159, %c0_160] : memref<2x1x32xf32, #tpu.memory_space<vmem>>, vector<1x1x32xf32>
    %489 = vector.shape_cast %488 : vector<1x1x32xf32> to vector<1x32xf32>
    %c1_161 = arith.constant 1 : index
    %c0_162 = arith.constant 0 : index
    %c0_163 = arith.constant 0 : index
    %490 = vector.load %arg10[%c1_161, %c0_162, %c0_163] : memref<2x1x32xf32, #tpu.memory_space<vmem>>, vector<1x1x32xf32>
    %491 = vector.shape_cast %490 : vector<1x1x32xf32> to vector<1x32xf32>
    %cst_164 = arith.constant dense<0.000000e+00> : vector<16xf32>
    %492 = vector.multi_reduction <add>, %487, %cst_164 [1] : vector<16x32xf32> to vector<16xf32>
    %493 = vector.shape_cast %492 : vector<16xf32> to vector<16x1xf32>
    %cst_165 = arith.constant 3.200000e+01 : f32
    %494 = vector.broadcast %cst_165 : f32 to vector<16x1xf32>
    %495 = arith.divf %493, %494 : vector<16x1xf32>
    %496 = vector.broadcast %495 : vector<16x1xf32> to vector<16x32xf32>
    %497 = arith.subf %487, %496 : vector<16x32xf32>
    %498 = arith.mulf %497, %497 : vector<16x32xf32>
    %cst_166 = arith.constant dense<0.000000e+00> : vector<16xf32>
    %499 = vector.multi_reduction <add>, %498, %cst_166 [1] : vector<16x32xf32> to vector<16xf32>
    %500 = vector.shape_cast %499 : vector<16xf32> to vector<16x1xf32>
    %cst_167 = arith.constant 3.200000e+01 : f32
    %501 = vector.broadcast %cst_167 : f32 to vector<16x1xf32>
    %502 = arith.divf %500, %501 : vector<16x1xf32>
    %503 = vector.broadcast %495 : vector<16x1xf32> to vector<16x32xf32>
    %504 = arith.subf %487, %503 : vector<16x32xf32>
    %cst_168 = arith.constant 9.99999996E-13 : f32
    %505 = vector.broadcast %cst_168 : f32 to vector<16x1xf32>
    %506 = arith.addf %502, %505 : vector<16x1xf32>
    %507 = math.rsqrt %506 : vector<16x1xf32>
    %508 = vector.broadcast %507 : vector<16x1xf32> to vector<16x32xf32>
    %509 = arith.mulf %504, %508 : vector<16x32xf32>
    %510 = vector.broadcast %489 : vector<1x32xf32> to vector<16x32xf32>
    %511 = arith.mulf %509, %510 : vector<16x32xf32>
    %512 = vector.broadcast %491 : vector<1x32xf32> to vector<16x32xf32>
    %513 = arith.addf %511, %512 : vector<16x32xf32>
    %c1_169 = arith.constant 1 : index
    %c0_170 = arith.constant 0 : index
    %c0_171 = arith.constant 0 : index
    %514 = vector.load %arg11[%c1_169, %c0_170, %c0_171] : memref<2x32x64xf32, #tpu.memory_space<vmem>>, vector<1x32x64xf32>
    %515 = vector.shape_cast %514 : vector<1x32x64xf32> to vector<32x64xf32>
    %cst_172 = arith.constant dense<0.000000e+00> : vector<16x64xf32>
    %516 = tpu.matmul %513, %515, %cst_172 {dimension_numbers = #tpu.dot_dimension_numbers<[1], [0], [0], [1], [0, 0, 1, 1], [], []>} : vector<16x32xf32>, vector<32x64xf32>, vector<16x64xf32> -> vector<16x64xf32>
    %c1_173 = arith.constant 1 : index
    %c0_174 = arith.constant 0 : index
    %c0_175 = arith.constant 0 : index
    %517 = vector.load %arg12[%c1_173, %c0_174, %c0_175] : memref<2x1x64xf32, #tpu.memory_space<vmem>>, vector<1x1x64xf32>
    %518 = vector.shape_cast %517 : vector<1x1x64xf32> to vector<1x64xf32>
    %519 = vector.broadcast %518 : vector<1x64xf32> to vector<16x64xf32>
    %520 = arith.addf %516, %519 : vector<16x64xf32>
    %cst_176 = arith.constant 5.000000e-01 : f32
    %521 = vector.broadcast %cst_176 : f32 to vector<16x64xf32>
    %522 = arith.mulf %521, %520 : vector<16x64xf32>
    %cst_177 = arith.constant 4.471500e-02 : f32
    %523 = vector.broadcast %cst_177 : f32 to vector<16x64xf32>
    %524 = arith.mulf %523, %520 : vector<16x64xf32>
    %525 = arith.mulf %524, %520 : vector<16x64xf32>
    %526 = arith.mulf %525, %520 : vector<16x64xf32>
    %527 = arith.addf %520, %526 : vector<16x64xf32>
    %cst_178 = arith.constant 0.797884583 : f32
    %528 = vector.broadcast %cst_178 : f32 to vector<16x64xf32>
    %529 = arith.mulf %528, %527 : vector<16x64xf32>
    %530 = math.tanh %529 : vector<16x64xf32>
    %cst_179 = arith.constant 1.000000e+00 : f32
    %531 = vector.broadcast %cst_179 : f32 to vector<16x64xf32>
    %532 = arith.addf %531, %530 : vector<16x64xf32>
    %533 = arith.mulf %522, %532 : vector<16x64xf32>
    %c1_180 = arith.constant 1 : index
    %c0_181 = arith.constant 0 : index
    %c0_182 = arith.constant 0 : index
    %534 = vector.load %arg13[%c1_180, %c0_181, %c0_182] : memref<2x64x32xf32, #tpu.memory_space<vmem>>, vector<1x64x32xf32>
    %535 = vector.shape_cast %534 : vector<1x64x32xf32> to vector<64x32xf32>
    %cst_183 = arith.constant dense<0.000000e+00> : vector<16x32xf32>
    %536 = tpu.matmul %533, %535, %cst_183 {dimension_numbers = #tpu.dot_dimension_numbers<[1], [0], [0], [1], [0, 0, 1, 1], [], []>} : vector<16x64xf32>, vector<64x32xf32>, vector<16x32xf32> -> vector<16x32xf32>
    %c1_184 = arith.constant 1 : index
    %c0_185 = arith.constant 0 : index
    %c0_186 = arith.constant 0 : index
    %537 = vector.load %arg14[%c1_184, %c0_185, %c0_186] : memref<2x1x32xf32, #tpu.memory_space<vmem>>, vector<1x1x32xf32>
    %538 = vector.shape_cast %537 : vector<1x1x32xf32> to vector<1x32xf32>
    %539 = vector.broadcast %538 : vector<1x32xf32> to vector<16x32xf32>
    %540 = arith.addf %536, %539 : vector<16x32xf32>
    %541 = arith.addf %540, %513 : vector<16x32xf32>
    %c1_187 = arith.constant 1 : index
    %c0_188 = arith.constant 0 : index
    %c0_189 = arith.constant 0 : index
    %542 = vector.load %arg15[%c1_187, %c0_188, %c0_189] : memref<2x1x32xf32, #tpu.memory_space<vmem>>, vector<1x1x32xf32>
    %543 = vector.shape_cast %542 : vector<1x1x32xf32> to vector<1x32xf32>
    %c1_190 = arith.constant 1 : index
    %c0_191 = arith.constant 0 : index
    %c0_192 = arith.constant 0 : index
    %544 = vector.load %arg16[%c1_190, %c0_191, %c0_192] : memref<2x1x32xf32, #tpu.memory_space<vmem>>, vector<1x1x32xf32>
    %545 = vector.shape_cast %544 : vector<1x1x32xf32> to vector<1x32xf32>
    %cst_193 = arith.constant dense<0.000000e+00> : vector<16xf32>
    %546 = vector.multi_reduction <add>, %541, %cst_193 [1] : vector<16x32xf32> to vector<16xf32>
    %547 = vector.shape_cast %546 : vector<16xf32> to vector<16x1xf32>
    %cst_194 = arith.constant 3.200000e+01 : f32
    %548 = vector.broadcast %cst_194 : f32 to vector<16x1xf32>
    %549 = arith.divf %547, %548 : vector<16x1xf32>
    %550 = vector.broadcast %549 : vector<16x1xf32> to vector<16x32xf32>
    %551 = arith.subf %541, %550 : vector<16x32xf32>
    %552 = arith.mulf %551, %551 : vector<16x32xf32>
    %cst_195 = arith.constant dense<0.000000e+00> : vector<16xf32>
    %553 = vector.multi_reduction <add>, %552, %cst_195 [1] : vector<16x32xf32> to vector<16xf32>
    %554 = vector.shape_cast %553 : vector<16xf32> to vector<16x1xf32>
    %cst_196 = arith.constant 3.200000e+01 : f32
    %555 = vector.broadcast %cst_196 : f32 to vector<16x1xf32>
    %556 = arith.divf %554, %555 : vector<16x1xf32>
    %557 = vector.broadcast %549 : vector<16x1xf32> to vector<16x32xf32>
    %558 = arith.subf %541, %557 : vector<16x32xf32>
    %cst_197 = arith.constant 9.99999996E-13 : f32
    %559 = vector.broadcast %cst_197 : f32 to vector<16x1xf32>
    %560 = arith.addf %556, %559 : vector<16x1xf32>
    %561 = math.rsqrt %560 : vector<16x1xf32>
    %562 = vector.broadcast %561 : vector<16x1xf32> to vector<16x32xf32>
    %563 = arith.mulf %558, %562 : vector<16x32xf32>
    %564 = vector.broadcast %543 : vector<1x32xf32> to vector<16x32xf32>
    %565 = arith.mulf %563, %564 : vector<16x32xf32>
    %566 = vector.broadcast %545 : vector<1x32xf32> to vector<16x32xf32>
    %567 = arith.addf %565, %566 : vector<16x32xf32>
    %568 = vector.extract_strided_slice %567 {offsets = [0, 0], sizes = [1, 32], strides = [1, 1]} : vector<16x32xf32> to vector<1x32xf32>
    %569 = vector.extract_strided_slice %567 {offsets = [8, 0], sizes = [1, 32], strides = [1, 1]} : vector<16x32xf32> to vector<1x32xf32>
    %570 = tpu.concatenate %568, %569 in 0 : vector<1x32xf32>, vector<1x32xf32> -> vector<2x32xf32>
    %c0_198 = arith.constant 0 : index
    %c0_199 = arith.constant 0 : index
    %571 = vector.load %arg17[%c0_198, %c0_199] : memref<32x32xf32, #tpu.memory_space<vmem>>, vector<32x32xf32>
    %cst_200 = arith.constant dense<0.000000e+00> : vector<2x32xf32>
    %572 = tpu.matmul %570, %571, %cst_200 {dimension_numbers = #tpu.dot_dimension_numbers<[1], [0], [0], [1], [0, 0, 1, 1], [], []>} : vector<2x32xf32>, vector<32x32xf32>, vector<2x32xf32> -> vector<2x32xf32>
    %c0_201 = arith.constant 0 : index
    %c0_202 = arith.constant 0 : index
    %573 = vector.load %arg18[%c0_201, %c0_202] : memref<1x32xf32, #tpu.memory_space<vmem>>, vector<1x32xf32>
    %574 = vector.broadcast %573 : vector<1x32xf32> to vector<2x32xf32>
    %575 = arith.addf %572, %574 : vector<2x32xf32>
    %576 = math.tanh %575 : vector<2x32xf32>
    %c0_203 = arith.constant 0 : index
    %c0_204 = arith.constant 0 : index
    %577 = vector.load %arg19[%c0_203, %c0_204] : memref<32x3xf32, #tpu.memory_space<vmem>>, vector<32x3xf32>
    %cst_205 = arith.constant dense<0.000000e+00> : vector<2x3xf32>
    %578 = tpu.matmul %576, %577, %cst_205 {dimension_numbers = #tpu.dot_dimension_numbers<[1], [0], [0], [1], [0, 0, 1, 1], [], []>} : vector<2x32xf32>, vector<32x3xf32>, vector<2x3xf32> -> vector<2x3xf32>
    %c0_206 = arith.constant 0 : index
    %c0_207 = arith.constant 0 : index
    %579 = vector.load %arg20[%c0_206, %c0_207] : memref<1x3xf32, #tpu.memory_space<vmem>>, vector<1x3xf32>
    %580 = vector.broadcast %579 : vector<1x3xf32> to vector<2x3xf32>
    %581 = arith.addf %578, %580 : vector<2x3xf32>
    %c0_208 = arith.constant 0 : index
    %c0_209 = arith.constant 0 : index
    %582 = vector.load %arg21[%c0_208, %c0_209] : memref<2x3xf32, #tpu.memory_space<vmem>>, vector<2x3xf32>
    tpu.vector_store %arg21[%c0_208, %c0_209], %581 {strides = array<i32>} : memref<2x3xf32, #tpu.memory_space<vmem>>, vector<2x3xf32>,
    return
  }
  func.func @transform_0(%arg0: i32) -> (i32, i32) {
    %c0_i32 = arith.constant 0 : i32
    %c0_i32_0 = arith.constant 0 : i32
    %c0_i32_1 = arith.constant 0 : i32
    return %c0_i32, %c0_i32_0 : i32, i32
  }
  func.func @transform_1(%arg0: i32) -> (i32, i32) {
    %c0_i32 = arith.constant 0 : i32
    %c0_i32_0 = arith.constant 0 : i32
    %c0_i32_1 = arith.constant 0 : i32
    return %c0_i32, %c0_i32_0 : i32, i32
  }
  func.func @transform_2(%arg0: i32) -> (i32, i32) {
    %c0_i32 = arith.constant 0 : i32
    %c0_i32_0 = arith.constant 0 : i32
    %c0_i32_1 = arith.constant 0 : i32
    return %c0_i32, %c0_i32_0 : i32, i32
  }
  func.func @transform_3(%arg0: i32) -> (i32, i32) {
    %c0_i32 = arith.constant 0 : i32
    %c0_i32_0 = arith.constant 0 : i32
    %c0_i32_1 = arith.constant 0 : i32
    return %c0_i32, %c0_i32_0 : i32, i32
  }
  func.func @transform_4(%arg0: i32) -> (i32, i32, i32) {
    %c0_i32 = arith.constant 0 : i32
    %c0_i32_0 = arith.constant 0 : i32
    %c0_i32_1 = arith.constant 0 : i32
    %c0_i32_2 = arith.constant 0 : i32
    return %c0_i32, %c0_i32_0, %c0_i32_1 : i32, i32, i32
  }
  func.func @transform_5(%arg0: i32) -> (i32, i32, i32) {
    %c0_i32 = arith.constant 0 : i32
    %c0_i32_0 = arith.constant 0 : i32
    %c0_i32_1 = arith.constant 0 : i32
    %c0_i32_2 = arith.constant 0 : i32
    return %c0_i32, %c0_i32_0, %c0_i32_1 : i32, i32, i32
  }
  func.func @transform_6(%arg0: i32) -> (i32, i32, i32) {
    %c0_i32 = arith.constant 0 : i32
    %c0_i32_0 = arith.constant 0 : i32
    %c0_i32_1 = arith.constant 0 : i32
    %c0_i32_2 = arith.constant 0 : i32
    return %c0_i32, %c0_i32_0, %c0_i32_1 : i32, i32, i32
  }
  func.func @transform_7(%arg0: i32) -> (i32, i32, i32) {
    %c0_i32 = arith.constant 0 : i32
    %c0_i32_0 = arith.constant 0 : i32
    %c0_i32_1 = arith.constant 0 : i32
    %c0_i32_2 = arith.constant 0 : i32
    return %c0_i32, %c0_i32_0, %c0_i32_1 : i32, i32, i32
  }
  func.func @transform_8(%arg0: i32) -> (i32, i32, i32) {
    %c0_i32 = arith.constant 0 : i32
    %c0_i32_0 = arith.constant 0 : i32
    %c0_i32_1 = arith.constant 0 : i32
    %c0_i32_2 = arith.constant 0 : i32
    return %c0_i32, %c0_i32_0, %c0_i32_1 : i32, i32, i32
  }
  func.func @transform_9(%arg0: i32) -> (i32, i32, i32) {
    %c0_i32 = arith.constant 0 : i32
    %c0_i32_0 = arith.constant 0 : i32
    %c0_i32_1 = arith.constant 0 : i32
    %c0_i32_2 = arith.constant 0 : i32
    return %c0_i32, %c0_i32_0, %c0_i32_1 : i32, i32, i32
  }
  func.func @transform_10(%arg0: i32) -> (i32, i32, i32) {
    %c0_i32 = arith.constant 0 : i32
    %c0_i32_0 = arith.constant 0 : i32
    %c0_i32_1 = arith.constant 0 : i32
    %c0_i32_2 = arith.constant 0 : i32
    return %c0_i32, %c0_i32_0, %c0_i32_1 : i32, i32, i32
  }
  func.func @transform_11(%arg0: i32) -> (i32, i32, i32) {
    %c0_i32 = arith.constant 0 : i32
    %c0_i32_0 = arith.constant 0 : i32
    %c0_i32_1 = arith.constant 0 : i32
    %c0_i32_2 = arith.constant 0 : i32
    return %c0_i32, %c0_i32_0, %c0_i32_1 : i32, i32, i32
  }
  func.func @transform_12(%arg0: i32) -> (i32, i32, i32) {
    %c0_i32 = arith.constant 0 : i32
    %c0_i32_0 = arith.constant 0 : i32
    %c0_i32_1 = arith.constant 0 : i32
    %c0_i32_2 = arith.constant 0 : i32
    return %c0_i32, %c0_i32_0, %c0_i32_1 : i32, i32, i32
  }
  func.func @transform_13(%arg0: i32) -> (i32, i32, i32) {
    %c0_i32 = arith.constant 0 : i32
    %c0_i32_0 = arith.constant 0 : i32
    %c0_i32_1 = arith.constant 0 : i32
    %c0_i32_2 = arith.constant 0 : i32
    return %c0_i32, %c0_i32_0, %c0_i32_1 : i32, i32, i32
  }
  func.func @transform_14(%arg0: i32) -> (i32, i32, i32) {
    %c0_i32 = arith.constant 0 : i32
    %c0_i32_0 = arith.constant 0 : i32
    %c0_i32_1 = arith.constant 0 : i32
    %c0_i32_2 = arith.constant 0 : i32
    return %c0_i32, %c0_i32_0, %c0_i32_1 : i32, i32, i32
  }
  func.func @transform_15(%arg0: i32) -> (i32, i32, i32) {
    %c0_i32 = arith.constant 0 : i32
    %c0_i32_0 = arith.constant 0 : i32
    %c0_i32_1 = arith.constant 0 : i32
    %c0_i32_2 = arith.constant 0 : i32
    return %c0_i32, %c0_i32_0, %c0_i32_1 : i32, i32, i32
  }
  func.func @transform_16(%arg0: i32) -> (i32, i32) {
    %c0_i32 = arith.constant 0 : i32
    %c0_i32_0 = arith.constant 0 : i32
    %c0_i32_1 = arith.constant 0 : i32
    return %c0_i32, %c0_i32_0 : i32, i32
  }
  func.func @transform_17(%arg0: i32) -> (i32, i32) {
    %c0_i32 = arith.constant 0 : i32
    %c0_i32_0 = arith.constant 0 : i32
    %c0_i32_1 = arith.constant 0 : i32
    return %c0_i32, %c0_i32_0 : i32, i32
  }
  func.func @transform_18(%arg0: i32) -> (i32, i32) {
    %c0_i32 = arith.constant 0 : i32
    %c0_i32_0 = arith.constant 0 : i32
    %c0_i32_1 = arith.constant 0 : i32
    return %c0_i32, %c0_i32_0 : i32, i32
  }
  func.func @transform_19(%arg0: i32) -> (i32, i32) {
    %c0_i32 = arith.constant 0 : i32
    %c0_i32_0 = arith.constant 0 : i32
    %c0_i32_1 = arith.constant 0 : i32
    return %c0_i32, %c0_i32_0 : i32, i32
  }
  func.func @transform_20(%arg0: i32) -> (i32, i32) {
    %c0_i32 = arith.constant 0 : i32
    %c0_i32_0 = arith.constant 0 : i32
    %c0_i32_1 = arith.constant 0 : i32
    return %c0_i32, %c0_i32_0 : i32, i32
  }
}

</mosaic_0001>

<llo_original>
// kernel: bert_classifier_forward.1
$region0: #{bert_classifier_forward.1}
  #allocation0 [shape = 'u32[]', space=smem, size = 0x4, offset = 0x4, fixed_abs, tag = 'smem constant byte address 0x4 - core index']
  #allocation1 [shape = 'u32[144,128]{1,0:T(1,128)}', space=vmem, size = 0x12000, scoped, tag = 'internal scratch']
  %s0 = inlined_call_operand.vmem [shape: f32[16,32], index: 0, kind: input, shape index: {}]
  %s1 = inlined_call_operand.vmem [shape: f32[2,8], index: 1, kind: input, shape index: {}]
  %s2 = inlined_call_operand.vmem [shape: f32[1,32], index: 2, kind: input, shape index: {}]
  %s3 = inlined_call_operand.vmem [shape: f32[1,32], index: 3, kind: input, shape index: {}]
  %s4 = inlined_call_operand.vmem [shape: f32[2,32,96], index: 4, kind: input, shape index: {}]
  %s5 = inlined_call_operand.vmem [shape: f32[2,1,96], index: 5, kind: input, shape index: {}]
  %s6 = inlined_call_operand.vmem [shape: f32[2,32,32], index: 6, kind: input, shape index: {}]
  %s7 = inlined_call_operand.vmem [shape: f32[2,1,32], index: 7, kind: input, shape index: {}]
  %s8 = inlined_call_operand.vmem [shape: f32[2,1,32], index: 8, kind: input, shape index: {}]
  %s9 = inlined_call_operand.vmem [shape: f32[2,1,32], index: 9, kind: input, shape index: {}]
  %s10 = inlined_call_operand.vmem [shape: f32[2,32,64], index: 10, kind: input, shape index: {}]
  %s11 = inlined_call_operand.vmem [shape: f32[2,1,64], index: 11, kind: input, shape index: {}]
  %s12 = inlined_call_operand.vmem [shape: f32[2,64,32], index: 12, kind: input, shape index: {}]
  %s13 = inlined_call_operand.vmem [shape: f32[2,1,32], index: 13, kind: input, shape index: {}]
  %s14 = inlined_call_operand.vmem [shape: f32[2,1,32], index: 14, kind: input, shape index: {}]
  %s15 = inlined_call_operand.vmem [shape: f32[2,1,32], index: 15, kind: input, shape index: {}]
  %s16 = inlined_call_operand.vmem [shape: f32[32,32], index: 16, kind: input, shape index: {}]
  %s17 = inlined_call_operand.vmem [shape: f32[1,32], index: 17, kind: input, shape index: {}]
  %s18 = inlined_call_operand.vmem [shape: f32[32,3], index: 18, kind: input, shape index: {}]
  %s19 = inlined_call_operand.vmem [shape: f32[1,3], index: 19, kind: input, shape index: {}]
  %s20 = inlined_call_operand.hbm [shape: f32[2,3], index: 20, kind: output, shape index: {}]
  %s21 = sld [smem:[#allocation0]]
  $region90: #{bert_classifier_forward.1} parent=0
    _
  %s23 = ssub.s32 1, %s21
  %s24 = scalar_select 0, %s23, %s21
  $region1: #{bert_classifier_forward.1} parent=0
    #allocation2 [shape = 'u8[1024]{0}', space=vmem, size = 0x400, scoped, tag = 'output window, operand 0, single buffered']
    #allocation3 [shape = 's32[1]{0}', space=sflag, size = 0x4, scoped, tag = 'scoped memory for bert_classifier_forward.1']
    %25 = vsyncpa [#allocation3], 0
    // Predicated region
    $region2: #{bert_classifier_forward.1} parent=1 // pred_check
      _
    $region3: #{bert_classifier_forward.1} parent=1 // pred_check_branch
      %27 = sbr.rel (0) target = $region5
    $region4: #{bert_classifier_forward.1} parent=1 // pred_region
      _
    $region5: #{bert_classifier_forward.1} parent=1 // pred_fallthru
      _
    // Predicated region
    $region6: #{bert_classifier_forward.1} parent=1 // pred_check
      _
    $region7: #{bert_classifier_forward.1} parent=1 // pred_check_branch
      %29 = sbr.rel (0) target = $region9
    $region8: #{bert_classifier_forward.1} parent=1 // pred_region
      _
    $region9: #{bert_classifier_forward.1} parent=1 // pred_fallthru
      _
    // Predicated region
    $region10: #{bert_classifier_forward.1} parent=1 // pred_check
      _
    $region11: #{bert_classifier_forward.1} parent=1 // pred_check_branch
      %31 = sbr.rel (0) target = $region13
    $region12: #{bert_classifier_forward.1} parent=1 // pred_region
      _
    $region13: #{bert_classifier_forward.1} parent=1 // pred_fallthru
      _
    // Predicated region
    $region14: #{bert_classifier_forward.1} parent=1 // pred_check
      _
    $region15: #{bert_classifier_forward.1} parent=1 // pred_check_branch
      %33 = sbr.rel (0) target = $region17
    $region16: #{bert_classifier_forward.1} parent=1 // pred_region
      _
    $region17: #{bert_classifier_forward.1} parent=1 // pred_fallthru
      _
    // Predicated region
    $region18: #{bert_classifier_forward.1} parent=1 // pred_check
      _
    $region19: #{bert_classifier_forward.1} parent=1 // pred_check_branch
      %35 = sbr.rel (0) target = $region21
    $region20: #{bert_classifier_forward.1} parent=1 // pred_region
      _
    $region21: #{bert_classifier_forward.1} parent=1 // pred_fallthru
      _
    // Predicated region
    $region22: #{bert_classifier_forward.1} parent=1 // pred_check
      _
    $region23: #{bert_classifier_forward.1} parent=1 // pred_check_branch
      %37 = sbr.rel (0) target = $region25
    $region24: #{bert_classifier_forward.1} parent=1 // pred_region
      _
    $region25: #{bert_classifier_forward.1} parent=1 // pred_fallthru
      _
    // Predicated region
    $region26: #{bert_classifier_forward.1} parent=1 // pred_check
      _
    $region27: #{bert_classifier_forward.1} parent=1 // pred_check_branch
      %39 = sbr.rel (0) target = $region29
    $region28: #{bert_classifier_forward.1} parent=1 // pred_region
      _
    $region29: #{bert_classifier_forward.1} parent=1 // pred_fallthru
      _
    // Predicated region
    $region30: #{bert_classifier_forward.1} parent=1 // pred_check
      _
    $region31: #{bert_classifier_forward.1} parent=1 // pred_check_branch
      %41 = sbr.rel (0) target = $region33
    $region32: #{bert_classifier_forward.1} parent=1 // pred_region
      _
    $region33: #{bert_classifier_forward.1} parent=1 // pred_fallthru
      _
    // Predicated region
    $region34: #{bert_classifier_forward.1} parent=1 // pred_check
      _
    $region35: #{bert_classifier_forward.1} parent=1 // pred_check_branch
      %43 = sbr.rel (0) target = $region37
    $region36: #{bert_classifier_forward.1} parent=1 // pred_region
      _
    $region37: #{bert_classifier_forward.1} parent=1 // pred_fallthru
      _
    // Predicated region
    $region38: #{bert_classifier_forward.1} parent=1 // pred_check
      _
    $region39: #{bert_classifier_forward.1} parent=1 // pred_check_branch
      %45 = sbr.rel (0) target = $region41
    $region40: #{bert_classifier_forward.1} parent=1 // pred_region
      _
    $region41: #{bert_classifier_forward.1} parent=1 // pred_fallthru
      _
    // Predicated region
    $region42: #{bert_classifier_forward.1} parent=1 // pred_check
      _
    $region43: #{bert_classifier_forward.1} parent=1 // pred_check_branch
      %47 = sbr.rel (0) target = $region45
    $region44: #{bert_classifier_forward.1} parent=1 // pred_region
      _
    $region45: #{bert_classifier_forward.1} parent=1 // pred_fallthru
      _
    // Predicated region
    $region46: #{bert_classifier_forward.1} parent=1 // pred_check
      _
    $region47: #{bert_classifier_forward.1} parent=1 // pred_check_branch
      %49 = sbr.rel (0) target = $region49
    $region48: #{bert_classifier_forward.1} parent=1 // pred_region
      _
    $region49: #{bert_classifier_forward.1} parent=1 // pred_fallthru
      _
    // Predicated region
    $region50: #{bert_classifier_forward.1} parent=1 // pred_check
      _
    $region51: #{bert_classifier_forward.1} parent=1 // pred_check_branch
      %51 = sbr.rel (0) target = $region53
    $region52: #{bert_classifier_forward.1} parent=1 // pred_region
      _
    $region53: #{bert_classifier_forward.1} parent=1 // pred_fallthru
      _
    // Predicated region
    $region54: #{bert_classifier_forward.1} parent=1 // pred_check
      _
    $region55: #{bert_classifier_forward.1} parent=1 // pred_check_branch
      %53 = sbr.rel (0) target = $region57
    $region56: #{bert_classifier_forward.1} parent=1 // pred_region
      _
    $region57: #{bert_classifier_forward.1} parent=1 // pred_fallthru
      _
    // Predicated region
    $region58: #{bert_classifier_forward.1} parent=1 // pred_check
      _
    $region59: #{bert_classifier_forward.1} parent=1 // pred_check_branch
      %55 = sbr.rel (0) target = $region61
    $region60: #{bert_classifier_forward.1} parent=1 // pred_region
      _
    $region61: #{bert_classifier_forward.1} parent=1 // pred_fallthru
      _
    // Predicated region
    $region62: #{bert_classifier_forward.1} parent=1 // pred_check
      _
    $region63: #{bert_classifier_forward.1} parent=1 // pred_check_branch
      %57 = sbr.rel (0) target = $region65
    $region64: #{bert_classifier_forward.1} parent=1 // pred_region
      _
    $region65: #{bert_classifier_forward.1} parent=1 // pred_fallthru
      _
    // Predicated region
    $region66: #{bert_classifier_forward.1} parent=1 // pred_check
      _
    $region67: #{bert_classifier_forward.1} parent=1 // pred_check_branch
      %59 = sbr.rel (0) target = $region69
    $region68: #{bert_classifier_forward.1} parent=1 // pred_region
      _
    $region69: #{bert_classifier_forward.1} parent=1 // pred_fallthru
      _
    // Predicated region
    $region70: #{bert_classifier_forward.1} parent=1 // pred_check
      _
    $region71: #{bert_classifier_forward.1} parent=1 // pred_check_branch
      %61 = sbr.rel (0) target = $region73
    $region72: #{bert_classifier_forward.1} parent=1 // pred_region
      _
    $region73: #{bert_classifier_forward.1} parent=1 // pred_fallthru
      _
    // Predicated region
    $region74: #{bert_classifier_forward.1} parent=1 // pred_check
      _
    $region75: #{bert_classifier_forward.1} parent=1 // pred_check_branch
      %63 = sbr.rel (0) target = $region77
    $region76: #{bert_classifier_forward.1} parent=1 // pred_region
      _
    $region77: #{bert_classifier_forward.1} parent=1 // pred_fallthru
      _
    // Predicated region
    $region78: #{bert_classifier_forward.1} parent=1 // pred_check
      _
    $region79: #{bert_classifier_forward.1} parent=1 // pred_check_branch
      %65 = sbr.rel (0) target = $region81
    $region80: #{bert_classifier_forward.1} parent=1 // pred_region
      _
    $region81: #{bert_classifier_forward.1} parent=1 // pred_fallthru
      _
    %v66 = vld [vmem:[%s0] sm:$0xff]
    %v67 = vld [vmem:[%s0 + $0x8] sm:$0xff]
    %v68 = vld [vmem:[%s2] sm:$0x1]
    %v69 = vld [vmem:[%s3] sm:$0x1]
    %vm70 = vcmask 261120
    %v71 = vsel %vm70, %v66, 0.0
    %72 = vadd.xlane.f32.xlu0 %v71
    %v73 = vpop.xlane.xlu0 %72
    %v74 = vsel %vm70, %v67, 0.0
    %75 = vadd.xlane.f32.xlu0 %v74
    %v76 = vpop.xlane.xlu0 %75
    %v77 = vrcp.pop 32.0
    %v78 = vmul.f32 %v73, %v77
    %v79 = vmul.f32 %v76, %v77
    %v80 = vsub.f32 %v66, %v78
    %v81 = vsub.f32 %v67, %v79
    %v82 = vmul.f32 %v80, %v80
    %v83 = vmul.f32 %v81, %v81
    %v84 = vsel %vm70, %v82, 0.0
    %85 = vadd.xlane.f32.xlu0 %v84
    %v86 = vpop.xlane.xlu0 %85
    %v87 = vsel %vm70, %v83, 0.0
    %88 = vadd.xlane.f32.xlu0 %v87
    %v89 = vpop.xlane.xlu0 %88
    %v90 = vmul.f32 %v86, %v77
    %v91 = vmul.f32 %v89, %v77
    %v92 = vadd.f32 %v90, 1e-12
    %v93 = vadd.f32 %v91, 1e-12
    %v94 = vrsqrt.pop %v92
    %v95 = vrsqrt.pop %v93
    %v96 = vmul.f32 %v80, %v94
    %v97 = vmul.f32 %v81, %v95
    %v99 = vlaneseq
    %v100 = vshrl.u32 %v99, 7
    %v101 = vsub.s32 0, %v100
    %v102 = vrot.slane %v68, %v101
    %v104 = vmul.f32 %v96, %v102
    %v105 = vmul.f32 %v97, %v102
    %v107 = vlaneseq
    %v108 = vshrl.u32 %v107, 7
    %v109 = vsub.s32 0, %v108
    %v110 = vrot.slane %v69, %v109
    %v112 = vadd.f32 %v104, %v110
    %v113 = vadd.f32 %v105, %v110
    %v114 = vld [vmem:[%s1] sm:$0x3]
    %v115 = vld [vmem:[%s4] sm:$0xff]
    %v116 = vld [vmem:[%s4 + $0x8] sm:$0xff]
    %v117 = vld [vmem:[%s4 + $0x10] sm:$0xff]
    %v118 = vld [vmem:[%s4 + $0x18] sm:$0xff]
    %v119 = vld [vmem:[%s5] sm:$0x1]
    %v121 = vlaneseq
    %v122 = vshrl.u32 %v121, 7
    %v123 = vsub.s32 0, %v122
    %v124 = vrot.slane %v119, %v123
    %v127 = vsel %vm70, %v112, 0
    %v130 = vsel %vm70, %v113, 0
    %132 = vmatprep.subr.mxu0 0.0
    %133 = vmatpush1.msra.mxu0 %v115
    %134 = vmatprep.subr.mxu0 0.0
    %135 = vmatpush1.msra.mxu0 %v116
    %136 = vmatprep.subr.mxu0 0.0
    %137 = vmatpush1.msra.mxu0 %v117
    %138 = vmatprep.subr.mxu0 0.0
    %139 = vmatpush1.msra.mxu0 %v118
    %140 = vmatprep.subr.mxu0 0.0
    %141 = vmatpush1.msra.mxu0 0.0
    %142 = vmatprep.subr.mxu0 0.0
    %143 = vmatpush1.msra.mxu0 0.0
    %144 = vmatprep.subr.mxu0 0.0
    %145 = vmatpush1.msra.mxu0 0.0
    %146 = vmatprep.subr.mxu0 0.0
    %147 = vmatpush1.msra.mxu0 0.0
    %148 = vmatprep.subr.mxu0 0.0
    %149 = vmatpush1.msra.mxu0 0.0
    %150 = vmatprep.subr.mxu0 0.0
    %151 = vmatpush1.msra.mxu0 0.0
    %152 = vmatprep.subr.mxu0 0.0
    %153 = vmatpush1.msra.mxu0 0.0
    %154 = vmatprep.subr.mxu0 0.0
    %155 = vmatpush1.msra.mxu0 0.0
    %156 = vmatprep.subr.mxu0 0.0
    %157 = vmatpush1.msra.mxu0 0.0
    %158 = vmatprep.subr.mxu0 0.0
    %159 = vmatpush1.msra.mxu0 0.0
    %160 = vmatprep.subr.mxu0 0.0
    %161 = vmatpush1.msra.mxu0 0.0
    %162 = vmatprep.subr.mxu0 0.0
    %163 = vmatpush1.msra.mxu0 0.0
    %164 = vmatprep.subr.mxu0 0.0
    %165 = vmatpush1.msra.mxu0 0.0
    %166 = vmatprep.subr.mxu0 0.0
    %167 = vmatpush1.msra.mxu0 0.0
    %168 = vmatprep.subr.mxu0 0.0
    %169 = vmatpush1.msra.mxu0 0.0
    %170 = vmatprep.subr.mxu0 0.0
    %171 = vmatpush1.msra.mxu0 0.0
    %172 = vmatprep.subr.mxu0 0.0
    %173 = vmatpush1.msra.mxu0 0.0
    %174 = vmatprep.subr.mxu0 0.0
    %175 = vmatpush1.msra.mxu0 0.0
    %176 = vmatprep.subr.mxu0 0.0
    %177 = vmatpush1.msra.mxu0 0.0
    %178 = vmatprep.subr.mxu0 0.0
    %179 = vmatpush1.msra.mxu0 0.0
    %180 = vmatprep.subr.mxu0 0.0
    %181 = vmatpush1.msra.mxu0 0.0
    %182 = vmatprep.subr.mxu0 0.0
    %183 = vmatpush1.msra.mxu0 0.0
    %184 = vmatprep.subr.mxu0 0.0
    %185 = vmatpush1.msra.mxu0 0.0
    %186 = vmatprep.subr.mxu0 0.0
    %187 = vmatpush1.msra.mxu0 0.0
    %188 = vmatprep.subr.mxu0 0.0
    %189 = vmatpush1.msra.mxu0 0.0
    %190 = vmatprep.subr.mxu0 0.0
    %191 = vmatpush1.msra.mxu0 0.0
    %192 = vmatprep.subr.mxu0 0.0
    %193 = vmatpush1.msra.mxu0 0.0
    %194 = vmatprep.subr.mxu0 0.0
    %195 = vmatpush1.msra.mxu0 0.0
    %196 = vmatprep.mubr.f32.mxu0 0.0
    %197 = vmatmul.mubr.f32.gmra.mrb[0].mxu0 %v127
    %v198 = vpop.f32.mrb[0].mxu0
    %v199 = vadd.f32 %v124, %v198
    %v200 = vpop.f32.mrb[0].mxu0
    %201 = vmatprep.mubr.f32.mxu0 0.0
    %202 = vmatmul.mubr.f32.gmra.mrb[0].mxu0 %v130
    %v203 = vpop.f32.mrb[0].mxu0
    %v204 = vadd.f32 %v124, %v203
    %v205 = vpop.f32.mrb[0].mxu0
    %206 = vdwg.mxu0
    %208 = vrot.lane.b32.xlu0 %v199, 96
    %v209 = vpop.permute.xlu0 %208
    %vm210 = vcmask 64512
    %v211 = vsel %vm210, %v199, 0
    %v213 = vsel %vm210, %v209, 0
    %215 = vmatprep.subr.mxu0 0.0
    %216 = vmatpush1.xpose.msra.mxu0 %v213
    %217 = vmatprep.subr.mxu0 0.0
    %218 = vmatpush1.xpose.msra.mxu0 0.0
    %219 = vmatprep.subr.mxu0 0.0
    %220 = vmatpush1.xpose.msra.mxu0 0.0
    %221 = vmatprep.subr.mxu0 0.0
    %222 = vmatpush1.xpose.msra.mxu0 0.0
    %223 = vmatprep.subr.mxu0 0.0
    %224 = vmatpush1.xpose.msra.mxu0 0.0
    %225 = vmatprep.subr.mxu0 0.0
    %226 = vmatpush1.xpose.msra.mxu0 0.0
    %227 = vmatprep.subr.mxu0 0.0
    %228 = vmatpush1.xpose.msra.mxu0 0.0
    %229 = vmatprep.subr.mxu0 0.0
    %230 = vmatpush1.xpose.msra.mxu0 0.0
    %231 = vmatprep.subr.mxu0 0.0
    %232 = vmatpush1.xpose.msra.mxu0 0.0
    %233 = vmatprep.subr.mxu0 0.0
    %234 = vmatpush1.xpose.msra.mxu0 0.0
    %235 = vmatprep.subr.mxu0 0.0
    %236 = vmatpush1.xpose.msra.mxu0 0.0
    %237 = vmatprep.subr.mxu0 0.0
    %238 = vmatpush1.xpose.msra.mxu0 0.0
    %239 = vmatprep.subr.mxu0 0.0
    %240 = vmatpush1.xpose.msra.mxu0 0.0
    %241 = vmatprep.subr.mxu0 0.0
    %242 = vmatpush1.xpose.msra.mxu0 0.0
    %243 = vmatprep.subr.mxu0 0.0
    %244 = vmatpush1.xpose.msra.mxu0 0.0
    %245 = vmatprep.subr.mxu0 0.0
    %246 = vmatpush1.xpose.msra.mxu0 0.0
    %247 = vmatprep.subr.mxu0 0.0
    %248 = vmatpush1.xpose.msra.mxu0 0.0
    %249 = vmatprep.subr.mxu0 0.0
    %250 = vmatpush1.xpose.msra.mxu0 0.0
    %251 = vmatprep.subr.mxu0 0.0
    %252 = vmatpush1.xpose.msra.mxu0 0.0
    %253 = vmatprep.subr.mxu0 0.0
    %254 = vmatpush1.xpose.msra.mxu0 0.0
    %255 = vmatprep.subr.mxu0 0.0
    %256 = vmatpush1.xpose.msra.mxu0 0.0
    %257 = vmatprep.subr.mxu0 0.0
    %258 = vmatpush1.xpose.msra.mxu0 0.0
    %259 = vmatprep.subr.mxu0 0.0
    %260 = vmatpush1.xpose.msra.mxu0 0.0
    %261 = vmatprep.subr.mxu0 0.0
    %262 = vmatpush1.xpose.msra.mxu0 0.0
    %263 = vmatprep.subr.mxu0 0.0
    %264 = vmatpush1.xpose.msra.mxu0 0.0
    %265 = vmatprep.subr.mxu0 0.0
    %266 = vmatpush1.xpose.msra.mxu0 0.0
    %267 = vmatprep.subr.mxu0 0.0
    %268 = vmatpush1.xpose.msra.mxu0 0.0
    %269 = vmatprep.subr.mxu0 0.0
    %270 = vmatpush1.xpose.msra.mxu0 0.0
    %271 = vmatprep.subr.mxu0 0.0
    %272 = vmatpush1.xpose.msra.mxu0 0.0
    %273 = vmatprep.subr.mxu0 0.0
    %274 = vmatpush1.xpose.msra.mxu0 0.0
    %275 = vmatprep.subr.mxu0 0.0
    %276 = vmatpush1.xpose.msra.mxu0 0.0
    %277 = vmatprep.subr.mxu0 0.0
    %278 = vmatpush1.xpose.msra.mxu0 0.0
    %279 = vmatprep.mubr.f32.mxu0 0.0
    %280 = vmatmul.mubr.f32.gmra.mrb[0].mxu0 %v211
    %v281 = vpop.f32.mrb[0].mxu0
    %v282 = vadd.f32 0.0, %v281
    %v283 = vpop.f32.mrb[0].mxu0
    %284 = vdwg.mxu0
    %v285 = vmul.f32 %v282, 0.35355338
    %v286 = vlaneseq
    %v287 = vshrl.u32 %v286, 7
    %v288 = vsub.s32 0, %v287
    %v289 = vrot.slane %v114, %v288
    %v290 = vadd.f32 %v285, %v289
    %v291 = vsel %vm210, %v290, -inf
    %292 = vmax.xlane.f32.xlu0 %v291
    %v293 = vpop.xlane.xlu0 %292
    %v294 = vsub.f32 %v290, %v293
    %v295 = vmul.f32 %v294, 1.442695
    %v296 = vpow.pop %v295
    %v297 = vsel %vm210, %v296, 0.0
    %298 = vadd.xlane.f32.xlu0 %v297
    %v299 = vpop.xlane.xlu0 %298
    %v300 = vrcp.pop %v299
    %v301 = vmul.f32 %v296, %v300
    %302 = vrot.lane.b32.xlu0 %v199, 64
    %v303 = vpop.permute.xlu0 %302
    %v306 = vsel %vm210, %v301, 0
    %308 = vmatprep.subr.mxu0 0.0
    %309 = vmatpush1.msra.mxu0 %v303
    %310 = vmatprep.subr.mxu0 0.0
    %311 = vmatpush1.msra.mxu0 0.0
    %312 = vmatprep.subr.mxu0 0.0
    %313 = vmatpush1.msra.mxu0 0.0
    %314 = vmatprep.subr.mxu0 0.0
    %315 = vmatpush1.msra.mxu0 0.0
    %316 = vmatprep.subr.mxu0 0.0
    %317 = vmatpush1.msra.mxu0 0.0
    %318 = vmatprep.subr.mxu0 0.0
    %319 = vmatpush1.msra.mxu0 0.0
    %320 = vmatprep.subr.mxu0 0.0
    %321 = vmatpush1.msra.mxu0 0.0
    %322 = vmatprep.subr.mxu0 0.0
    %323 = vmatpush1.msra.mxu0 0.0
    %324 = vmatprep.subr.mxu0 0.0
    %325 = vmatpush1.msra.mxu0 0.0
    %326 = vmatprep.subr.mxu0 0.0
    %327 = vmatpush1.msra.mxu0 0.0
    %328 = vmatprep.subr.mxu0 0.0
    %329 = vmatpush1.msra.mxu0 0.0
    %330 = vmatprep.subr.mxu0 0.0
    %331 = vmatpush1.msra.mxu0 0.0
    %332 = vmatprep.subr.mxu0 0.0
    %333 = vmatpush1.msra.mxu0 0.0
    %334 = vmatprep.subr.mxu0 0.0
    %335 = vmatpush1.msra.mxu0 0.0
    %336 = vmatprep.subr.mxu0 0.0
    %337 = vmatpush1.msra.mxu0 0.0
    %338 = vmatprep.subr.mxu0 0.0
    %339 = vmatpush1.msra.mxu0 0.0
    %340 = vmatprep.subr.mxu0 0.0
    %341 = vmatpush1.msra.mxu0 0.0
    %342 = vmatprep.subr.mxu0 0.0
    %343 = vmatpush1.msra.mxu0 0.0
    %344 = vmatprep.subr.mxu0 0.0
    %345 = vmatpush1.msra.mxu0 0.0
    %346 = vmatprep.subr.mxu0 0.0
    %347 = vmatpush1.msra.mxu0 0.0
    %348 = vmatprep.subr.mxu0 0.0
    %349 = vmatpush1.msra.mxu0 0.0
    %350 = vmatprep.subr.mxu0 0.0
    %351 = vmatpush1.msra.mxu0 0.0
    %352 = vmatprep.subr.mxu0 0.0
    %353 = vmatpush1.msra.mxu0 0.0
    %354 = vmatprep.subr.mxu0 0.0
    %355 = vmatpush1.msra.mxu0 0.0
    %356 = vmatprep.subr.mxu0 0.0
    %357 = vmatpush1.msra.mxu0 0.0
    %358 = vmatprep.subr.mxu0 0.0
    %359 = vmatpush1.msra.mxu0 0.0
    %360 = vmatprep.subr.mxu0 0.0
    %361 = vmatpush1.msra.mxu0 0.0
    %362 = vmatprep.subr.mxu0 0.0
    %363 = vmatpush1.msra.mxu0 0.0
    %364 = vmatprep.subr.mxu0 0.0
    %365 = vmatpush1.msra.mxu0 0.0
    %366 = vmatprep.subr.mxu0 0.0
    %367 = vmatpush1.msra.mxu0 0.0
    %368 = vmatprep.subr.mxu0 0.0
    %369 = vmatpush1.msra.mxu0 0.0
    %370 = vmatprep.subr.mxu0 0.0
    %371 = vmatpush1.msra.mxu0 0.0
    %372 = vmatprep.mubr.f32.mxu0 0.0
    %373 = vmatmul.mubr.f32.gmra.mrb[0].mxu0 %v306
    %v374 = vpop.f32.mrb[0].mxu0
    %v375 = vadd.f32 0.0, %v374
    %v376 = vpop.f32.mrb[0].mxu0
    %377 = vdwg.mxu0
    %379 = vrot.lane.b32.xlu0 %v204, 96
    %v380 = vpop.permute.xlu0 %379
    %v381 = vsel %vm210, %v204, 0
    %v383 = vsel %vm210, %v380, 0
    %385 = vmatprep.subr.mxu0 0.0
    %386 = vmatpush1.xpose.msra.mxu0 %v383
    %387 = vmatprep.subr.mxu0 0.0
    %388 = vmatpush1.xpose.msra.mxu0 0.0
    %389 = vmatprep.subr.mxu0 0.0
    %390 = vmatpush1.xpose.msra.mxu0 0.0
    %391 = vmatprep.subr.mxu0 0.0
    %392 = vmatpush1.xpose.msra.mxu0 0.0
    %393 = vmatprep.subr.mxu0 0.0
    %394 = vmatpush1.xpose.msra.mxu0 0.0
    %395 = vmatprep.subr.mxu0 0.0
    %396 = vmatpush1.xpose.msra.mxu0 0.0
    %397 = vmatprep.subr.mxu0 0.0
    %398 = vmatpush1.xpose.msra.mxu0 0.0
    %399 = vmatprep.subr.mxu0 0.0
    %400 = vmatpush1.xpose.msra.mxu0 0.0
    %401 = vmatprep.subr.mxu0 0.0
    %402 = vmatpush1.xpose.msra.mxu0 0.0
    %403 = vmatprep.subr.mxu0 0.0
    %404 = vmatpush1.xpose.msra.mxu0 0.0
    %405 = vmatprep.subr.mxu0 0.0
    %406 = vmatpush1.xpose.msra.mxu0 0.0
    %407 = vmatprep.subr.mxu0 0.0
    %408 = vmatpush1.xpose.msra.mxu0 0.0
    %409 = vmatprep.subr.mxu0 0.0
    %410 = vmatpush1.xpose.msra.mxu0 0.0
    %411 = vmatprep.subr.mxu0 0.0
    %412 = vmatpush1.xpose.msra.mxu0 0.0
    %413 = vmatprep.subr.mxu0 0.0
    %414 = vmatpush1.xpose.msra.mxu0 0.0
    %415 = vmatprep.subr.mxu0 0.0
    %416 = vmatpush1.xpose.msra.mxu0 0.0
    %417 = vmatprep.subr.mxu0 0.0
    %418 = vmatpush1.xpose.msra.mxu0 0.0
    %419 = vmatprep.subr.mxu0 0.0
    %420 = vmatpush1.xpose.msra.mxu0 0.0
    %421 = vmatprep.subr.mxu0 0.0
    %422 = vmatpush1.xpose.msra.mxu0 0.0
    %423 = vmatprep.subr.mxu0 0.0
    %424 = vmatpush1.xpose.msra.mxu0 0.0
    %425 = vmatprep.subr.mxu0 0.0
    %426 = vmatpush1.xpose.msra.mxu0 0.0
    %427 = vmatprep.subr.mxu0 0.0
    %428 = vmatpush1.xpose.msra.mxu0 0.0
    %429 = vmatprep.subr.mxu0 0.0
    %430 = vmatpush1.xpose.msra.mxu0 0.0
    %431 = vmatprep.subr.mxu0 0.0
    %432 = vmatpush1.xpose.msra.mxu0 0.0
    %433 = vmatprep.subr.mxu0 0.0
    %434 = vmatpush1.xpose.msra.mxu0 0.0
    %435 = vmatprep.subr.mxu0 0.0
    %436 = vmatpush1.xpose.msra.mxu0 0.0
    %437 = vmatprep.subr.mxu0 0.0
    %438 = vmatpush1.xpose.msra.mxu0 0.0
    %439 = vmatprep.subr.mxu0 0.0
    %440 = vmatpush1.xpose.msra.mxu0 0.0
    %441 = vmatprep.subr.mxu0 0.0
    %442 = vmatpush1.xpose.msra.mxu0 0.0
    %443 = vmatprep.subr.mxu0 0.0
    %444 = vmatpush1.xpose.msra.mxu0 0.0
    %445 = vmatprep.subr.mxu0 0.0
    %446 = vmatpush1.xpose.msra.mxu0 0.0
    %447 = vmatprep.subr.mxu0 0.0
    %448 = vmatpush1.xpose.msra.mxu0 0.0
    %449 = vmatprep.mubr.f32.mxu0 0.0
    %450 = vmatmul.mubr.f32.gmra.mrb[0].mxu0 %v381
    %v451 = vpop.f32.mrb[0].mxu0
    %v452 = vadd.f32 0.0, %v451
    %v453 = vpop.f32.mrb[0].mxu0
    %454 = vdwg.mxu0
    %v455 = vmul.f32 %v452, 0.35355338
    %v456 = vlaneseq
    %v457 = vshrl.u32 %v456, 7
    %v458 = vsub.s32 1, %v457
    %v459 = vrot.slane %v114, %v458
    %v460 = vadd.f32 %v455, %v459
    %v461 = vsel %vm210, %v460, -inf
    %462 = vmax.xlane.f32.xlu0 %v461
    %v463 = vpop.xlane.xlu0 %462
    %v464 = vsub.f32 %v460, %v463
    %v465 = vmul.f32 %v464, 1.442695
    %v466 = vpow.pop %v465
    %v467 = vsel %vm210, %v466, 0.0
    %468 = vadd.xlane.f32.xlu0 %v467
    %v469 = vpop.xlane.xlu0 %468
    %v470 = vrcp.pop %v469
    %v471 = vmul.f32 %v466, %v470
    %472 = vrot.lane.b32.xlu0 %v204, 64
    %v473 = vpop.permute.xlu0 %472
    %v476 = vsel %vm210, %v471, 0
    %478 = vmatprep.subr.mxu0 0.0
    %479 = vmatpush1.msra.mxu0 %v473
    %480 = vmatprep.subr.mxu0 0.0
    %481 = vmatpush1.msra.mxu0 0.0
    %482 = vmatprep.subr.mxu0 0.0
    %483 = vmatpush1.msra.mxu0 0.0
    %484 = vmatprep.subr.mxu0 0.0
    %485 = vmatpush1.msra.mxu0 0.0
    %486 = vmatprep.subr.mxu0 0.0
    %487 = vmatpush1.msra.mxu0 0.0
    %488 = vmatprep.subr.mxu0 0.0
    %489 = vmatpush1.msra.mxu0 0.0
    %490 = vmatprep.subr.mxu0 0.0
    %491 = vmatpush1.msra.mxu0 0.0
    %492 = vmatprep.subr.mxu0 0.0
    %493 = vmatpush1.msra.mxu0 0.0
    %494 = vmatprep.subr.mxu0 0.0
    %495 = vmatpush1.msra.mxu0 0.0
    %496 = vmatprep.subr.mxu0 0.0
    %497 = vmatpush1.msra.mxu0 0.0
    %498 = vmatprep.subr.mxu0 0.0
    %499 = vmatpush1.msra.mxu0 0.0
    %500 = vmatprep.subr.mxu0 0.0
    %501 = vmatpush1.msra.mxu0 0.0
    %502 = vmatprep.subr.mxu0 0.0
    %503 = vmatpush1.msra.mxu0 0.0
    %504 = vmatprep.subr.mxu0 0.0
    %505 = vmatpush1.msra.mxu0 0.0
    %506 = vmatprep.subr.mxu0 0.0
    %507 = vmatpush1.msra.mxu0 0.0
    %508 = vmatprep.subr.mxu0 0.0
    %509 = vmatpush1.msra.mxu0 0.0
    %510 = vmatprep.subr.mxu0 0.0
    %511 = vmatpush1.msra.mxu0 0.0
    %512 = vmatprep.subr.mxu0 0.0
    %513 = vmatpush1.msra.mxu0 0.0
    %514 = vmatprep.subr.mxu0 0.0
    %515 = vmatpush1.msra.mxu0 0.0
    %516 = vmatprep.subr.mxu0 0.0
    %517 = vmatpush1.msra.mxu0 0.0
    %518 = vmatprep.subr.mxu0 0.0
    %519 = vmatpush1.msra.mxu0 0.0
    %520 = vmatprep.subr.mxu0 0.0
    %521 = vmatpush1.msra.mxu0 0.0
    %522 = vmatprep.subr.mxu0 0.0
    %523 = vmatpush1.msra.mxu0 0.0
    %524 = vmatprep.subr.mxu0 0.0
    %525 = vmatpush1.msra.mxu0 0.0
    %526 = vmatprep.subr.mxu0 0.0
    %527 = vmatpush1.msra.mxu0 0.0
    %528 = vmatprep.subr.mxu0 0.0
    %529 = vmatpush1.msra.mxu0 0.0
    %530 = vmatprep.subr.mxu0 0.0
    %531 = vmatpush1.msra.mxu0 0.0
    %532 = vmatprep.subr.mxu0 0.0
    %533 = vmatpush1.msra.mxu0 0.0
    %534 = vmatprep.subr.mxu0 0.0
    %535 = vmatpush1.msra.mxu0 0.0
    %536 = vmatprep.subr.mxu0 0.0
    %537 = vmatpush1.msra.mxu0 0.0
    %538 = vmatprep.subr.mxu0 0.0
    %539 = vmatpush1.msra.mxu0 0.0
    %540 = vmatprep.subr.mxu0 0.0
    %541 = vmatpush1.msra.mxu0 0.0
    %542 = vmatprep.mubr.f32.mxu0 0.0
    %543 = vmatmul.mubr.f32.gmra.mrb[0].mxu0 %v476
    %v544 = vpop.f32.mrb[0].mxu0
    %v545 = vadd.f32 0.0, %v544
    %v546 = vpop.f32.mrb[0].mxu0
    %547 = vdwg.mxu0
    %548 = vrot.lane.b32.xlu0 %v199, 120
    %v549 = vpop.permute.xlu0 %548
    %550 = vrot.lane.b32.xlu0 %v199, 88
    %v551 = vpop.permute.xlu0 %550
    %v552 = vsel %vm210, %v549, 0
    %v554 = vsel %vm210, %v551, 0
    %556 = vmatprep.subr.mxu0 0.0
    %557 = vmatpush1.xpose.msra.mxu0 %v554
    %558 = vmatprep.subr.mxu0 0.0
    %559 = vmatpush1.xpose.msra.mxu0 0.0
    %560 = vmatprep.subr.mxu0 0.0
    %561 = vmatpush1.xpose.msra.mxu0 0.0
    %562 = vmatprep.subr.mxu0 0.0
    %563 = vmatpush1.xpose.msra.mxu0 0.0
    %564 = vmatprep.subr.mxu0 0.0
    %565 = vmatpush1.xpose.msra.mxu0 0.0
    %566 = vmatprep.subr.mxu0 0.0
    %567 = vmatpush1.xpose.msra.mxu0 0.0
    %568 = vmatprep.subr.mxu0 0.0
    %569 = vmatpush1.xpose.msra.mxu0 0.0
    %570 = vmatprep.subr.mxu0 0.0
    %571 = vmatpush1.xpose.msra.mxu0 0.0
    %572 = vmatprep.subr.mxu0 0.0
    %573 = vmatpush1.xpose.msra.mxu0 0.0
    %574 = vmatprep.subr.mxu0 0.0
    %575 = vmatpush1.xpose.msra.mxu0 0.0
    %576 = vmatprep.subr.mxu0 0.0
    %577 = vmatpush1.xpose.msra.mxu0 0.0
    %578 = vmatprep.subr.mxu0 0.0
    %579 = vmatpush1.xpose.msra.mxu0 0.0
    %580 = vmatprep.subr.mxu0 0.0
    %581 = vmatpush1.xpose.msra.mxu0 0.0
    %582 = vmatprep.subr.mxu0 0.0
    %583 = vmatpush1.xpose.msra.mxu0 0.0
    %584 = vmatprep.subr.mxu0 0.0
    %585 = vmatpush1.xpose.msra.mxu0 0.0
    %586 = vmatprep.subr.mxu0 0.0
    %587 = vmatpush1.xpose.msra.mxu0 0.0
    %588 = vmatprep.subr.mxu0 0.0
    %589 = vmatpush1.xpose.msra.mxu0 0.0
    %590 = vmatprep.subr.mxu0 0.0
    %591 = vmatpush1.xpose.msra.mxu0 0.0
    %592 = vmatprep.subr.mxu0 0.0
    %593 = vmatpush1.xpose.msra.mxu0 0.0
    %594 = vmatprep.subr.mxu0 0.0
    %595 = vmatpush1.xpose.msra.mxu0 0.0
    %596 = vmatprep.subr.mxu0 0.0
    %597 = vmatpush1.xpose.msra.mxu0 0.0
    %598 = vmatprep.subr.mxu0 0.0
    %599 = vmatpush1.xpose.msra.mxu0 0.0
    %600 = vmatprep.subr.mxu0 0.0
    %601 = vmatpush1.xpose.msra.mxu0 0.0
    %602 = vmatprep.subr.mxu0 0.0
    %603 = vmatpush1.xpose.msra.mxu0 0.0
    %604 = vmatprep.subr.mxu0 0.0
    %605 = vmatpush1.xpose.msra.mxu0 0.0
    %606 = vmatprep.subr.mxu0 0.0
    %607 = vmatpush1.xpose.msra.mxu0 0.0
    %608 = vmatprep.subr.mxu0 0.0
    %609 = vmatpush1.xpose.msra.mxu0 0.0
    %610 = vmatprep.subr.mxu0 0.0
    %611 = vmatpush1.xpose.msra.mxu0 0.0
    %612 = vmatprep.subr.mxu0 0.0
    %613 = vmatpush1.xpose.msra.mxu0 0.0
    %614 = vmatprep.subr.mxu0 0.0
    %615 = vmatpush1.xpose.msra.mxu0 0.0
    %616 = vmatprep.subr.mxu0 0.0
    %617 = vmatpush1.xpose.msra.mxu0 0.0
    %618 = vmatprep.subr.mxu0 0.0
    %619 = vmatpush1.xpose.msra.mxu0 0.0
    %620 = vmatprep.mubr.f32.mxu0 0.0
    %621 = vmatmul.mubr.f32.gmra.mrb[0].mxu0 %v552
    %v622 = vpop.f32.mrb[0].mxu0
    %v623 = vadd.f32 0.0, %v622
    %v624 = vpop.f32.mrb[0].mxu0
    %625 = vdwg.mxu0
    %v626 = vmul.f32 %v623, 0.35355338
    %v627 = vadd.f32 %v626, %v289
    %v628 = vsel %vm210, %v627, -inf
    %629 = vmax.xlane.f32.xlu0 %v628
    %v630 = vpop.xlane.xlu0 %629
    %v631 = vsub.f32 %v627, %v630
    %v632 = vmul.f32 %v631, 1.442695
    %v633 = vpow.pop %v632
    %v634 = vsel %vm210, %v633, 0.0
    %635 = vadd.xlane.f32.xlu0 %v634
    %v636 = vpop.xlane.xlu0 %635
    %v637 = vrcp.pop %v636
    %v638 = vmul.f32 %v633, %v637
    %639 = vrot.lane.b32.xlu0 %v199, 56
    %v640 = vpop.permute.xlu0 %639
    %v643 = vsel %vm210, %v638, 0
    %645 = vmatprep.subr.mxu0 0.0
    %646 = vmatpush1.msra.mxu0 %v640
    %647 = vmatprep.subr.mxu0 0.0
    %648 = vmatpush1.msra.mxu0 0.0
    %649 = vmatprep.subr.mxu0 0.0
    %650 = vmatpush1.msra.mxu0 0.0
    %651 = vmatprep.subr.mxu0 0.0
    %652 = vmatpush1.msra.mxu0 0.0
    %653 = vmatprep.subr.mxu0 0.0
    %654 = vmatpush1.msra.mxu0 0.0
    %655 = vmatprep.subr.mxu0 0.0
    %656 = vmatpush1.msra.mxu0 0.0
    %657 = vmatprep.subr.mxu0 0.0
    %658 = vmatpush1.msra.mxu0 0.0
    %659 = vmatprep.subr.mxu0 0.0
    %660 = vmatpush1.msra.mxu0 0.0
    %661 = vmatprep.subr.mxu0 0.0
    %662 = vmatpush1.msra.mxu0 0.0
    %663 = vmatprep.subr.mxu0 0.0
    %664 = vmatpush1.msra.mxu0 0.0
    %665 = vmatprep.subr.mxu0 0.0
    %666 = vmatpush1.msra.mxu0 0.0
    %667 = vmatprep.subr.mxu0 0.0
    %668 = vmatpush1.msra.mxu0 0.0
    %669 = vmatprep.subr.mxu0 0.0
    %670 = vmatpush1.msra.mxu0 0.0
    %671 = vmatprep.subr.mxu0 0.0
    %672 = vmatpush1.msra.mxu0 0.0
    %673 = vmatprep.subr.mxu0 0.0
    %674 = vmatpush1.msra.mxu0 0.0
    %675 = vmatprep.subr.mxu0 0.0
    %676 = vmatpush1.msra.mxu0 0.0
    %677 = vmatprep.subr.mxu0 0.0
    %678 = vmatpush1.msra.mxu0 0.0
    %679 = vmatprep.subr.mxu0 0.0
    %680 = vmatpush1.msra.mxu0 0.0
    %681 = vmatprep.subr.mxu0 0.0
    %682 = vmatpush1.msra.mxu0 0.0
    %683 = vmatprep.subr.mxu0 0.0
    %684 = vmatpush1.msra.mxu0 0.0
    %685 = vmatprep.subr.mxu0 0.0
    %686 = vmatpush1.msra.mxu0 0.0
    %687 = vmatprep.subr.mxu0 0.0
    %688 = vmatpush1.msra.mxu0 0.0
    %689 = vmatprep.subr.mxu0 0.0
    %690 = vmatpush1.msra.mxu0 0.0
    %691 = vmatprep.subr.mxu0 0.0
    %692 = vmatpush1.msra.mxu0 0.0
    %693 = vmatprep.subr.mxu0 0.0
    %694 = vmatpush1.msra.mxu0 0.0
    %695 = vmatprep.subr.mxu0 0.0
    %696 = vmatpush1.msra.mxu0 0.0
    %697 = vmatprep.subr.mxu0 0.0
    %698 = vmatpush1.msra.mxu0 0.0
    %699 = vmatprep.subr.mxu0 0.0
    %700 = vmatpush1.msra.mxu0 0.0
    %701 = vmatprep.subr.mxu0 0.0
    %702 = vmatpush1.msra.mxu0 0.0
    %703 = vmatprep.subr.mxu0 0.0
    %704 = vmatpush1.msra.mxu0 0.0
    %705 = vmatprep.subr.mxu0 0.0
    %706 = vmatpush1.msra.mxu0 0.0
    %707 = vmatprep.subr.mxu0 0.0
    %708 = vmatpush1.msra.mxu0 0.0
    %709 = vmatprep.mubr.f32.mxu0 0.0
    %710 = vmatmul.mubr.f32.gmra.mrb[0].mxu0 %v643
    %v711 = vpop.f32.mrb[0].mxu0
    %v712 = vadd.f32 0.0, %v711
    %v713 = vpop.f32.mrb[0].mxu0
    %714 = vdwg.mxu0
    %715 = vrot.lane.b32.xlu0 %v204, 120
    %v716 = vpop.permute.xlu0 %715
    %717 = vrot.lane.b32.xlu0 %v204, 88
    %v718 = vpop.permute.xlu0 %717
    %v719 = vsel %vm210, %v716, 0
    %v721 = vsel %vm210, %v718, 0
    %723 = vmatprep.subr.mxu0 0.0
    %724 = vmatpush1.xpose.msra.mxu0 %v721
    %725 = vmatprep.subr.mxu0 0.0
    %726 = vmatpush1.xpose.msra.mxu0 0.0
    %727 = vmatprep.subr.mxu0 0.0
    %728 = vmatpush1.xpose.msra.mxu0 0.0
    %729 = vmatprep.subr.mxu0 0.0
    %730 = vmatpush1.xpose.msra.mxu0 0.0
    %731 = vmatprep.subr.mxu0 0.0
    %732 = vmatpush1.xpose.msra.mxu0 0.0
    %733 = vmatprep.subr.mxu0 0.0
    %734 = vmatpush1.xpose.msra.mxu0 0.0
    %735 = vmatprep.subr.mxu0 0.0
    %736 = vmatpush1.xpose.msra.mxu0 0.0
    %737 = vmatprep.subr.mxu0 0.0
    %738 = vmatpush1.xpose.msra.mxu0 0.0
    %739 = vmatprep.subr.mxu0 0.0
    %740 = vmatpush1.xpose.msra.mxu0 0.0
    %741 = vmatprep.subr.mxu0 0.0
    %742 = vmatpush1.xpose.msra.mxu0 0.0
    %743 = vmatprep.subr.mxu0 0.0
    %744 = vmatpush1.xpose.msra.mxu0 0.0
    %745 = vmatprep.subr.mxu0 0.0
    %746 = vmatpush1.xpose.msra.mxu0 0.0
    %747 = vmatprep.subr.mxu0 0.0
    %748 = vmatpush1.xpose.msra.mxu0 0.0
    %749 = vmatprep.subr.mxu0 0.0
    %750 = vmatpush1.xpose.msra.mxu0 0.0
    %751 = vmatprep.subr.mxu0 0.0
    %752 = vmatpush1.xpose.msra.mxu0 0.0
    %753 = vmatprep.subr.mxu0 0.0
    %754 = vmatpush1.xpose.msra.mxu0 0.0
    %755 = vmatprep.subr.mxu0 0.0
    %756 = vmatpush1.xpose.msra.mxu0 0.0
    %757 = vmatprep.subr.mxu0 0.0
    %758 = vmatpush1.xpose.msra.mxu0 0.0
    %759 = vmatprep.subr.mxu0 0.0
    %760 = vmatpush1.xpose.msra.mxu0 0.0
    %761 = vmatprep.subr.mxu0 0.0
    %762 = vmatpush1.xpose.msra.mxu0 0.0
    %763 = vmatprep.subr.mxu0 0.0
    %764 = vmatpush1.xpose.msra.mxu0 0.0
    %765 = vmatprep.subr.mxu0 0.0
    %766 = vmatpush1.xpose.msra.mxu0 0.0
    %767 = vmatprep.subr.mxu0 0.0
    %768 = vmatpush1.xpose.msra.mxu0 0.0
    %769 = vmatprep.subr.mxu0 0.0
    %770 = vmatpush1.xpose.msra.mxu0 0.0
    %771 = vmatprep.subr.mxu0 0.0
    %772 = vmatpush1.xpose.msra.mxu0 0.0
    %773 = vmatprep.subr.mxu0 0.0
    %774 = vmatpush1.xpose.msra.mxu0 0.0
    %775 = vmatprep.subr.mxu0 0.0
    %776 = vmatpush1.xpose.msra.mxu0 0.0
    %777 = vmatprep.subr.mxu0 0.0
    %778 = vmatpush1.xpose.msra.mxu0 0.0
    %779 = vmatprep.subr.mxu0 0.0
    %780 = vmatpush1.xpose.msra.mxu0 0.0
    %781 = vmatprep.subr.mxu0 0.0
    %782 = vmatpush1.xpose.msra.mxu0 0.0
    %783 = vmatprep.subr.mxu0 0.0
    %784 = vmatpush1.xpose.msra.mxu0 0.0
    %785 = vmatprep.subr.mxu0 0.0
    %786 = vmatpush1.xpose.msra.mxu0 0.0
    %787 = vmatprep.mubr.f32.mxu0 0.0
    %788 = vmatmul.mubr.f32.gmra.mrb[0].mxu0 %v719
    %v789 = vpop.f32.mrb[0].mxu0
    %v790 = vadd.f32 0.0, %v789
    %v791 = vpop.f32.mrb[0].mxu0
    %792 = vdwg.mxu0
    %v793 = vmul.f32 %v790, 0.35355338
    %v794 = vadd.f32 %v793, %v459
    %v795 = vsel %vm210, %v794, -inf
    %796 = vmax.xlane.f32.xlu0 %v795
    %v797 = vpop.xlane.xlu0 %796
    %v798 = vsub.f32 %v794, %v797
    %v799 = vmul.f32 %v798, 1.442695
    %v800 = vpow.pop %v799
    %v801 = vsel %vm210, %v800, 0.0
    %802 = vadd.xlane.f32.xlu0 %v801
    %v803 = vpop.xlane.xlu0 %802
    %v804 = vrcp.pop %v803
    %v805 = vmul.f32 %v800, %v804
    %806 = vrot.lane.b32.xlu0 %v204, 56
    %v807 = vpop.permute.xlu0 %806
    %v810 = vsel %vm210, %v805, 0
    %812 = vmatprep.subr.mxu0 0.0
    %813 = vmatpush1.msra.mxu0 %v807
    %814 = vmatprep.subr.mxu0 0.0
    %815 = vmatpush1.msra.mxu0 0.0
    %816 = vmatprep.subr.mxu0 0.0
    %817 = vmatpush1.msra.mxu0 0.0
    %818 = vmatprep.subr.mxu0 0.0
    %819 = vmatpush1.msra.mxu0 0.0
    %820 = vmatprep.subr.mxu0 0.0
    %821 = vmatpush1.msra.mxu0 0.0
    %822 = vmatprep.subr.mxu0 0.0
    %823 = vmatpush1.msra.mxu0 0.0
    %824 = vmatprep.subr.mxu0 0.0
    %825 = vmatpush1.msra.mxu0 0.0
    %826 = vmatprep.subr.mxu0 0.0
    %827 = vmatpush1.msra.mxu0 0.0
    %828 = vmatprep.subr.mxu0 0.0
    %829 = vmatpush1.msra.mxu0 0.0
    %830 = vmatprep.subr.mxu0 0.0
    %831 = vmatpush1.msra.mxu0 0.0
    %832 = vmatprep.subr.mxu0 0.0
    %833 = vmatpush1.msra.mxu0 0.0
    %834 = vmatprep.subr.mxu0 0.0
    %835 = vmatpush1.msra.mxu0 0.0
    %836 = vmatprep.subr.mxu0 0.0
    %837 = vmatpush1.msra.mxu0 0.0
    %838 = vmatprep.subr.mxu0 0.0
    %839 = vmatpush1.msra.mxu0 0.0
    %840 = vmatprep.subr.mxu0 0.0
    %841 = vmatpush1.msra.mxu0 0.0
    %842 = vmatprep.subr.mxu0 0.0
    %843 = vmatpush1.msra.mxu0 0.0
    %844 = vmatprep.subr.mxu0 0.0
    %845 = vmatpush1.msra.mxu0 0.0
    %846 = vmatprep.subr.mxu0 0.0
    %847 = vmatpush1.msra.mxu0 0.0
    %848 = vmatprep.subr.mxu0 0.0
    %849 = vmatpush1.msra.mxu0 0.0
    %850 = vmatprep.subr.mxu0 0.0
    %851 = vmatpush1.msra.mxu0 0.0
    %852 = vmatprep.subr.mxu0 0.0
    %853 = vmatpush1.msra.mxu0 0.0
    %854 = vmatprep.subr.mxu0 0.0
    %855 = vmatpush1.msra.mxu0 0.0
    %856 = vmatprep.subr.mxu0 0.0
    %857 = vmatpush1.msra.mxu0 0.0
    %858 = vmatprep.subr.mxu0 0.0
    %859 = vmatpush1.msra.mxu0 0.0
    %860 = vmatprep.subr.mxu0 0.0
    %861 = vmatpush1.msra.mxu0 0.0
    %862 = vmatprep.subr.mxu0 0.0
    %863 = vmatpush1.msra.mxu0 0.0
    %864 = vmatprep.subr.mxu0 0.0
    %865 = vmatpush1.msra.mxu0 0.0
    %866 = vmatprep.subr.mxu0 0.0
    %867 = vmatpush1.msra.mxu0 0.0
    %868 = vmatprep.subr.mxu0 0.0
    %869 = vmatpush1.msra.mxu0 0.0
    %870 = vmatprep.subr.mxu0 0.0
    %871 = vmatpush1.msra.mxu0 0.0
    %872 = vmatprep.subr.mxu0 0.0
    %873 = vmatpush1.msra.mxu0 0.0
    %874 = vmatprep.subr.mxu0 0.0
    %875 = vmatpush1.msra.mxu0 0.0
    %876 = vmatprep.mubr.f32.mxu0 0.0
    %877 = vmatmul.mubr.f32.gmra.mrb[0].mxu0 %v810
    %v878 = vpop.f32.mrb[0].mxu0
    %v879 = vadd.f32 0.0, %v878
    %v880 = vpop.f32.mrb[0].mxu0
    %881 = vdwg.mxu0
    %882 = vrot.lane.b32.xlu0 %v199, 112
    %v883 = vpop.permute.xlu0 %882
    %884 = vrot.lane.b32.xlu0 %v199, 80
    %v885 = vpop.permute.xlu0 %884
    %v886 = vsel %vm210, %v883, 0
    %v888 = vsel %vm210, %v885, 0
    %890 = vmatprep.subr.mxu0 0.0
    %891 = vmatpush1.xpose.msra.mxu0 %v888
    %892 = vmatprep.subr.mxu0 0.0
    %893 = vmatpush1.xpose.msra.mxu0 0.0
    %894 = vmatprep.subr.mxu0 0.0
    %895 = vmatpush1.xpose.msra.mxu0 0.0
    %896 = vmatprep.subr.mxu0 0.0
    %897 = vmatpush1.xpose.msra.mxu0 0.0
    %898 = vmatprep.subr.mxu0 0.0
    %899 = vmatpush1.xpose.msra.mxu0 0.0
    %900 = vmatprep.subr.mxu0 0.0
    %901 = vmatpush1.xpose.msra.mxu0 0.0
    %902 = vmatprep.subr.mxu0 0.0
    %903 = vmatpush1.xpose.msra.mxu0 0.0
    %904 = vmatprep.subr.mxu0 0.0
    %905 = vmatpush1.xpose.msra.mxu0 0.0
    %906 = vmatprep.subr.mxu0 0.0
    %907 = vmatpush1.xpose.msra.mxu0 0.0
    %908 = vmatprep.subr.mxu0 0.0
    %909 = vmatpush1.xpose.msra.mxu0 0.0
    %910 = vmatprep.subr.mxu0 0.0
    %911 = vmatpush1.xpose.msra.mxu0 0.0
    %912 = vmatprep.subr.mxu0 0.0
    %913 = vmatpush1.xpose.msra.mxu0 0.0
    %914 = vmatprep.subr.mxu0 0.0
    %915 = vmatpush1.xpose.msra.mxu0 0.0
    %916 = vmatprep.subr.mxu0 0.0
    %917 = vmatpush1.xpose.msra.mxu0 0.0
    %918 = vmatprep.subr.mxu0 0.0
    %919 = vmatpush1.xpose.msra.mxu0 0.0
    %920 = vmatprep.subr.mxu0 0.0
    %921 = vmatpush1.xpose.msra.mxu0 0.0
    %922 = vmatprep.subr.mxu0 0.0
    %923 = vmatpush1.xpose.msra.mxu0 0.0
    %924 = vmatprep.subr.mxu0 0.0
    %925 = vmatpush1.xpose.msra.mxu0 0.0
    %926 = vmatprep.subr.mxu0 0.0
    %927 = vmatpush1.xpose.msra.mxu0 0.0
    %928 = vmatprep.subr.mxu0 0.0
    %929 = vmatpush1.xpose.msra.mxu0 0.0
    %930 = vmatprep.subr.mxu0 0.0
    %931 = vmatpush1.xpose.msra.mxu0 0.0
    %932 = vmatprep.subr.mxu0 0.0
    %933 = vmatpush1.xpose.msra.mxu0 0.0
    %934 = vmatprep.subr.mxu0 0.0
    %935 = vmatpush1.xpose.msra.mxu0 0.0
    %936 = vmatprep.subr.mxu0 0.0
    %937 = vmatpush1.xpose.msra.mxu0 0.0
    %938 = vmatprep.subr.mxu0 0.0
    %939 = vmatpush1.xpose.msra.mxu0 0.0
    %940 = vmatprep.subr.mxu0 0.0
    %941 = vmatpush1.xpose.msra.mxu0 0.0
    %942 = vmatprep.subr.mxu0 0.0
    %943 = vmatpush1.xpose.msra.mxu0 0.0
    %944 = vmatprep.subr.mxu0 0.0
    %945 = vmatpush1.xpose.msra.mxu0 0.0
    %946 = vmatprep.subr.mxu0 0.0
    %947 = vmatpush1.xpose.msra.mxu0 0.0
    %948 = vmatprep.subr.mxu0 0.0
    %949 = vmatpush1.xpose.msra.mxu0 0.0
    %950 = vmatprep.subr.mxu0 0.0
    %951 = vmatpush1.xpose.msra.mxu0 0.0
    %952 = vmatprep.subr.mxu0 0.0
    %953 = vmatpush1.xpose.msra.mxu0 0.0
    %954 = vmatprep.mubr.f32.mxu0 0.0
    %955 = vmatmul.mubr.f32.gmra.mrb[0].mxu0 %v886
    %v956 = vpop.f32.mrb[0].mxu0
    %v957 = vadd.f32 0.0, %v956
    %v958 = vpop.f32.mrb[0].mxu0
    %959 = vdwg.mxu0
    %v960 = vmul.f32 %v957, 0.35355338
    %v961 = vadd.f32 %v960, %v289
    %v962 = vsel %vm210, %v961, -inf
    %963 = vmax.xlane.f32.xlu0 %v962
    %v964 = vpop.xlane.xlu0 %963
    %v965 = vsub.f32 %v961, %v964
    %v966 = vmul.f32 %v965, 1.442695
    %v967 = vpow.pop %v966
    %v968 = vsel %vm210, %v967, 0.0
    %969 = vadd.xlane.f32.xlu0 %v968
    %v970 = vpop.xlane.xlu0 %969
    %v971 = vrcp.pop %v970
    %v972 = vmul.f32 %v967, %v971
    %973 = vrot.lane.b32.xlu0 %v199, 48
    %v974 = vpop.permute.xlu0 %973
    %v977 = vsel %vm210, %v972, 0
    %979 = vmatprep.subr.mxu0 0.0
    %980 = vmatpush1.msra.mxu0 %v974
    %981 = vmatprep.subr.mxu0 0.0
    %982 = vmatpush1.msra.mxu0 0.0
    %983 = vmatprep.subr.mxu0 0.0
    %984 = vmatpush1.msra.mxu0 0.0
    %985 = vmatprep.subr.mxu0 0.0
    %986 = vmatpush1.msra.mxu0 0.0
    %987 = vmatprep.subr.mxu0 0.0
    %988 = vmatpush1.msra.mxu0 0.0
    %989 = vmatprep.subr.mxu0 0.0
    %990 = vmatpush1.msra.mxu0 0.0
    %991 = vmatprep.subr.mxu0 0.0
    %992 = vmatpush1.msra.mxu0 0.0
    %993 = vmatprep.subr.mxu0 0.0
    %994 = vmatpush1.msra.mxu0 0.0
    %995 = vmatprep.subr.mxu0 0.0
    %996 = vmatpush1.msra.mxu0 0.0
    %997 = vmatprep.subr.mxu0 0.0
    %998 = vmatpush1.msra.mxu0 0.0
    %999 = vmatprep.subr.mxu0 0.0
    %1000 = vmatpush1.msra.mxu0 0.0
    %1001 = vmatprep.subr.mxu0 0.0
    %1002 = vmatpush1.msra.mxu0 0.0
    %1003 = vmatprep.subr.mxu0 0.0
    %1004 = vmatpush1.msra.mxu0 0.0
    %1005 = vmatprep.subr.mxu0 0.0
    %1006 = vmatpush1.msra.mxu0 0.0
    %1007 = vmatprep.subr.mxu0 0.0
    %1008 = vmatpush1.msra.mxu0 0.0
    %1009 = vmatprep.subr.mxu0 0.0
    %1010 = vmatpush1.msra.mxu0 0.0
    %1011 = vmatprep.subr.mxu0 0.0
    %1012 = vmatpush1.msra.mxu0 0.0
    %1013 = vmatprep.subr.mxu0 0.0
    %1014 = vmatpush1.msra.mxu0 0.0
    %1015 = vmatprep.subr.mxu0 0.0
    %1016 = vmatpush1.msra.mxu0 0.0
    %1017 = vmatprep.subr.mxu0 0.0
    %1018 = vmatpush1.msra.mxu0 0.0
    %1019 = vmatprep.subr.mxu0 0.0
    %1020 = vmatpush1.msra.mxu0 0.0
    %1021 = vmatprep.subr.mxu0 0.0
    %1022 = vmatpush1.msra.mxu0 0.0
    %1023 = vmatprep.subr.mxu0 0.0
    %1024 = vmatpush1.msra.mxu0 0.0
    %1025 = vmatprep.subr.mxu0 0.0
    %1026 = vmatpush1.msra.mxu0 0.0
    %1027 = vmatprep.subr.mxu0 0.0
    %1028 = vmatpush1.msra.mxu0 0.0
    %1029 = vmatprep.subr.mxu0 0.0
    %1030 = vmatpush1.msra.mxu0 0.0
    %1031 = vmatprep.subr.mxu0 0.0
    %1032 = vmatpush1.msra.mxu0 0.0
    %1033 = vmatprep.subr.mxu0 0.0
    %1034 = vmatpush1.msra.mxu0 0.0
    %1035 = vmatprep.subr.mxu0 0.0
    %1036 = vmatpush1.msra.mxu0 0.0
    %1037 = vmatprep.subr.mxu0 0.0
    %1038 = vmatpush1.msra.mxu0 0.0
    %1039 = vmatprep.subr.mxu0 0.0
    %1040 = vmatpush1.msra.mxu0 0.0
    %1041 = vmatprep.subr.mxu0 0.0
    %1042 = vmatpush1.msra.mxu0 0.0
    %1043 = vmatprep.mubr.f32.mxu0 0.0
    %1044 = vmatmul.mubr.f32.gmra.mrb[0].mxu0 %v977
    %v1045 = vpop.f32.mrb[0].mxu0
    %v1046 = vadd.f32 0.0, %v1045
    %v1047 = vpop.f32.mrb[0].mxu0
    %1048 = vdwg.mxu0
    %1049 = vrot.lane.b32.xlu0 %v204, 112
    %v1050 = vpop.permute.xlu0 %1049
    %1051 = vrot.lane.b32.xlu0 %v204, 80
    %v1052 = vpop.permute.xlu0 %1051
    %v1053 = vsel %vm210, %v1050, 0
    %v1055 = vsel %vm210, %v1052, 0
    %1057 = vmatprep.subr.mxu0 0.0
    %1058 = vmatpush1.xpose.msra.mxu0 %v1055
    %1059 = vmatprep.subr.mxu0 0.0
    %1060 = vmatpush1.xpose.msra.mxu0 0.0
    %1061 = vmatprep.subr.mxu0 0.0
    %1062 = vmatpush1.xpose.msra.mxu0 0.0
    %1063 = vmatprep.subr.mxu0 0.0
    %1064 = vmatpush1.xpose.msra.mxu0 0.0
    %1065 = vmatprep.subr.mxu0 0.0
    %1066 = vmatpush1.xpose.msra.mxu0 0.0
    %1067 = vmatprep.subr.mxu0 0.0
    %1068 = vmatpush1.xpose.msra.mxu0 0.0
    %1069 = vmatprep.subr.mxu0 0.0
    %1070 = vmatpush1.xpose.msra.mxu0 0.0
    %1071 = vmatprep.subr.mxu0 0.0
    %1072 = vmatpush1.xpose.msra.mxu0 0.0
    %1073 = vmatprep.subr.mxu0 0.0
    %1074 = vmatpush1.xpose.msra.mxu0 0.0
    %1075 = vmatprep.subr.mxu0 0.0
    %1076 = vmatpush1.xpose.msra.mxu0 0.0
    %1077 = vmatprep.subr.mxu0 0.0
    %1078 = vmatpush1.xpose.msra.mxu0 0.0
    %1079 = vmatprep.subr.mxu0 0.0
    %1080 = vmatpush1.xpose.msra.mxu0 0.0
    %1081 = vmatprep.subr.mxu0 0.0
    %1082 = vmatpush1.xpose.msra.mxu0 0.0
    %1083 = vmatprep.subr.mxu0 0.0
    %1084 = vmatpush1.xpose.msra.mxu0 0.0
    %1085 = vmatprep.subr.mxu0 0.0
    %1086 = vmatpush1.xpose.msra.mxu0 0.0
    %1087 = vmatprep.subr.mxu0 0.0
    %1088 = vmatpush1.xpose.msra.mxu0 0.0
    %1089 = vmatprep.subr.mxu0 0.0
    %1090 = vmatpush1.xpose.msra.mxu0 0.0
    %1091 = vmatprep.subr.mxu0 0.0
    %1092 = vmatpush1.xpose.msra.mxu0 0.0
    %1093 = vmatprep.subr.mxu0 0.0
    %1094 = vmatpush1.xpose.msra.mxu0 0.0
    %1095 = vmatprep.subr.mxu0 0.0
    %1096 = vmatpush1.xpose.msra.mxu0 0.0
    %1097 = vmatprep.subr.mxu0 0.0
    %1098 = vmatpush1.xpose.msra.mxu0 0.0
    %1099 = vmatprep.subr.mxu0 0.0
    %1100 = vmatpush1.xpose.msra.mxu0 0.0
    %1101 = vmatprep.subr.mxu0 0.0
    %1102 = vmatpush1.xpose.msra.mxu0 0.0
    %1103 = vmatprep.subr.mxu0 0.0
    %1104 = vmatpush1.xpose.msra.mxu0 0.0
    %1105 = vmatprep.subr.mxu0 0.0
    %1106 = vmatpush1.xpose.msra.mxu0 0.0
    %1107 = vmatprep.subr.mxu0 0.0
    %1108 = vmatpush1.xpose.msra.mxu0 0.0
    %1109 = vmatprep.subr.mxu0 0.0
    %1110 = vmatpush1.xpose.msra.mxu0 0.0
    %1111 = vmatprep.subr.mxu0 0.0
    %1112 = vmatpush1.xpose.msra.mxu0 0.0
    %1113 = vmatprep.subr.mxu0 0.0
    %1114 = vmatpush1.xpose.msra.mxu0 0.0
    %1115 = vmatprep.subr.mxu0 0.0
    %1116 = vmatpush1.xpose.msra.mxu0 0.0
    %1117 = vmatprep.subr.mxu0 0.0
    %1118 = vmatpush1.xpose.msra.mxu0 0.0
    %1119 = vmatprep.subr.mxu0 0.0
    %1120 = vmatpush1.xpose.msra.mxu0 0.0
    %1121 = vmatprep.mubr.f32.mxu0 0.0
    %1122 = vmatmul.mubr.f32.gmra.mrb[0].mxu0 %v1053
    %v1123 = vpop.f32.mrb[0].mxu0
    %v1124 = vadd.f32 0.0, %v1123
    %v1125 = vpop.f32.mrb[0].mxu0
    %1126 = vdwg.mxu0
    %v1127 = vmul.f32 %v1124, 0.35355338
    %v1128 = vadd.f32 %v1127, %v459
    %v1129 = vsel %vm210, %v1128, -inf
    %1130 = vmax.xlane.f32.xlu0 %v1129
    %v1131 = vpop.xlane.xlu0 %1130
    %v1132 = vsub.f32 %v1128, %v1131
    %v1133 = vmul.f32 %v1132, 1.442695
    %v1134 = vpow.pop %v1133
    %v1135 = vsel %vm210, %v1134, 0.0
    %1136 = vadd.xlane.f32.xlu0 %v1135
    %v1137 = vpop.xlane.xlu0 %1136
    %v1138 = vrcp.pop %v1137
    %v1139 = vmul.f32 %v1134, %v1138
    %1140 = vrot.lane.b32.xlu0 %v204, 48
    %v1141 = vpop.permute.xlu0 %1140
    %v1144 = vsel %vm210, %v1139, 0
    %1146 = vmatprep.subr.mxu0 0.0
    %1147 = vmatpush1.msra.mxu0 %v1141
    %1148 = vmatprep.subr.mxu0 0.0
    %1149 = vmatpush1.msra.mxu0 0.0
    %1150 = vmatprep.subr.mxu0 0.0
    %1151 = vmatpush1.msra.mxu0 0.0
    %1152 = vmatprep.subr.mxu0 0.0
    %1153 = vmatpush1.msra.mxu0 0.0
    %1154 = vmatprep.subr.mxu0 0.0
    %1155 = vmatpush1.msra.mxu0 0.0
    %1156 = vmatprep.subr.mxu0 0.0
    %1157 = vmatpush1.msra.mxu0 0.0
    %1158 = vmatprep.subr.mxu0 0.0
    %1159 = vmatpush1.msra.mxu0 0.0
    %1160 = vmatprep.subr.mxu0 0.0
    %1161 = vmatpush1.msra.mxu0 0.0
    %1162 = vmatprep.subr.mxu0 0.0
    %1163 = vmatpush1.msra.mxu0 0.0
    %1164 = vmatprep.subr.mxu0 0.0
    %1165 = vmatpush1.msra.mxu0 0.0
    %1166 = vmatprep.subr.mxu0 0.0
    %1167 = vmatpush1.msra.mxu0 0.0
    %1168 = vmatprep.subr.mxu0 0.0
    %1169 = vmatpush1.msra.mxu0 0.0
    %1170 = vmatprep.subr.mxu0 0.0
    %1171 = vmatpush1.msra.mxu0 0.0
    %1172 = vmatprep.subr.mxu0 0.0
    %1173 = vmatpush1.msra.mxu0 0.0
    %1174 = vmatprep.subr.mxu0 0.0
    %1175 = vmatpush1.msra.mxu0 0.0
    %1176 = vmatprep.subr.mxu0 0.0
    %1177 = vmatpush1.msra.mxu0 0.0
    %1178 = vmatprep.subr.mxu0 0.0
    %1179 = vmatpush1.msra.mxu0 0.0
    %1180 = vmatprep.subr.mxu0 0.0
    %1181 = vmatpush1.msra.mxu0 0.0
    %1182 = vmatprep.subr.mxu0 0.0
    %1183 = vmatpush1.msra.mxu0 0.0
    %1184 = vmatprep.subr.mxu0 0.0
    %1185 = vmatpush1.msra.mxu0 0.0
    %1186 = vmatprep.subr.mxu0 0.0
    %1187 = vmatpush1.msra.mxu0 0.0
    %1188 = vmatprep.subr.mxu0 0.0
    %1189 = vmatpush1.msra.mxu0 0.0
    %1190 = vmatprep.subr.mxu0 0.0
    %1191 = vmatpush1.msra.mxu0 0.0
    %1192 = vmatprep.subr.mxu0 0.0
    %1193 = vmatpush1.msra.mxu0 0.0
    %1194 = vmatprep.subr.mxu0 0.0
    %1195 = vmatpush1.msra.mxu0 0.0
    %1196 = vmatprep.subr.mxu0 0.0
    %1197 = vmatpush1.msra.mxu0 0.0
    %1198 = vmatprep.subr.mxu0 0.0
    %1199 = vmatpush1.msra.mxu0 0.0
    %1200 = vmatprep.subr.mxu0 0.0
    %1201 = vmatpush1.msra.mxu0 0.0
    %1202 = vmatprep.subr.mxu0 0.0
    %1203 = vmatpush1.msra.mxu0 0.0
    %1204 = vmatprep.subr.mxu0 0.0
    %1205 = vmatpush1.msra.mxu0 0.0
    %1206 = vmatprep.subr.mxu0 0.0
    %1207 = vmatpush1.msra.mxu0 0.0
    %1208 = vmatprep.subr.mxu0 0.0
    %1209 = vmatpush1.msra.mxu0 0.0
    %1210 = vmatprep.mubr.f32.mxu0 0.0
    %1211 = vmatmul.mubr.f32.gmra.mrb[0].mxu0 %v1144
    %v1212 = vpop.f32.mrb[0].mxu0
    %v1213 = vadd.f32 0.0, %v1212
    %v1214 = vpop.f32.mrb[0].mxu0
    %1215 = vdwg.mxu0
    %1216 = vrot.lane.b32.xlu0 %v199, 104
    %v1217 = vpop.permute.xlu0 %1216
    %1218 = vrot.lane.b32.xlu0 %v199, 72
    %v1219 = vpop.permute.xlu0 %1218
    %v1220 = vsel %vm210, %v1217, 0
    %v1222 = vsel %vm210, %v1219, 0
    %1224 = vmatprep.subr.mxu0 0.0
    %1225 = vmatpush1.xpose.msra.mxu0 %v1222
    %1226 = vmatprep.subr.mxu0 0.0
    %1227 = vmatpush1.xpose.msra.mxu0 0.0
    %1228 = vmatprep.subr.mxu0 0.0
    %1229 = vmatpush1.xpose.msra.mxu0 0.0
    %1230 = vmatprep.subr.mxu0 0.0
    %1231 = vmatpush1.xpose.msra.mxu0 0.0
    %1232 = vmatprep.subr.mxu0 0.0
    %1233 = vmatpush1.xpose.msra.mxu0 0.0
    %1234 = vmatprep.subr.mxu0 0.0
    %1235 = vmatpush1.xpose.msra.mxu0 0.0
    %1236 = vmatprep.subr.mxu0 0.0
    %1237 = vmatpush1.xpose.msra.mxu0 0.0
    %1238 = vmatprep.subr.mxu0 0.0
    %1239 = vmatpush1.xpose.msra.mxu0 0.0
    %1240 = vmatprep.subr.mxu0 0.0
    %1241 = vmatpush1.xpose.msra.mxu0 0.0
    %1242 = vmatprep.subr.mxu0 0.0
    %1243 = vmatpush1.xpose.msra.mxu0 0.0
    %1244 = vmatprep.subr.mxu0 0.0
    %1245 = vmatpush1.xpose.msra.mxu0 0.0
    %1246 = vmatprep.subr.mxu0 0.0
    %1247 = vmatpush1.xpose.msra.mxu0 0.0
    %1248 = vmatprep.subr.mxu0 0.0
    %1249 = vmatpush1.xpose.msra.mxu0 0.0
    %1250 = vmatprep.subr.mxu0 0.0
    %1251 = vmatpush1.xpose.msra.mxu0 0.0
    %1252 = vmatprep.subr.mxu0 0.0
    %1253 = vmatpush1.xpose.msra.mxu0 0.0
    %1254 = vmatprep.subr.mxu0 0.0
    %1255 = vmatpush1.xpose.msra.mxu0 0.0
    %1256 = vmatprep.subr.mxu0 0.0
    %1257 = vmatpush1.xpose.msra.mxu0 0.0
    %1258 = vmatprep.subr.mxu0 0.0
    %1259 = vmatpush1.xpose.msra.mxu0 0.0
    %1260 = vmatprep.subr.mxu0 0.0
    %1261 = vmatpush1.xpose.msra.mxu0 0.0
    %1262 = vmatprep.subr.mxu0 0.0
    %1263 = vmatpush1.xpose.msra.mxu0 0.0
    %1264 = vmatprep.subr.mxu0 0.0
    %1265 = vmatpush1.xpose.msra.mxu0 0.0
    %1266 = vmatprep.subr.mxu0 0.0
    %1267 = vmatpush1.xpose.msra.mxu0 0.0
    %1268 = vmatprep.subr.mxu0 0.0
    %1269 = vmatpush1.xpose.msra.mxu0 0.0
    %1270 = vmatprep.subr.mxu0 0.0
    %1271 = vmatpush1.xpose.msra.mxu0 0.0
    %1272 = vmatprep.subr.mxu0 0.0
    %1273 = vmatpush1.xpose.msra.mxu0 0.0
    %1274 = vmatprep.subr.mxu0 0.0
    %1275 = vmatpush1.xpose.msra.mxu0 0.0
    %1276 = vmatprep.subr.mxu0 0.0
    %1277 = vmatpush1.xpose.msra.mxu0 0.0
    %1278 = vmatprep.subr.mxu0 0.0
    %1279 = vmatpush1.xpose.msra.mxu0 0.0
    %1280 = vmatprep.subr.mxu0 0.0
    %1281 = vmatpush1.xpose.msra.mxu0 0.0
    %1282 = vmatprep.subr.mxu0 0.0
    %1283 = vmatpush1.xpose.msra.mxu0 0.0
    %1284 = vmatprep.subr.mxu0 0.0
    %1285 = vmatpush1.xpose.msra.mxu0 0.0
    %1286 = vmatprep.subr.mxu0 0.0
    %1287 = vmatpush1.xpose.msra.mxu0 0.0
    %1288 = vmatprep.mubr.f32.mxu0 0.0
    %1289 = vmatmul.mubr.f32.gmra.mrb[0].mxu0 %v1220
    %v1290 = vpop.f32.mrb[0].mxu0
    %v1291 = vadd.f32 0.0, %v1290
    %v1292 = vpop.f32.mrb[0].mxu0
    %1293 = vdwg.mxu0
    %v1294 = vmul.f32 %v1291, 0.35355338
    %v1295 = vadd.f32 %v1294, %v289
    %v1296 = vsel %vm210, %v1295, -inf
    %1297 = vmax.xlane.f32.xlu0 %v1296
    %v1298 = vpop.xlane.xlu0 %1297
    %v1299 = vsub.f32 %v1295, %v1298
    %v1300 = vmul.f32 %v1299, 1.442695
    %v1301 = vpow.pop %v1300
    %v1302 = vsel %vm210, %v1301, 0.0
    %1303 = vadd.xlane.f32.xlu0 %v1302
    %v1304 = vpop.xlane.xlu0 %1303
    %v1305 = vrcp.pop %v1304
    %v1306 = vmul.f32 %v1301, %v1305
    %1307 = vrot.lane.b32.xlu0 %v199, 40
    %v1308 = vpop.permute.xlu0 %1307
    %v1311 = vsel %vm210, %v1306, 0
    %1313 = vmatprep.subr.mxu0 0.0
    %1314 = vmatpush1.msra.mxu0 %v1308
    %1315 = vmatprep.subr.mxu0 0.0
    %1316 = vmatpush1.msra.mxu0 0.0
    %1317 = vmatprep.subr.mxu0 0.0
    %1318 = vmatpush1.msra.mxu0 0.0
    %1319 = vmatprep.subr.mxu0 0.0
    %1320 = vmatpush1.msra.mxu0 0.0
    %1321 = vmatprep.subr.mxu0 0.0
    %1322 = vmatpush1.msra.mxu0 0.0
    %1323 = vmatprep.subr.mxu0 0.0
    %1324 = vmatpush1.msra.mxu0 0.0
    %1325 = vmatprep.subr.mxu0 0.0
    %1326 = vmatpush1.msra.mxu0 0.0
    %1327 = vmatprep.subr.mxu0 0.0
    %1328 = vmatpush1.msra.mxu0 0.0
    %1329 = vmatprep.subr.mxu0 0.0
    %1330 = vmatpush1.msra.mxu0 0.0
    %1331 = vmatprep.subr.mxu0 0.0
    %1332 = vmatpush1.msra.mxu0 0.0
    %1333 = vmatprep.subr.mxu0 0.0
    %1334 = vmatpush1.msra.mxu0 0.0
    %1335 = vmatprep.subr.mxu0 0.0
    %1336 = vmatpush1.msra.mxu0 0.0
    %1337 = vmatprep.subr.mxu0 0.0
    %1338 = vmatpush1.msra.mxu0 0.0
    %1339 = vmatprep.subr.mxu0 0.0
    %1340 = vmatpush1.msra.mxu0 0.0
    %1341 = vmatprep.subr.mxu0 0.0
    %1342 = vmatpush1.msra.mxu0 0.0
    %1343 = vmatprep.subr.mxu0 0.0
    %1344 = vmatpush1.msra.mxu0 0.0
    %1345 = vmatprep.subr.mxu0 0.0
    %1346 = vmatpush1.msra.mxu0 0.0
    %1347 = vmatprep.subr.mxu0 0.0
    %1348 = vmatpush1.msra.mxu0 0.0
    %1349 = vmatprep.subr.mxu0 0.0
    %1350 = vmatpush1.msra.mxu0 0.0
    %1351 = vmatprep.subr.mxu0 0.0
    %1352 = vmatpush1.msra.mxu0 0.0
    %1353 = vmatprep.subr.mxu0 0.0
    %1354 = vmatpush1.msra.mxu0 0.0
    %1355 = vmatprep.subr.mxu0 0.0
    %1356 = vmatpush1.msra.mxu0 0.0
    %1357 = vmatprep.subr.mxu0 0.0
    %1358 = vmatpush1.msra.mxu0 0.0
    %1359 = vmatprep.subr.mxu0 0.0
    %1360 = vmatpush1.msra.mxu0 0.0
    %1361 = vmatprep.subr.mxu0 0.0
    %1362 = vmatpush1.msra.mxu0 0.0
    %1363 = vmatprep.subr.mxu0 0.0
    %1364 = vmatpush1.msra.mxu0 0.0
    %1365 = vmatprep.subr.mxu0 0.0
    %1366 = vmatpush1.msra.mxu0 0.0
    %1367 = vmatprep.subr.mxu0 0.0
    %1368 = vmatpush1.msra.mxu0 0.0
    %1369 = vmatprep.subr.mxu0 0.0
    %1370 = vmatpush1.msra.mxu0 0.0
    %1371 = vmatprep.subr.mxu0 0.0
    %1372 = vmatpush1.msra.mxu0 0.0
    %1373 = vmatprep.subr.mxu0 0.0
    %1374 = vmatpush1.msra.mxu0 0.0
    %1375 = vmatprep.subr.mxu0 0.0
    %1376 = vmatpush1.msra.mxu0 0.0
    %1377 = vmatprep.mubr.f32.mxu0 0.0
    %1378 = vmatmul.mubr.f32.gmra.mrb[0].mxu0 %v1311
    %v1379 = vpop.f32.mrb[0].mxu0
    %v1380 = vadd.f32 0.0, %v1379
    %v1381 = vpop.f32.mrb[0].mxu0
    %1382 = vdwg.mxu0
    %1383 = vrot.lane.b32.xlu0 %v204, 104
    %v1384 = vpop.permute.xlu0 %1383
    %1385 = vrot.lane.b32.xlu0 %v204, 72
    %v1386 = vpop.permute.xlu0 %1385
    %v1387 = vsel %vm210, %v1384, 0
    %v1389 = vsel %vm210, %v1386, 0
    %1391 = vmatprep.subr.mxu0 0.0
    %1392 = vmatpush1.xpose.msra.mxu0 %v1389
    %1393 = vmatprep.subr.mxu0 0.0
    %1394 = vmatpush1.xpose.msra.mxu0 0.0
    %1395 = vmatprep.subr.mxu0 0.0
    %1396 = vmatpush1.xpose.msra.mxu0 0.0
    %1397 = vmatprep.subr.mxu0 0.0
    %1398 = vmatpush1.xpose.msra.mxu0 0.0
    %1399 = vmatprep.subr.mxu0 0.0
    %1400 = vmatpush1.xpose.msra.mxu0 0.0
    %1401 = vmatprep.subr.mxu0 0.0
    %1402 = vmatpush1.xpose.msra.mxu0 0.0
    %1403 = vmatprep.subr.mxu0 0.0
    %1404 = vmatpush1.xpose.msra.mxu0 0.0
    %1405 = vmatprep.subr.mxu0 0.0
    %1406 = vmatpush1.xpose.msra.mxu0 0.0
    %1407 = vmatprep.subr.mxu0 0.0
    %1408 = vmatpush1.xpose.msra.mxu0 0.0
    %1409 = vmatprep.subr.mxu0 0.0
    %1410 = vmatpush1.xpose.msra.mxu0 0.0
    %1411 = vmatprep.subr.mxu0 0.0
    %1412 = vmatpush1.xpose.msra.mxu0 0.0
    %1413 = vmatprep.subr.mxu0 0.0
    %1414 = vmatpush1.xpose.msra.mxu0 0.0
    %1415 = vmatprep.subr.mxu0 0.0
    %1416 = vmatpush1.xpose.msra.mxu0 0.0
    %1417 = vmatprep.subr.mxu0 0.0
    %1418 = vmatpush1.xpose.msra.mxu0 0.0
    %1419 = vmatprep.subr.mxu0 0.0
    %1420 = vmatpush1.xpose.msra.mxu0 0.0
    %1421 = vmatprep.subr.mxu0 0.0
    %1422 = vmatpush1.xpose.msra.mxu0 0.0
    %1423 = vmatprep.subr.mxu0 0.0
    %1424 = vmatpush1.xpose.msra.mxu0 0.0
    %1425 = vmatprep.subr.mxu0 0.0
    %1426 = vmatpush1.xpose.msra.mxu0 0.0
    %1427 = vmatprep.subr.mxu0 0.0
    %1428 = vmatpush1.xpose.msra.mxu0 0.0
    %1429 = vmatprep.subr.mxu0 0.0
    %1430 = vmatpush1.xpose.msra.mxu0 0.0
    %1431 = vmatprep.subr.mxu0 0.0
    %1432 = vmatpush1.xpose.msra.mxu0 0.0
    %1433 = vmatprep.subr.mxu0 0.0
    %1434 = vmatpush1.xpose.msra.mxu0 0.0
    %1435 = vmatprep.subr.mxu0 0.0
    %1436 = vmatpush1.xpose.msra.mxu0 0.0
    %1437 = vmatprep.subr.mxu0 0.0
    %1438 = vmatpush1.xpose.msra.mxu0 0.0
    %1439 = vmatprep.subr.mxu0 0.0
    %1440 = vmatpush1.xpose.msra.mxu0 0.0
    %1441 = vmatprep.subr.mxu0 0.0
    %1442 = vmatpush1.xpose.msra.mxu0 0.0
    %1443 = vmatprep.subr.mxu0 0.0
    %1444 = vmatpush1.xpose.msra.mxu0 0.0
    %1445 = vmatprep.subr.mxu0 0.0
    %1446 = vmatpush1.xpose.msra.mxu0 0.0
    %1447 = vmatprep.subr.mxu0 0.0
    %1448 = vmatpush1.xpose.msra.mxu0 0.0
    %1449 = vmatprep.subr.mxu0 0.0
    %1450 = vmatpush1.xpose.msra.mxu0 0.0
    %1451 = vmatprep.subr.mxu0 0.0
    %1452 = vmatpush1.xpose.msra.mxu0 0.0
    %1453 = vmatprep.subr.mxu0 0.0
    %1454 = vmatpush1.xpose.msra.mxu0 0.0
    %1455 = vmatprep.mubr.f32.mxu0 0.0
    %1456 = vmatmul.mubr.f32.gmra.mrb[0].mxu0 %v1387
    %v1457 = vpop.f32.mrb[0].mxu0
    %v1458 = vadd.f32 0.0, %v1457
    %v1459 = vpop.f32.mrb[0].mxu0
    %1460 = vdwg.mxu0
    %v1461 = vmul.f32 %v1458, 0.35355338
    %v1462 = vadd.f32 %v1461, %v459
    %v1463 = vsel %vm210, %v1462, -inf
    %1464 = vmax.xlane.f32.xlu0 %v1463
    %v1465 = vpop.xlane.xlu0 %1464
    %v1466 = vsub.f32 %v1462, %v1465
    %v1467 = vmul.f32 %v1466, 1.442695
    %v1468 = vpow.pop %v1467
    %v1469 = vsel %vm210, %v1468, 0.0
    %1470 = vadd.xlane.f32.xlu0 %v1469
    %v1471 = vpop.xlane.xlu0 %1470
    %v1472 = vrcp.pop %v1471
    %v1473 = vmul.f32 %v1468, %v1472
    %1474 = vrot.lane.b32.xlu0 %v204, 40
    %v1475 = vpop.permute.xlu0 %1474
    %v1478 = vsel %vm210, %v1473, 0
    %1480 = vmatprep.subr.mxu0 0.0
    %1481 = vmatpush1.msra.mxu0 %v1475
    %1482 = vmatprep.subr.mxu0 0.0
    %1483 = vmatpush1.msra.mxu0 0.0
    %1484 = vmatprep.subr.mxu0 0.0
    %1485 = vmatpush1.msra.mxu0 0.0
    %1486 = vmatprep.subr.mxu0 0.0
    %1487 = vmatpush1.msra.mxu0 0.0
    %1488 = vmatprep.subr.mxu0 0.0
    %1489 = vmatpush1.msra.mxu0 0.0
    %1490 = vmatprep.subr.mxu0 0.0
    %1491 = vmatpush1.msra.mxu0 0.0
    %1492 = vmatprep.subr.mxu0 0.0
    %1493 = vmatpush1.msra.mxu0 0.0
    %1494 = vmatprep.subr.mxu0 0.0
    %1495 = vmatpush1.msra.mxu0 0.0
    %1496 = vmatprep.subr.mxu0 0.0
    %1497 = vmatpush1.msra.mxu0 0.0
    %1498 = vmatprep.subr.mxu0 0.0
    %1499 = vmatpush1.msra.mxu0 0.0
    %1500 = vmatprep.subr.mxu0 0.0
    %1501 = vmatpush1.msra.mxu0 0.0
    %1502 = vmatprep.subr.mxu0 0.0
    %1503 = vmatpush1.msra.mxu0 0.0
    %1504 = vmatprep.subr.mxu0 0.0
    %1505 = vmatpush1.msra.mxu0 0.0
    %1506 = vmatprep.subr.mxu0 0.0
    %1507 = vmatpush1.msra.mxu0 0.0
    %1508 = vmatprep.subr.mxu0 0.0
    %1509 = vmatpush1.msra.mxu0 0.0
    %1510 = vmatprep.subr.mxu0 0.0
    %1511 = vmatpush1.msra.mxu0 0.0
    %1512 = vmatprep.subr.mxu0 0.0
    %1513 = vmatpush1.msra.mxu0 0.0
    %1514 = vmatprep.subr.mxu0 0.0
    %1515 = vmatpush1.msra.mxu0 0.0
    %1516 = vmatprep.subr.mxu0 0.0
    %1517 = vmatpush1.msra.mxu0 0.0
    %1518 = vmatprep.subr.mxu0 0.0
    %1519 = vmatpush1.msra.mxu0 0.0
    %1520 = vmatprep.subr.mxu0 0.0
    %1521 = vmatpush1.msra.mxu0 0.0
    %1522 = vmatprep.subr.mxu0 0.0
    %1523 = vmatpush1.msra.mxu0 0.0
    %1524 = vmatprep.subr.mxu0 0.0
    %1525 = vmatpush1.msra.mxu0 0.0
    %1526 = vmatprep.subr.mxu0 0.0
    %1527 = vmatpush1.msra.mxu0 0.0
    %1528 = vmatprep.subr.mxu0 0.0
    %1529 = vmatpush1.msra.mxu0 0.0
    %1530 = vmatprep.subr.mxu0 0.0
    %1531 = vmatpush1.msra.mxu0 0.0
    %1532 = vmatprep.subr.mxu0 0.0
    %1533 = vmatpush1.msra.mxu0 0.0
    %1534 = vmatprep.subr.mxu0 0.0
    %1535 = vmatpush1.msra.mxu0 0.0
    %1536 = vmatprep.subr.mxu0 0.0
    %1537 = vmatpush1.msra.mxu0 0.0
    %1538 = vmatprep.subr.mxu0 0.0
    %1539 = vmatpush1.msra.mxu0 0.0
    %1540 = vmatprep.subr.mxu0 0.0
    %1541 = vmatpush1.msra.mxu0 0.0
    %1542 = vmatprep.subr.mxu0 0.0
    %1543 = vmatpush1.msra.mxu0 0.0
    %1544 = vmatprep.mubr.f32.mxu0 0.0
    %1545 = vmatmul.mubr.f32.gmra.mrb[0].mxu0 %v1478
    %v1546 = vpop.f32.mrb[0].mxu0
    %v1547 = vadd.f32 0.0, %v1546
    %v1548 = vpop.f32.mrb[0].mxu0
    %1549 = vdwg.mxu0
    %1552 = vrot.lane.b32.xlu0 %v712, 8
    %v1553 = vpop.permute.xlu0 %1552
    %1554 = vrot.lane.b32.xlu0 %v879, 8
    %v1555 = vpop.permute.xlu0 %1554
    %1560 = vrot.lane.b32.xlu0 %v1046, 16
    %v1561 = vpop.permute.xlu0 %1560
    %1562 = vrot.lane.b32.xlu0 %v1213, 16
    %v1563 = vpop.permute.xlu0 %1562
    %1568 = vrot.lane.b32.xlu0 %v1380, 24
    %v1569 = vpop.permute.xlu0 %1568
    %1570 = vrot.lane.b32.xlu0 %v1547, 24
    %v1571 = vpop.permute.xlu0 %1570
    %v1574 = vsel %vm210, %v375, %v1553
    %v1575 = vsel %vm210, %v545, %v1555
    %vm1576 = vcmask 130048
    %v1577 = vsel %vm1576, %v1574, %v1561
    %v1578 = vsel %vm1576, %v1575, %v1563
    %vm1579 = vcmask 195584
    %v1580 = vsel %vm1579, %v1577, %v1569
    %v1581 = vsel %vm1579, %v1578, %v1571
    %v1582 = vld [vmem:[%s6] sm:$0xff]
    %v1583 = vld [vmem:[%s6 + $0x8] sm:$0xff]
    %v1584 = vld [vmem:[%s6 + $0x10] sm:$0xff]
    %v1585 = vld [vmem:[%s6 + $0x18] sm:$0xff]
    %v1586 = vld [vmem:[%s7] sm:$0x1]
    %v1588 = vlaneseq
    %v1589 = vshrl.u32 %v1588, 7
    %v1590 = vsub.s32 0, %v1589
    %v1591 = vrot.slane %v1586, %v1590
    %v1594 = vsel %vm70, %v1580, 0
    %v1597 = vsel %vm70, %v1581, 0
    %1599 = vmatprep.subr.mxu0 0.0
    %1600 = vmatpush1.msra.mxu0 %v1582
    %1601 = vmatprep.subr.mxu0 0.0
    %1602 = vmatpush1.msra.mxu0 %v1583
    %1603 = vmatprep.subr.mxu0 0.0
    %1604 = vmatpush1.msra.mxu0 %v1584
    %1605 = vmatprep.subr.mxu0 0.0
    %1606 = vmatpush1.msra.mxu0 %v1585
    %1607 = vmatprep.subr.mxu0 0.0
    %1608 = vmatpush1.msra.mxu0 0.0
    %1609 = vmatprep.subr.mxu0 0.0
    %1610 = vmatpush1.msra.mxu0 0.0
    %1611 = vmatprep.subr.mxu0 0.0
    %1612 = vmatpush1.msra.mxu0 0.0
    %1613 = vmatprep.subr.mxu0 0.0
    %1614 = vmatpush1.msra.mxu0 0.0
    %1615 = vmatprep.subr.mxu0 0.0
    %1616 = vmatpush1.msra.mxu0 0.0
    %1617 = vmatprep.subr.mxu0 0.0
    %1618 = vmatpush1.msra.mxu0 0.0
    %1619 = vmatprep.subr.mxu0 0.0
    %1620 = vmatpush1.msra.mxu0 0.0
    %1621 = vmatprep.subr.mxu0 0.0
    %1622 = vmatpush1.msra.mxu0 0.0
    %1623 = vmatprep.subr.mxu0 0.0
    %1624 = vmatpush1.msra.mxu0 0.0
    %1625 = vmatprep.subr.mxu0 0.0
    %1626 = vmatpush1.msra.mxu0 0.0
    %1627 = vmatprep.subr.mxu0 0.0
    %1628 = vmatpush1.msra.mxu0 0.0
    %1629 = vmatprep.subr.mxu0 0.0
    %1630 = vmatpush1.msra.mxu0 0.0
    %1631 = vmatprep.subr.mxu0 0.0
    %1632 = vmatpush1.msra.mxu0 0.0
    %1633 = vmatprep.subr.mxu0 0.0
    %1634 = vmatpush1.msra.mxu0 0.0
    %1635 = vmatprep.subr.mxu0 0.0
    %1636 = vmatpush1.msra.mxu0 0.0
    %1637 = vmatprep.subr.mxu0 0.0
    %1638 = vmatpush1.msra.mxu0 0.0
    %1639 = vmatprep.subr.mxu0 0.0
    %1640 = vmatpush1.msra.mxu0 0.0
    %1641 = vmatprep.subr.mxu0 0.0
    %1642 = vmatpush1.msra.mxu0 0.0
    %1643 = vmatprep.subr.mxu0 0.0
    %1644 = vmatpush1.msra.mxu0 0.0
    %1645 = vmatprep.subr.mxu0 0.0
    %1646 = vmatpush1.msra.mxu0 0.0
    %1647 = vmatprep.subr.mxu0 0.0
    %1648 = vmatpush1.msra.mxu0 0.0
    %1649 = vmatprep.subr.mxu0 0.0
    %1650 = vmatpush1.msra.mxu0 0.0
    %1651 = vmatprep.subr.mxu0 0.0
    %1652 = vmatpush1.msra.mxu0 0.0
    %1653 = vmatprep.subr.mxu0 0.0
    %1654 = vmatpush1.msra.mxu0 0.0
    %1655 = vmatprep.subr.mxu0 0.0
    %1656 = vmatpush1.msra.mxu0 0.0
    %1657 = vmatprep.subr.mxu0 0.0
    %1658 = vmatpush1.msra.mxu0 0.0
    %1659 = vmatprep.subr.mxu0 0.0
    %1660 = vmatpush1.msra.mxu0 0.0
    %1661 = vmatprep.subr.mxu0 0.0
    %1662 = vmatpush1.msra.mxu0 0.0
    %1663 = vmatprep.mubr.f32.mxu0 0.0
    %1664 = vmatmul.mubr.f32.gmra.mrb[0].mxu0 %v1594
    %v1665 = vpop.f32.mrb[0].mxu0
    %v1666 = vadd.f32 %v1591, %v1665
    %v1667 = vpop.f32.mrb[0].mxu0
    %1668 = vmatprep.mubr.f32.mxu0 0.0
    %1669 = vmatmul.mubr.f32.gmra.mrb[0].mxu0 %v1597
    %v1670 = vpop.f32.mrb[0].mxu0
    %v1671 = vadd.f32 %v1591, %v1670
    %v1672 = vpop.f32.mrb[0].mxu0
    %1673 = vdwg.mxu0
    %v1674 = vadd.f32 %v1666, %v112
    %v1675 = vadd.f32 %v1671, %v113
    %v1676 = vld [vmem:[%s8] sm:$0x1]
    %v1677 = vld [vmem:[%s9] sm:$0x1]
    %v1678 = vsel %vm70, %v1674, 0.0
    %1679 = vadd.xlane.f32.xlu0 %v1678
    %v1680 = vpop.xlane.xlu0 %1679
    %v1681 = vsel %vm70, %v1675, 0.0
    %1682 = vadd.xlane.f32.xlu0 %v1681
    %v1683 = vpop.xlane.xlu0 %1682
    %v1684 = vmul.f32 %v1680, %v77
    %v1685 = vmul.f32 %v1683, %v77
    %v1686 = vsub.f32 %v1674, %v1684
    %v1687 = vsub.f32 %v1675, %v1685
    %v1688 = vmul.f32 %v1686, %v1686
    %v1689 = vmul.f32 %v1687, %v1687
    %v1690 = vsel %vm70, %v1688, 0.0
    %1691 = vadd.xlane.f32.xlu0 %v1690
    %v1692 = vpop.xlane.xlu0 %1691
    %v1693 = vsel %vm70, %v1689, 0.0
    %1694 = vadd.xlane.f32.xlu0 %v1693
    %v1695 = vpop.xlane.xlu0 %1694
    %v1696 = vmul.f32 %v1692, %v77
    %v1697 = vmul.f32 %v1695, %v77
    %v1698 = vadd.f32 %v1696, 1e-12
    %v1699 = vadd.f32 %v1697, 1e-12
    %v1700 = vrsqrt.pop %v1698
    %v1701 = vrsqrt.pop %v1699
    %v1702 = vmul.f32 %v1686, %v1700
    %v1703 = vmul.f32 %v1687, %v1701
    %v1705 = vlaneseq
    %v1706 = vshrl.u32 %v1705, 7
    %v1707 = vsub.s32 0, %v1706
    %v1708 = vrot.slane %v1676, %v1707
    %v1710 = vmul.f32 %v1702, %v1708
    %v1711 = vmul.f32 %v1703, %v1708
    %v1713 = vlaneseq
    %v1714 = vshrl.u32 %v1713, 7
    %v1715 = vsub.s32 0, %v1714
    %v1716 = vrot.slane %v1677, %v1715
    %v1718 = vadd.f32 %v1710, %v1716
    %v1719 = vadd.f32 %v1711, %v1716
    %v1720 = vld [vmem:[%s10] sm:$0xff]
    %v1721 = vld [vmem:[%s10 + $0x8] sm:$0xff]
    %v1722 = vld [vmem:[%s10 + $0x10] sm:$0xff]
    %v1723 = vld [vmem:[%s10 + $0x18] sm:$0xff]
    %v1724 = vld [vmem:[%s11] sm:$0x1]
    %v1726 = vlaneseq
    %v1727 = vshrl.u32 %v1726, 7
    %v1728 = vsub.s32 0, %v1727
    %v1729 = vrot.slane %v1724, %v1728
    %v1732 = vsel %vm70, %v1718, 0
    %v1735 = vsel %vm70, %v1719, 0
    %1737 = vmatprep.subr.mxu0 0.0
    %1738 = vmatpush1.msra.mxu0 %v1720
    %1739 = vmatprep.subr.mxu0 0.0
    %1740 = vmatpush1.msra.mxu0 %v1721
    %1741 = vmatprep.subr.mxu0 0.0
    %1742 = vmatpush1.msra.mxu0 %v1722
    %1743 = vmatprep.subr.mxu0 0.0
    %1744 = vmatpush1.msra.mxu0 %v1723
    %1745 = vmatprep.subr.mxu0 0.0
    %1746 = vmatpush1.msra.mxu0 0.0
    %1747 = vmatprep.subr.mxu0 0.0
    %1748 = vmatpush1.msra.mxu0 0.0
    %1749 = vmatprep.subr.mxu0 0.0
    %1750 = vmatpush1.msra.mxu0 0.0
    %1751 = vmatprep.subr.mxu0 0.0
    %1752 = vmatpush1.msra.mxu0 0.0
    %1753 = vmatprep.subr.mxu0 0.0
    %1754 = vmatpush1.msra.mxu0 0.0
    %1755 = vmatprep.subr.mxu0 0.0
    %1756 = vmatpush1.msra.mxu0 0.0
    %1757 = vmatprep.subr.mxu0 0.0
    %1758 = vmatpush1.msra.mxu0 0.0
    %1759 = vmatprep.subr.mxu0 0.0
    %1760 = vmatpush1.msra.mxu0 0.0
    %1761 = vmatprep.subr.mxu0 0.0
    %1762 = vmatpush1.msra.mxu0 0.0
    %1763 = vmatprep.subr.mxu0 0.0
    %1764 = vmatpush1.msra.mxu0 0.0
    %1765 = vmatprep.subr.mxu0 0.0
    %1766 = vmatpush1.msra.mxu0 0.0
    %1767 = vmatprep.subr.mxu0 0.0
    %1768 = vmatpush1.msra.mxu0 0.0
    %1769 = vmatprep.subr.mxu0 0.0
    %1770 = vmatpush1.msra.mxu0 0.0
    %1771 = vmatprep.subr.mxu0 0.0
    %1772 = vmatpush1.msra.mxu0 0.0
    %1773 = vmatprep.subr.mxu0 0.0
    %1774 = vmatpush1.msra.mxu0 0.0
    %1775 = vmatprep.subr.mxu0 0.0
    %1776 = vmatpush1.msra.mxu0 0.0
    %1777 = vmatprep.subr.mxu0 0.0
    %1778 = vmatpush1.msra.mxu0 0.0
    %1779 = vmatprep.subr.mxu0 0.0
    %1780 = vmatpush1.msra.mxu0 0.0
    %1781 = vmatprep.subr.mxu0 0.0
    %1782 = vmatpush1.msra.mxu0 0.0
    %1783 = vmatprep.subr.mxu0 0.0
    %1784 = vmatpush1.msra.mxu0 0.0
    %1785 = vmatprep.subr.mxu0 0.0
    %1786 = vmatpush1.msra.mxu0 0.0
    %1787 = vmatprep.subr.mxu0 0.0
    %1788 = vmatpush1.msra.mxu0 0.0
    %1789 = vmatprep.subr.mxu0 0.0
    %1790 = vmatpush1.msra.mxu0 0.0
    %1791 = vmatprep.subr.mxu0 0.0
    %1792 = vmatpush1.msra.mxu0 0.0
    %1793 = vmatprep.subr.mxu0 0.0
    %1794 = vmatpush1.msra.mxu0 0.0
    %1795 = vmatprep.subr.mxu0 0.0
    %1796 = vmatpush1.msra.mxu0 0.0
    %1797 = vmatprep.subr.mxu0 0.0
    %1798 = vmatpush1.msra.mxu0 0.0
    %1799 = vmatprep.subr.mxu0 0.0
    %1800 = vmatpush1.msra.mxu0 0.0
    %1801 = vmatprep.mubr.f32.mxu0 0.0
    %1802 = vmatmul.mubr.f32.gmra.mrb[0].mxu0 %v1732
    %v1803 = vpop.f32.mrb[0].mxu0
    %v1804 = vadd.f32 %v1729, %v1803
    %v1805 = vpop.f32.mrb[0].mxu0
    %1806 = vmatprep.mubr.f32.mxu0 0.0
    %1807 = vmatmul.mubr.f32.gmra.mrb[0].mxu0 %v1735
    %v1808 = vpop.f32.mrb[0].mxu0
    %v1809 = vadd.f32 %v1729, %v1808
    %v1810 = vpop.f32.mrb[0].mxu0
    %1811 = vdwg.mxu0
    %v1812 = vmul.f32 %v1804, 0.5
    %v1813 = vmul.f32 %v1809, 0.5
    %v1814 = vmul.f32 %v1804, 0.044715
    %v1815 = vmul.f32 %v1809, 0.044715
    %v1816 = vmul.f32 %v1814, %v1804
    %v1817 = vmul.f32 %v1815, %v1809
    %v1818 = vmul.f32 %v1816, %v1804
    %v1819 = vmul.f32 %v1817, %v1809
    %v1820 = vadd.f32 %v1804, %v1818
    %v1821 = vadd.f32 %v1809, %v1819
    %v1822 = vmul.f32 %v1820, 0.7978846
    %v1823 = vmul.f32 %v1821, 0.7978846
    %v1824 = vtanh.pop %v1822
    %v1825 = vtanh.pop %v1823
    %v1826 = vadd.f32 %v1824, 1.0
    %v1827 = vadd.f32 %v1825, 1.0
    %v1828 = vmul.f32 %v1812, %v1826
    %v1829 = vmul.f32 %v1813, %v1827
    %v1830 = vld [vmem:[%s12] sm:$0xff]
    %v1831 = vld [vmem:[%s12 + $0x8] sm:$0xff]
    %v1832 = vld [vmem:[%s12 + $0x10] sm:$0xff]
    %v1833 = vld [vmem:[%s12 + $0x18] sm:$0xff]
    %v1834 = vld [vmem:[%s12 + $0x20] sm:$0xff]
    %v1835 = vld [vmem:[%s12 + $0x28] sm:$0xff]
    %v1836 = vld [vmem:[%s12 + $0x30] sm:$0xff]
    %v1837 = vld [vmem:[%s12 + $0x38] sm:$0xff]
    %v1838 = vld [vmem:[%s13] sm:$0x1]
    %v1840 = vlaneseq
    %v1841 = vshrl.u32 %v1840, 7
    %v1842 = vsub.s32 0, %v1841
    %v1843 = vrot.slane %v1838, %v1842
    %vm1845 = vcmask 523264
    %v1847 = vsel %vm1845, %v1828, 0
    %v1850 = vsel %vm1845, %v1829, 0
    %1852 = vmatprep.subr.mxu0 0.0
    %1853 = vmatpush1.msra.mxu0 %v1830
    %1854 = vmatprep.subr.mxu0 0.0
    %1855 = vmatpush1.msra.mxu0 %v1831
    %1856 = vmatprep.subr.mxu0 0.0
    %1857 = vmatpush1.msra.mxu0 %v1832
    %1858 = vmatprep.subr.mxu0 0.0
    %1859 = vmatpush1.msra.mxu0 %v1833
    %1860 = vmatprep.subr.mxu0 0.0
    %1861 = vmatpush1.msra.mxu0 %v1834
    %1862 = vmatprep.subr.mxu0 0.0
    %1863 = vmatpush1.msra.mxu0 %v1835
    %1864 = vmatprep.subr.mxu0 0.0
    %1865 = vmatpush1.msra.mxu0 %v1836
    %1866 = vmatprep.subr.mxu0 0.0
    %1867 = vmatpush1.msra.mxu0 %v1837
    %1868 = vmatprep.subr.mxu0 0.0
    %1869 = vmatpush1.msra.mxu0 0.0
    %1870 = vmatprep.subr.mxu0 0.0
    %1871 = vmatpush1.msra.mxu0 0.0
    %1872 = vmatprep.subr.mxu0 0.0
    %1873 = vmatpush1.msra.mxu0 0.0
    %1874 = vmatprep.subr.mxu0 0.0
    %1875 = vmatpush1.msra.mxu0 0.0
    %1876 = vmatprep.subr.mxu0 0.0
    %1877 = vmatpush1.msra.mxu0 0.0
    %1878 = vmatprep.subr.mxu0 0.0
    %1879 = vmatpush1.msra.mxu0 0.0
    %1880 = vmatprep.subr.mxu0 0.0
    %1881 = vmatpush1.msra.mxu0 0.0
    %1882 = vmatprep.subr.mxu0 0.0
    %1883 = vmatpush1.msra.mxu0 0.0
    %1884 = vmatprep.subr.mxu0 0.0
    %1885 = vmatpush1.msra.mxu0 0.0
    %1886 = vmatprep.subr.mxu0 0.0
    %1887 = vmatpush1.msra.mxu0 0.0
    %1888 = vmatprep.subr.mxu0 0.0
    %1889 = vmatpush1.msra.mxu0 0.0
    %1890 = vmatprep.subr.mxu0 0.0
    %1891 = vmatpush1.msra.mxu0 0.0
    %1892 = vmatprep.subr.mxu0 0.0
    %1893 = vmatpush1.msra.mxu0 0.0
    %1894 = vmatprep.subr.mxu0 0.0
    %1895 = vmatpush1.msra.mxu0 0.0
    %1896 = vmatprep.subr.mxu0 0.0
    %1897 = vmatpush1.msra.mxu0 0.0
    %1898 = vmatprep.subr.mxu0 0.0
    %1899 = vmatpush1.msra.mxu0 0.0
    %1900 = vmatprep.subr.mxu0 0.0
    %1901 = vmatpush1.msra.mxu0 0.0
    %1902 = vmatprep.subr.mxu0 0.0
    %1903 = vmatpush1.msra.mxu0 0.0
    %1904 = vmatprep.subr.mxu0 0.0
    %1905 = vmatpush1.msra.mxu0 0.0
    %1906 = vmatprep.subr.mxu0 0.0
    %1907 = vmatpush1.msra.mxu0 0.0
    %1908 = vmatprep.subr.mxu0 0.0
    %1909 = vmatpush1.msra.mxu0 0.0
    %1910 = vmatprep.subr.mxu0 0.0
    %1911 = vmatpush1.msra.mxu0 0.0
    %1912 = vmatprep.subr.mxu0 0.0
    %1913 = vmatpush1.msra.mxu0 0.0
    %1914 = vmatprep.subr.mxu0 0.0
    %1915 = vmatpush1.msra.mxu0 0.0
    %1916 = vmatprep.mubr.f32.mxu0 0.0
    %1917 = vmatmul.mubr.f32.gmra.mrb[0].mxu0 %v1847
    %v1918 = vpop.f32.mrb[0].mxu0
    %v1919 = vadd.f32 %v1843, %v1918
    %v1920 = vpop.f32.mrb[0].mxu0
    %1921 = vmatprep.mubr.f32.mxu0 0.0
    %1922 = vmatmul.mubr.f32.gmra.mrb[0].mxu0 %v1850
    %v1923 = vpop.f32.mrb[0].mxu0
    %v1924 = vadd.f32 %v1843, %v1923
    %v1925 = vpop.f32.mrb[0].mxu0
    %1926 = vdwg.mxu0
    %v1927 = vadd.f32 %v1919, %v1718
    %v1928 = vadd.f32 %v1924, %v1719
    %v1929 = vld [vmem:[%s14] sm:$0x1]
    %v1930 = vld [vmem:[%s15] sm:$0x1]
    %v1931 = vsel %vm70, %v1927, 0.0
    %1932 = vadd.xlane.f32.xlu0 %v1931
    %v1933 = vpop.xlane.xlu0 %1932
    %v1934 = vsel %vm70, %v1928, 0.0
    %1935 = vadd.xlane.f32.xlu0 %v1934
    %v1936 = vpop.xlane.xlu0 %1935
    %v1937 = vmul.f32 %v1933, %v77
    %v1938 = vmul.f32 %v1936, %v77
    %v1939 = vsub.f32 %v1927, %v1937
    %v1940 = vsub.f32 %v1928, %v1938
    %v1941 = vmul.f32 %v1939, %v1939
    %v1942 = vmul.f32 %v1940, %v1940
    %v1943 = vsel %vm70, %v1941, 0.0
    %1944 = vadd.xlane.f32.xlu0 %v1943
    %v1945 = vpop.xlane.xlu0 %1944
    %v1946 = vsel %vm70, %v1942, 0.0
    %1947 = vadd.xlane.f32.xlu0 %v1946
    %v1948 = vpop.xlane.xlu0 %1947
    %v1949 = vmul.f32 %v1945, %v77
    %v1950 = vmul.f32 %v1948, %v77
    %v1951 = vadd.f32 %v1949, 1e-12
    %v1952 = vadd.f32 %v1950, 1e-12
    %v1953 = vrsqrt.pop %v1951
    %v1954 = vrsqrt.pop %v1952
    %v1955 = vmul.f32 %v1939, %v1953
    %v1956 = vmul.f32 %v1940, %v1954
    %v1958 = vlaneseq
    %v1959 = vshrl.u32 %v1958, 7
    %v1960 = vsub.s32 0, %v1959
    %v1961 = vrot.slane %v1929, %v1960
    %v1963 = vmul.f32 %v1955, %v1961
    %v1964 = vmul.f32 %v1956, %v1961
    %v1966 = vlaneseq
    %v1967 = vshrl.u32 %v1966, 7
    %v1968 = vsub.s32 0, %v1967
    %v1969 = vrot.slane %v1930, %v1968
    %v1971 = vadd.f32 %v1963, %v1969
    %v1972 = vadd.f32 %v1964, %v1969
    %s1973 = scalar_lea.vmem %s4, 32
    %v1974 = vld [vmem:[%s1973] sm:$0xff]
    %v1975 = vld [vmem:[%s1973 + $0x8] sm:$0xff]
    %v1976 = vld [vmem:[%s1973 + $0x10] sm:$0xff]
    %v1977 = vld [vmem:[%s1973 + $0x18] sm:$0xff]
    %s1978 = scalar_lea.vmem %s5, 1
    %v1979 = vld [vmem:[%s1978] sm:$0x1]
    %v1981 = vlaneseq
    %v1982 = vshrl.u32 %v1981, 7
    %v1983 = vsub.s32 0, %v1982
    %v1984 = vrot.slane %v1979, %v1983
    %v1987 = vsel %vm70, %v1971, 0
    %v1990 = vsel %vm70, %v1972, 0
    %1992 = vmatprep.subr.mxu0 0.0
    %1993 = vmatpush1.msra.mxu0 %v1974
    %1994 = vmatprep.subr.mxu0 0.0
    %1995 = vmatpush1.msra.mxu0 %v1975
    %1996 = vmatprep.subr.mxu0 0.0
    %1997 = vmatpush1.msra.mxu0 %v1976
    %1998 = vmatprep.subr.mxu0 0.0
    %1999 = vmatpush1.msra.mxu0 %v1977
    %2000 = vmatprep.subr.mxu0 0.0
    %2001 = vmatpush1.msra.mxu0 0.0
    %2002 = vmatprep.subr.mxu0 0.0
    %2003 = vmatpush1.msra.mxu0 0.0
    %2004 = vmatprep.subr.mxu0 0.0
    %2005 = vmatpush1.msra.mxu0 0.0
    %2006 = vmatprep.subr.mxu0 0.0
    %2007 = vmatpush1.msra.mxu0 0.0
    %2008 = vmatprep.subr.mxu0 0.0
    %2009 = vmatpush1.msra.mxu0 0.0
    %2010 = vmatprep.subr.mxu0 0.0
    %2011 = vmatpush1.msra.mxu0 0.0
    %2012 = vmatprep.subr.mxu0 0.0
    %2013 = vmatpush1.msra.mxu0 0.0
    %2014 = vmatprep.subr.mxu0 0.0
    %2015 = vmatpush1.msra.mxu0 0.0
    %2016 = vmatprep.subr.mxu0 0.0
    %2017 = vmatpush1.msra.mxu0 0.0
    %2018 = vmatprep.subr.mxu0 0.0
    %2019 = vmatpush1.msra.mxu0 0.0
    %2020 = vmatprep.subr.mxu0 0.0
    %2021 = vmatpush1.msra.mxu0 0.0
    %2022 = vmatprep.subr.mxu0 0.0
    %2023 = vmatpush1.msra.mxu0 0.0
    %2024 = vmatprep.subr.mxu0 0.0
    %2025 = vmatpush1.msra.mxu0 0.0
    %2026 = vmatprep.subr.mxu0 0.0
    %2027 = vmatpush1.msra.mxu0 0.0
    %2028 = vmatprep.subr.mxu0 0.0
    %2029 = vmatpush1.msra.mxu0 0.0
    %2030 = vmatprep.subr.mxu0 0.0
    %2031 = vmatpush1.msra.mxu0 0.0
    %2032 = vmatprep.subr.mxu0 0.0
    %2033 = vmatpush1.msra.mxu0 0.0
    %2034 = vmatprep.subr.mxu0 0.0
    %2035 = vmatpush1.msra.mxu0 0.0
    %2036 = vmatprep.subr.mxu0 0.0
    %2037 = vmatpush1.msra.mxu0 0.0
    %2038 = vmatprep.subr.mxu0 0.0
    %2039 = vmatpush1.msra.mxu0 0.0
    %2040 = vmatprep.subr.mxu0 0.0
    %2041 = vmatpush1.msra.mxu0 0.0
    %2042 = vmatprep.subr.mxu0 0.0
    %2043 = vmatpush1.msra.mxu0 0.0
    %2044 = vmatprep.subr.mxu0 0.0
    %2045 = vmatpush1.msra.mxu0 0.0
    %2046 = vmatprep.subr.mxu0 0.0
    %2047 = vmatpush1.msra.mxu0 0.0
    %2048 = vmatprep.subr.mxu0 0.0
    %2049 = vmatpush1.msra.mxu0 0.0
    %2050 = vmatprep.subr.mxu0 0.0
    %2051 = vmatpush1.msra.mxu0 0.0
    %2052 = vmatprep.subr.mxu0 0.0
    %2053 = vmatpush1.msra.mxu0 0.0
    %2054 = vmatprep.subr.mxu0 0.0
    %2055 = vmatpush1.msra.mxu0 0.0
    %2056 = vmatprep.mubr.f32.mxu0 0.0
    %2057 = vmatmul.mubr.f32.gmra.mrb[0].mxu0 %v1987
    %v2058 = vpop.f32.mrb[0].mxu0
    %v2059 = vadd.f32 %v1984, %v2058
    %v2060 = vpop.f32.mrb[0].mxu0
    %2061 = vmatprep.mubr.f32.mxu0 0.0
    %2062 = vmatmul.mubr.f32.gmra.mrb[0].mxu0 %v1990
    %v2063 = vpop.f32.mrb[0].mxu0
    %v2064 = vadd.f32 %v1984, %v2063
    %v2065 = vpop.f32.mrb[0].mxu0
    %2066 = vdwg.mxu0
    %2068 = vrot.lane.b32.xlu0 %v2059, 96
    %v2069 = vpop.permute.xlu0 %2068
    %v2070 = vsel %vm210, %v2059, 0
    %v2072 = vsel %vm210, %v2069, 0
    %2074 = vmatprep.subr.mxu0 0.0
    %2075 = vmatpush1.xpose.msra.mxu0 %v2072
    %2076 = vmatprep.subr.mxu0 0.0
    %2077 = vmatpush1.xpose.msra.mxu0 0.0
    %2078 = vmatprep.subr.mxu0 0.0
    %2079 = vmatpush1.xpose.msra.mxu0 0.0
    %2080 = vmatprep.subr.mxu0 0.0
    %2081 = vmatpush1.xpose.msra.mxu0 0.0
    %2082 = vmatprep.subr.mxu0 0.0
    %2083 = vmatpush1.xpose.msra.mxu0 0.0
    %2084 = vmatprep.subr.mxu0 0.0
    %2085 = vmatpush1.xpose.msra.mxu0 0.0
    %2086 = vmatprep.subr.mxu0 0.0
    %2087 = vmatpush1.xpose.msra.mxu0 0.0
    %2088 = vmatprep.subr.mxu0 0.0
    %2089 = vmatpush1.xpose.msra.mxu0 0.0
    %2090 = vmatprep.subr.mxu0 0.0
    %2091 = vmatpush1.xpose.msra.mxu0 0.0
    %2092 = vmatprep.subr.mxu0 0.0
    %2093 = vmatpush1.xpose.msra.mxu0 0.0
    %2094 = vmatprep.subr.mxu0 0.0
    %2095 = vmatpush1.xpose.msra.mxu0 0.0
    %2096 = vmatprep.subr.mxu0 0.0
    %2097 = vmatpush1.xpose.msra.mxu0 0.0
    %2098 = vmatprep.subr.mxu0 0.0
    %2099 = vmatpush1.xpose.msra.mxu0 0.0
    %2100 = vmatprep.subr.mxu0 0.0
    %2101 = vmatpush1.xpose.msra.mxu0 0.0
    %2102 = vmatprep.subr.mxu0 0.0
    %2103 = vmatpush1.xpose.msra.mxu0 0.0
    %2104 = vmatprep.subr.mxu0 0.0
    %2105 = vmatpush1.xpose.msra.mxu0 0.0
    %2106 = vmatprep.subr.mxu0 0.0
    %2107 = vmatpush1.xpose.msra.mxu0 0.0
    %2108 = vmatprep.subr.mxu0 0.0
    %2109 = vmatpush1.xpose.msra.mxu0 0.0
    %2110 = vmatprep.subr.mxu0 0.0
    %2111 = vmatpush1.xpose.msra.mxu0 0.0
    %2112 = vmatprep.subr.mxu0 0.0
    %2113 = vmatpush1.xpose.msra.mxu0 0.0
    %2114 = vmatprep.subr.mxu0 0.0
    %2115 = vmatpush1.xpose.msra.mxu0 0.0
    %2116 = vmatprep.subr.mxu0 0.0
    %2117 = vmatpush1.xpose.msra.mxu0 0.0
    %2118 = vmatprep.subr.mxu0 0.0
    %2119 = vmatpush1.xpose.msra.mxu0 0.0
    %2120 = vmatprep.subr.mxu0 0.0
    %2121 = vmatpush1.xpose.msra.mxu0 0.0
    %2122 = vmatprep.subr.mxu0 0.0
    %2123 = vmatpush1.xpose.msra.mxu0 0.0
    %2124 = vmatprep.subr.mxu0 0.0
    %2125 = vmatpush1.xpose.msra.mxu0 0.0
    %2126 = vmatprep.subr.mxu0 0.0
    %2127 = vmatpush1.xpose.msra.mxu0 0.0
    %2128 = vmatprep.subr.mxu0 0.0
    %2129 = vmatpush1.xpose.msra.mxu0 0.0
    %2130 = vmatprep.subr.mxu0 0.0
    %2131 = vmatpush1.xpose.msra.mxu0 0.0
    %2132 = vmatprep.subr.mxu0 0.0
    %2133 = vmatpush1.xpose.msra.mxu0 0.0
    %2134 = vmatprep.subr.mxu0 0.0
    %2135 = vmatpush1.xpose.msra.mxu0 0.0
    %2136 = vmatprep.subr.mxu0 0.0
    %2137 = vmatpush1.xpose.msra.mxu0 0.0
    %2138 = vmatprep.mubr.f32.mxu0 0.0
    %2139 = vmatmul.mubr.f32.gmra.mrb[0].mxu0 %v2070
    %v2140 = vpop.f32.mrb[0].mxu0
    %v2141 = vadd.f32 0.0, %v2140
    %v2142 = vpop.f32.mrb[0].mxu0
    %2143 = vdwg.mxu0
    %v2144 = vmul.f32 %v2141, 0.35355338
    %v2145 = vadd.f32 %v2144, %v289
    %v2146 = vsel %vm210, %v2145, -inf
    %2147 = vmax.xlane.f32.xlu0 %v2146
    %v2148 = vpop.xlane.xlu0 %2147
    %v2149 = vsub.f32 %v2145, %v2148
    %v2150 = vmul.f32 %v2149, 1.442695
    %v2151 = vpow.pop %v2150
    %v2152 = vsel %vm210, %v2151, 0.0
    %2153 = vadd.xlane.f32.xlu0 %v2152
    %v2154 = vpop.xlane.xlu0 %2153
    %v2155 = vrcp.pop %v2154
    %v2156 = vmul.f32 %v2151, %v2155
    %2157 = vrot.lane.b32.xlu0 %v2059, 64
    %v2158 = vpop.permute.xlu0 %2157
    %v2161 = vsel %vm210, %v2156, 0
    %2163 = vmatprep.subr.mxu0 0.0
    %2164 = vmatpush1.msra.mxu0 %v2158
    %2165 = vmatprep.subr.mxu0 0.0
    %2166 = vmatpush1.msra.mxu0 0.0
    %2167 = vmatprep.subr.mxu0 0.0
    %2168 = vmatpush1.msra.mxu0 0.0
    %2169 = vmatprep.subr.mxu0 0.0
    %2170 = vmatpush1.msra.mxu0 0.0
    %2171 = vmatprep.subr.mxu0 0.0
    %2172 = vmatpush1.msra.mxu0 0.0
    %2173 = vmatprep.subr.mxu0 0.0
    %2174 = vmatpush1.msra.mxu0 0.0
    %2175 = vmatprep.subr.mxu0 0.0
    %2176 = vmatpush1.msra.mxu0 0.0
    %2177 = vmatprep.subr.mxu0 0.0
    %2178 = vmatpush1.msra.mxu0 0.0
    %2179 = vmatprep.subr.mxu0 0.0
    %2180 = vmatpush1.msra.mxu0 0.0
    %2181 = vmatprep.subr.mxu0 0.0
    %2182 = vmatpush1.msra.mxu0 0.0
    %2183 = vmatprep.subr.mxu0 0.0
    %2184 = vmatpush1.msra.mxu0 0.0
    %2185 = vmatprep.subr.mxu0 0.0
    %2186 = vmatpush1.msra.mxu0 0.0
    %2187 = vmatprep.subr.mxu0 0.0
    %2188 = vmatpush1.msra.mxu0 0.0
    %2189 = vmatprep.subr.mxu0 0.0
    %2190 = vmatpush1.msra.mxu0 0.0
    %2191 = vmatprep.subr.mxu0 0.0
    %2192 = vmatpush1.msra.mxu0 0.0
    %2193 = vmatprep.subr.mxu0 0.0
    %2194 = vmatpush1.msra.mxu0 0.0
    %2195 = vmatprep.subr.mxu0 0.0
    %2196 = vmatpush1.msra.mxu0 0.0
    %2197 = vmatprep.subr.mxu0 0.0
    %2198 = vmatpush1.msra.mxu0 0.0
    %2199 = vmatprep.subr.mxu0 0.0
    %2200 = vmatpush1.msra.mxu0 0.0
    %2201 = vmatprep.subr.mxu0 0.0
    %2202 = vmatpush1.msra.mxu0 0.0
    %2203 = vmatprep.subr.mxu0 0.0
    %2204 = vmatpush1.msra.mxu0 0.0
    %2205 = vmatprep.subr.mxu0 0.0
    %2206 = vmatpush1.msra.mxu0 0.0
    %2207 = vmatprep.subr.mxu0 0.0
    %2208 = vmatpush1.msra.mxu0 0.0
    %2209 = vmatprep.subr.mxu0 0.0
    %2210 = vmatpush1.msra.mxu0 0.0
    %2211 = vmatprep.subr.mxu0 0.0
    %2212 = vmatpush1.msra.mxu0 0.0
    %2213 = vmatprep.subr.mxu0 0.0
    %2214 = vmatpush1.msra.mxu0 0.0
    %2215 = vmatprep.subr.mxu0 0.0
    %2216 = vmatpush1.msra.mxu0 0.0
    %2217 = vmatprep.subr.mxu0 0.0
    %2218 = vmatpush1.msra.mxu0 0.0
    %2219 = vmatprep.subr.mxu0 0.0
    %2220 = vmatpush1.msra.mxu0 0.0
    %2221 = vmatprep.subr.mxu0 0.0
    %2222 = vmatpush1.msra.mxu0 0.0
    %2223 = vmatprep.subr.mxu0 0.0
    %2224 = vmatpush1.msra.mxu0 0.0
    %2225 = vmatprep.subr.mxu0 0.0
    %2226 = vmatpush1.msra.mxu0 0.0
    %2227 = vmatprep.mubr.f32.mxu0 0.0
    %2228 = vmatmul.mubr.f32.gmra.mrb[0].mxu0 %v2161
    %v2229 = vpop.f32.mrb[0].mxu0
    %v2230 = vadd.f32 0.0, %v2229
    %v2231 = vpop.f32.mrb[0].mxu0
    %2232 = vdwg.mxu0
    %2234 = vrot.lane.b32.xlu0 %v2064, 96
    %v2235 = vpop.permute.xlu0 %2234
    %v2236 = vsel %vm210, %v2064, 0
    %v2238 = vsel %vm210, %v2235, 0
    %2240 = vmatprep.subr.mxu0 0.0
    %2241 = vmatpush1.xpose.msra.mxu0 %v2238
    %2242 = vmatprep.subr.mxu0 0.0
    %2243 = vmatpush1.xpose.msra.mxu0 0.0
    %2244 = vmatprep.subr.mxu0 0.0
    %2245 = vmatpush1.xpose.msra.mxu0 0.0
    %2246 = vmatprep.subr.mxu0 0.0
    %2247 = vmatpush1.xpose.msra.mxu0 0.0
    %2248 = vmatprep.subr.mxu0 0.0
    %2249 = vmatpush1.xpose.msra.mxu0 0.0
    %2250 = vmatprep.subr.mxu0 0.0
    %2251 = vmatpush1.xpose.msra.mxu0 0.0
    %2252 = vmatprep.subr.mxu0 0.0
    %2253 = vmatpush1.xpose.msra.mxu0 0.0
    %2254 = vmatprep.subr.mxu0 0.0
    %2255 = vmatpush1.xpose.msra.mxu0 0.0
    %2256 = vmatprep.subr.mxu0 0.0
    %2257 = vmatpush1.xpose.msra.mxu0 0.0
    %2258 = vmatprep.subr.mxu0 0.0
    %2259 = vmatpush1.xpose.msra.mxu0 0.0
    %2260 = vmatprep.subr.mxu0 0.0
    %2261 = vmatpush1.xpose.msra.mxu0 0.0
    %2262 = vmatprep.subr.mxu0 0.0
    %2263 = vmatpush1.xpose.msra.mxu0 0.0
    %2264 = vmatprep.subr.mxu0 0.0
    %2265 = vmatpush1.xpose.msra.mxu0 0.0
    %2266 = vmatprep.subr.mxu0 0.0
    %2267 = vmatpush1.xpose.msra.mxu0 0.0
    %2268 = vmatprep.subr.mxu0 0.0
    %2269 = vmatpush1.xpose.msra.mxu0 0.0
    %2270 = vmatprep.subr.mxu0 0.0
    %2271 = vmatpush1.xpose.msra.mxu0 0.0
    %2272 = vmatprep.subr.mxu0 0.0
    %2273 = vmatpush1.xpose.msra.mxu0 0.0
    %2274 = vmatprep.subr.mxu0 0.0
    %2275 = vmatpush1.xpose.msra.mxu0 0.0
    %2276 = vmatprep.subr.mxu0 0.0
    %2277 = vmatpush1.xpose.msra.mxu0 0.0
    %2278 = vmatprep.subr.mxu0 0.0
    %2279 = vmatpush1.xpose.msra.mxu0 0.0
    %2280 = vmatprep.subr.mxu0 0.0
    %2281 = vmatpush1.xpose.msra.mxu0 0.0
    %2282 = vmatprep.subr.mxu0 0.0
    %2283 = vmatpush1.xpose.msra.mxu0 0.0
    %2284 = vmatprep.subr.mxu0 0.0
    %2285 = vmatpush1.xpose.msra.mxu0 0.0
    %2286 = vmatprep.subr.mxu0 0.0
    %2287 = vmatpush1.xpose.msra.mxu0 0.0
    %2288 = vmatprep.subr.mxu0 0.0
    %2289 = vmatpush1.xpose.msra.mxu0 0.0
    %2290 = vmatprep.subr.mxu0 0.0
    %2291 = vmatpush1.xpose.msra.mxu0 0.0
    %2292 = vmatprep.subr.mxu0 0.0
    %2293 = vmatpush1.xpose.msra.mxu0 0.0
    %2294 = vmatprep.subr.mxu0 0.0
    %2295 = vmatpush1.xpose.msra.mxu0 0.0
    %2296 = vmatprep.subr.mxu0 0.0
    %2297 = vmatpush1.xpose.msra.mxu0 0.0
    %2298 = vmatprep.subr.mxu0 0.0
    %2299 = vmatpush1.xpose.msra.mxu0 0.0
    %2300 = vmatprep.subr.mxu0 0.0
    %2301 = vmatpush1.xpose.msra.mxu0 0.0
    %2302 = vmatprep.subr.mxu0 0.0
    %2303 = vmatpush1.xpose.msra.mxu0 0.0
    %2304 = vmatprep.mubr.f32.mxu0 0.0
    %2305 = vmatmul.mubr.f32.gmra.mrb[0].mxu0 %v2236
    %v2306 = vpop.f32.mrb[0].mxu0
    %v2307 = vadd.f32 0.0, %v2306
    %v2308 = vpop.f32.mrb[0].mxu0
    %2309 = vdwg.mxu0
    %v2310 = vmul.f32 %v2307, 0.35355338
    %v2311 = vadd.f32 %v2310, %v459
    %v2312 = vsel %vm210, %v2311, -inf
    %2313 = vmax.xlane.f32.xlu0 %v2312
    %v2314 = vpop.xlane.xlu0 %2313
    %v2315 = vsub.f32 %v2311, %v2314
    %v2316 = vmul.f32 %v2315, 1.442695
    %v2317 = vpow.pop %v2316
    %v2318 = vsel %vm210, %v2317, 0.0
    %2319 = vadd.xlane.f32.xlu0 %v2318
    %v2320 = vpop.xlane.xlu0 %2319
    %v2321 = vrcp.pop %v2320
    %v2322 = vmul.f32 %v2317, %v2321
    %2323 = vrot.lane.b32.xlu0 %v2064, 64
    %v2324 = vpop.permute.xlu0 %2323
    %v2327 = vsel %vm210, %v2322, 0
    %2329 = vmatprep.subr.mxu0 0.0
    %2330 = vmatpush1.msra.mxu0 %v2324
    %2331 = vmatprep.subr.mxu0 0.0
    %2332 = vmatpush1.msra.mxu0 0.0
    %2333 = vmatprep.subr.mxu0 0.0
    %2334 = vmatpush1.msra.mxu0 0.0
    %2335 = vmatprep.subr.mxu0 0.0
    %2336 = vmatpush1.msra.mxu0 0.0
    %2337 = vmatprep.subr.mxu0 0.0
    %2338 = vmatpush1.msra.mxu0 0.0
    %2339 = vmatprep.subr.mxu0 0.0
    %2340 = vmatpush1.msra.mxu0 0.0
    %2341 = vmatprep.subr.mxu0 0.0
    %2342 = vmatpush1.msra.mxu0 0.0
    %2343 = vmatprep.subr.mxu0 0.0
    %2344 = vmatpush1.msra.mxu0 0.0
    %2345 = vmatprep.subr.mxu0 0.0
    %2346 = vmatpush1.msra.mxu0 0.0
    %2347 = vmatprep.subr.mxu0 0.0
    %2348 = vmatpush1.msra.mxu0 0.0
    %2349 = vmatprep.subr.mxu0 0.0
    %2350 = vmatpush1.msra.mxu0 0.0
    %2351 = vmatprep.subr.mxu0 0.0
    %2352 = vmatpush1.msra.mxu0 0.0
    %2353 = vmatprep.subr.mxu0 0.0
    %2354 = vmatpush1.msra.mxu0 0.0
    %2355 = vmatprep.subr.mxu0 0.0
    %2356 = vmatpush1.msra.mxu0 0.0
    %2357 = vmatprep.subr.mxu0 0.0
    %2358 = vmatpush1.msra.mxu0 0.0
    %2359 = vmatprep.subr.mxu0 0.0
    %2360 = vmatpush1.msra.mxu0 0.0
    %2361 = vmatprep.subr.mxu0 0.0
    %2362 = vmatpush1.msra.mxu0 0.0
    %2363 = vmatprep.subr.mxu0 0.0
    %2364 = vmatpush1.msra.mxu0 0.0
    %2365 = vmatprep.subr.mxu0 0.0
    %2366 = vmatpush1.msra.mxu0 0.0
    %2367 = vmatprep.subr.mxu0 0.0
    %2368 = vmatpush1.msra.mxu0 0.0
    %2369 = vmatprep.subr.mxu0 0.0
    %2370 = vmatpush1.msra.mxu0 0.0
    %2371 = vmatprep.subr.mxu0 0.0
    %2372 = vmatpush1.msra.mxu0 0.0
    %2373 = vmatprep.subr.mxu0 0.0
    %2374 = vmatpush1.msra.mxu0 0.0
    %2375 = vmatprep.subr.mxu0 0.0
    %2376 = vmatpush1.msra.mxu0 0.0
    %2377 = vmatprep.subr.mxu0 0.0
    %2378 = vmatpush1.msra.mxu0 0.0
    %2379 = vmatprep.subr.mxu0 0.0
    %2380 = vmatpush1.msra.mxu0 0.0
    %2381 = vmatprep.subr.mxu0 0.0
    %2382 = vmatpush1.msra.mxu0 0.0
    %2383 = vmatprep.subr.mxu0 0.0
    %2384 = vmatpush1.msra.mxu0 0.0
    %2385 = vmatprep.subr.mxu0 0.0
    %2386 = vmatpush1.msra.mxu0 0.0
    %2387 = vmatprep.subr.mxu0 0.0
    %2388 = vmatpush1.msra.mxu0 0.0
    %2389 = vmatprep.subr.mxu0 0.0
    %2390 = vmatpush1.msra.mxu0 0.0
    %2391 = vmatprep.subr.mxu0 0.0
    %2392 = vmatpush1.msra.mxu0 0.0
    %2393 = vmatprep.mubr.f32.mxu0 0.0
    %2394 = vmatmul.mubr.f32.gmra.mrb[0].mxu0 %v2327
    %v2395 = vpop.f32.mrb[0].mxu0
    %v2396 = vadd.f32 0.0, %v2395
    %v2397 = vpop.f32.mrb[0].mxu0
    %2398 = vdwg.mxu0
    %2399 = vrot.lane.b32.xlu0 %v2059, 120
    %v2400 = vpop.permute.xlu0 %2399
    %2401 = vrot.lane.b32.xlu0 %v2059, 88
    %v2402 = vpop.permute.xlu0 %2401
    %v2403 = vsel %vm210, %v2400, 0
    %v2405 = vsel %vm210, %v2402, 0
    %2407 = vmatprep.subr.mxu0 0.0
    %2408 = vmatpush1.xpose.msra.mxu0 %v2405
    %2409 = vmatprep.subr.mxu0 0.0
    %2410 = vmatpush1.xpose.msra.mxu0 0.0
    %2411 = vmatprep.subr.mxu0 0.0
    %2412 = vmatpush1.xpose.msra.mxu0 0.0
    %2413 = vmatprep.subr.mxu0 0.0
    %2414 = vmatpush1.xpose.msra.mxu0 0.0
    %2415 = vmatprep.subr.mxu0 0.0
    %2416 = vmatpush1.xpose.msra.mxu0 0.0
    %2417 = vmatprep.subr.mxu0 0.0
    %2418 = vmatpush1.xpose.msra.mxu0 0.0
    %2419 = vmatprep.subr.mxu0 0.0
    %2420 = vmatpush1.xpose.msra.mxu0 0.0
    %2421 = vmatprep.subr.mxu0 0.0
    %2422 = vmatpush1.xpose.msra.mxu0 0.0
    %2423 = vmatprep.subr.mxu0 0.0
    %2424 = vmatpush1.xpose.msra.mxu0 0.0
    %2425 = vmatprep.subr.mxu0 0.0
    %2426 = vmatpush1.xpose.msra.mxu0 0.0
    %2427 = vmatprep.subr.mxu0 0.0
    %2428 = vmatpush1.xpose.msra.mxu0 0.0
    %2429 = vmatprep.subr.mxu0 0.0
    %2430 = vmatpush1.xpose.msra.mxu0 0.0
    %2431 = vmatprep.subr.mxu0 0.0
    %2432 = vmatpush1.xpose.msra.mxu0 0.0
    %2433 = vmatprep.subr.mxu0 0.0
    %2434 = vmatpush1.xpose.msra.mxu0 0.0
    %2435 = vmatprep.subr.mxu0 0.0
    %2436 = vmatpush1.xpose.msra.mxu0 0.0
    %2437 = vmatprep.subr.mxu0 0.0
    %2438 = vmatpush1.xpose.msra.mxu0 0.0
    %2439 = vmatprep.subr.mxu0 0.0
    %2440 = vmatpush1.xpose.msra.mxu0 0.0
    %2441 = vmatprep.subr.mxu0 0.0
    %2442 = vmatpush1.xpose.msra.mxu0 0.0
    %2443 = vmatprep.subr.mxu0 0.0
    %2444 = vmatpush1.xpose.msra.mxu0 0.0
    %2445 = vmatprep.subr.mxu0 0.0
    %2446 = vmatpush1.xpose.msra.mxu0 0.0
    %2447 = vmatprep.subr.mxu0 0.0
    %2448 = vmatpush1.xpose.msra.mxu0 0.0
    %2449 = vmatprep.subr.mxu0 0.0
    %2450 = vmatpush1.xpose.msra.mxu0 0.0
    %2451 = vmatprep.subr.mxu0 0.0
    %2452 = vmatpush1.xpose.msra.mxu0 0.0
    %2453 = vmatprep.subr.mxu0 0.0
    %2454 = vmatpush1.xpose.msra.mxu0 0.0
    %2455 = vmatprep.subr.mxu0 0.0
    %2456 = vmatpush1.xpose.msra.mxu0 0.0
    %2457 = vmatprep.subr.mxu0 0.0
    %2458 = vmatpush1.xpose.msra.mxu0 0.0
    %2459 = vmatprep.subr.mxu0 0.0
    %2460 = vmatpush1.xpose.msra.mxu0 0.0
    %2461 = vmatprep.subr.mxu0 0.0
    %2462 = vmatpush1.xpose.msra.mxu0 0.0
    %2463 = vmatprep.subr.mxu0 0.0
    %2464 = vmatpush1.xpose.msra.mxu0 0.0
    %2465 = vmatprep.subr.mxu0 0.0
    %2466 = vmatpush1.xpose.msra.mxu0 0.0
    %2467 = vmatprep.subr.mxu0 0.0
    %2468 = vmatpush1.xpose.msra.mxu0 0.0
    %2469 = vmatprep.subr.mxu0 0.0
    %2470 = vmatpush1.xpose.msra.mxu0 0.0
    %2471 = vmatprep.mubr.f32.mxu0 0.0
    %2472 = vmatmul.mubr.f32.gmra.mrb[0].mxu0 %v2403
    %v2473 = vpop.f32.mrb[0].mxu0
    %v2474 = vadd.f32 0.0, %v2473
    %v2475 = vpop.f32.mrb[0].mxu0
    %2476 = vdwg.mxu0
    %v2477 = vmul.f32 %v2474, 0.35355338
    %v2478 = vadd.f32 %v2477, %v289
    %v2479 = vsel %vm210, %v2478, -inf
    %2480 = vmax.xlane.f32.xlu0 %v2479
    %v2481 = vpop.xlane.xlu0 %2480
    %v2482 = vsub.f32 %v2478, %v2481
    %v2483 = vmul.f32 %v2482, 1.442695
    %v2484 = vpow.pop %v2483
    %v2485 = vsel %vm210, %v2484, 0.0
    %2486 = vadd.xlane.f32.xlu0 %v2485
    %v2487 = vpop.xlane.xlu0 %2486
    %v2488 = vrcp.pop %v2487
    %v2489 = vmul.f32 %v2484, %v2488
    %2490 = vrot.lane.b32.xlu0 %v2059, 56
    %v2491 = vpop.permute.xlu0 %2490
    %v2494 = vsel %vm210, %v2489, 0
    %2496 = vmatprep.subr.mxu0 0.0
    %2497 = vmatpush1.msra.mxu0 %v2491
    %2498 = vmatprep.subr.mxu0 0.0
    %2499 = vmatpush1.msra.mxu0 0.0
    %2500 = vmatprep.subr.mxu0 0.0
    %2501 = vmatpush1.msra.mxu0 0.0
    %2502 = vmatprep.subr.mxu0 0.0
    %2503 = vmatpush1.msra.mxu0 0.0
    %2504 = vmatprep.subr.mxu0 0.0
    %2505 = vmatpush1.msra.mxu0 0.0
    %2506 = vmatprep.subr.mxu0 0.0
    %2507 = vmatpush1.msra.mxu0 0.0
    %2508 = vmatprep.subr.mxu0 0.0
    %2509 = vmatpush1.msra.mxu0 0.0
    %2510 = vmatprep.subr.mxu0 0.0
    %2511 = vmatpush1.msra.mxu0 0.0
    %2512 = vmatprep.subr.mxu0 0.0
    %2513 = vmatpush1.msra.mxu0 0.0
    %2514 = vmatprep.subr.mxu0 0.0
    %2515 = vmatpush1.msra.mxu0 0.0
    %2516 = vmatprep.subr.mxu0 0.0
    %2517 = vmatpush1.msra.mxu0 0.0
    %2518 = vmatprep.subr.mxu0 0.0
    %2519 = vmatpush1.msra.mxu0 0.0
    %2520 = vmatprep.subr.mxu0 0.0
    %2521 = vmatpush1.msra.mxu0 0.0
    %2522 = vmatprep.subr.mxu0 0.0
    %2523 = vmatpush1.msra.mxu0 0.0
    %2524 = vmatprep.subr.mxu0 0.0
    %2525 = vmatpush1.msra.mxu0 0.0
    %2526 = vmatprep.subr.mxu0 0.0
    %2527 = vmatpush1.msra.mxu0 0.0
    %2528 = vmatprep.subr.mxu0 0.0
    %2529 = vmatpush1.msra.mxu0 0.0
    %2530 = vmatprep.subr.mxu0 0.0
    %2531 = vmatpush1.msra.mxu0 0.0
    %2532 = vmatprep.subr.mxu0 0.0
    %2533 = vmatpush1.msra.mxu0 0.0
    %2534 = vmatprep.subr.mxu0 0.0
    %2535 = vmatpush1.msra.mxu0 0.0
    %2536 = vmatprep.subr.mxu0 0.0
    %2537 = vmatpush1.msra.mxu0 0.0
    %2538 = vmatprep.subr.mxu0 0.0
    %2539 = vmatpush1.msra.mxu0 0.0
    %2540 = vmatprep.subr.mxu0 0.0
    %2541 = vmatpush1.msra.mxu0 0.0
    %2542 = vmatprep.subr.mxu0 0.0
    %2543 = vmatpush1.msra.mxu0 0.0
    %2544 = vmatprep.subr.mxu0 0.0
    %2545 = vmatpush1.msra.mxu0 0.0
    %2546 = vmatprep.subr.mxu0 0.0
    %2547 = vmatpush1.msra.mxu0 0.0
    %2548 = vmatprep.subr.mxu0 0.0
    %2549 = vmatpush1.msra.mxu0 0.0
    %2550 = vmatprep.subr.mxu0 0.0
    %2551 = vmatpush1.msra.mxu0 0.0
    %2552 = vmatprep.subr.mxu0 0.0
    %2553 = vmatpush1.msra.mxu0 0.0
    %2554 = vmatprep.subr.mxu0 0.0
    %2555 = vmatpush1.msra.mxu0 0.0
    %2556 = vmatprep.subr.mxu0 0.0
    %2557 = vmatpush1.msra.mxu0 0.0
    %2558 = vmatprep.subr.mxu0 0.0
    %2559 = vmatpush1.msra.mxu0 0.0
    %2560 = vmatprep.mubr.f32.mxu0 0.0
    %2561 = vmatmul.mubr.f32.gmra.mrb[0].mxu0 %v2494
    %v2562 = vpop.f32.mrb[0].mxu0
    %v2563 = vadd.f32 0.0, %v2562
    %v2564 = vpop.f32.mrb[0].mxu0
    %2565 = vdwg.mxu0
    %2566 = vrot.lane.b32.xlu0 %v2064, 120
    %v2567 = vpop.permute.xlu0 %2566
    %2568 = vrot.lane.b32.xlu0 %v2064, 88
    %v2569 = vpop.permute.xlu0 %2568
    %v2570 = vsel %vm210, %v2567, 0
    %v2572 = vsel %vm210, %v2569, 0
    %2574 = vmatprep.subr.mxu0 0.0
    %2575 = vmatpush1.xpose.msra.mxu0 %v2572
    %2576 = vmatprep.subr.mxu0 0.0
    %2577 = vmatpush1.xpose.msra.mxu0 0.0
    %2578 = vmatprep.subr.mxu0 0.0
    %2579 = vmatpush1.xpose.msra.mxu0 0.0
    %2580 = vmatprep.subr.mxu0 0.0
    %2581 = vmatpush1.xpose.msra.mxu0 0.0
    %2582 = vmatprep.subr.mxu0 0.0
    %2583 = vmatpush1.xpose.msra.mxu0 0.0
    %2584 = vmatprep.subr.mxu0 0.0
    %2585 = vmatpush1.xpose.msra.mxu0 0.0
    %2586 = vmatprep.subr.mxu0 0.0
    %2587 = vmatpush1.xpose.msra.mxu0 0.0
    %2588 = vmatprep.subr.mxu0 0.0
    %2589 = vmatpush1.xpose.msra.mxu0 0.0
    %2590 = vmatprep.subr.mxu0 0.0
    %2591 = vmatpush1.xpose.msra.mxu0 0.0
    %2592 = vmatprep.subr.mxu0 0.0
    %2593 = vmatpush1.xpose.msra.mxu0 0.0
    %2594 = vmatprep.subr.mxu0 0.0
    %2595 = vmatpush1.xpose.msra.mxu0 0.0
    %2596 = vmatprep.subr.mxu0 0.0
    %2597 = vmatpush1.xpose.msra.mxu0 0.0
    %2598 = vmatprep.subr.mxu0 0.0
    %2599 = vmatpush1.xpose.msra.mxu0 0.0
    %2600 = vmatprep.subr.mxu0 0.0
    %2601 = vmatpush1.xpose.msra.mxu0 0.0
    %2602 = vmatprep.subr.mxu0 0.0
    %2603 = vmatpush1.xpose.msra.mxu0 0.0
    %2604 = vmatprep.subr.mxu0 0.0
    %2605 = vmatpush1.xpose.msra.mxu0 0.0
    %2606 = vmatprep.subr.mxu0 0.0
    %2607 = vmatpush1.xpose.msra.mxu0 0.0
    %2608 = vmatprep.subr.mxu0 0.0
    %2609 = vmatpush1.xpose.msra.mxu0 0.0
    %2610 = vmatprep.subr.mxu0 0.0
    %2611 = vmatpush1.xpose.msra.mxu0 0.0
    %2612 = vmatprep.subr.mxu0 0.0
    %2613 = vmatpush1.xpose.msra.mxu0 0.0
    %2614 = vmatprep.subr.mxu0 0.0
    %2615 = vmatpush1.xpose.msra.mxu0 0.0
    %2616 = vmatprep.subr.mxu0 0.0
    %2617 = vmatpush1.xpose.msra.mxu0 0.0
    %2618 = vmatprep.subr.mxu0 0.0
    %2619 = vmatpush1.xpose.msra.mxu0 0.0
    %2620 = vmatprep.subr.mxu0 0.0
    %2621 = vmatpush1.xpose.msra.mxu0 0.0
    %2622 = vmatprep.subr.mxu0 0.0
    %2623 = vmatpush1.xpose.msra.mxu0 0.0
    %2624 = vmatprep.subr.mxu0 0.0
    %2625 = vmatpush1.xpose.msra.mxu0 0.0
    %2626 = vmatprep.subr.mxu0 0.0
    %2627 = vmatpush1.xpose.msra.mxu0 0.0
    %2628 = vmatprep.subr.mxu0 0.0
    %2629 = vmatpush1.xpose.msra.mxu0 0.0
    %2630 = vmatprep.subr.mxu0 0.0
    %2631 = vmatpush1.xpose.msra.mxu0 0.0
    %2632 = vmatprep.subr.mxu0 0.0
    %2633 = vmatpush1.xpose.msra.mxu0 0.0
    %2634 = vmatprep.subr.mxu0 0.0
    %2635 = vmatpush1.xpose.msra.mxu0 0.0
    %2636 = vmatprep.subr.mxu0 0.0
    %2637 = vmatpush1.xpose.msra.mxu0 0.0
    %2638 = vmatprep.mubr.f32.mxu0 0.0
    %2639 = vmatmul.mubr.f32.gmra.mrb[0].mxu0 %v2570
    %v2640 = vpop.f32.mrb[0].mxu0
    %v2641 = vadd.f32 0.0, %v2640
    %v2642 = vpop.f32.mrb[0].mxu0
    %2643 = vdwg.mxu0
    %v2644 = vmul.f32 %v2641, 0.35355338
    %v2645 = vadd.f32 %v2644, %v459
    %v2646 = vsel %vm210, %v2645, -inf
    %2647 = vmax.xlane.f32.xlu0 %v2646
    %v2648 = vpop.xlane.xlu0 %2647
    %v2649 = vsub.f32 %v2645, %v2648
    %v2650 = vmul.f32 %v2649, 1.442695
    %v2651 = vpow.pop %v2650
    %v2652 = vsel %vm210, %v2651, 0.0
    %2653 = vadd.xlane.f32.xlu0 %v2652
    %v2654 = vpop.xlane.xlu0 %2653
    %v2655 = vrcp.pop %v2654
    %v2656 = vmul.f32 %v2651, %v2655
    %2657 = vrot.lane.b32.xlu0 %v2064, 56
    %v2658 = vpop.permute.xlu0 %2657
    %v2661 = vsel %vm210, %v2656, 0
    %2663 = vmatprep.subr.mxu0 0.0
    %2664 = vmatpush1.msra.mxu0 %v2658
    %2665 = vmatprep.subr.mxu0 0.0
    %2666 = vmatpush1.msra.mxu0 0.0
    %2667 = vmatprep.subr.mxu0 0.0
    %2668 = vmatpush1.msra.mxu0 0.0
    %2669 = vmatprep.subr.mxu0 0.0
    %2670 = vmatpush1.msra.mxu0 0.0
    %2671 = vmatprep.subr.mxu0 0.0
    %2672 = vmatpush1.msra.mxu0 0.0
    %2673 = vmatprep.subr.mxu0 0.0
    %2674 = vmatpush1.msra.mxu0 0.0
    %2675 = vmatprep.subr.mxu0 0.0
    %2676 = vmatpush1.msra.mxu0 0.0
    %2677 = vmatprep.subr.mxu0 0.0
    %2678 = vmatpush1.msra.mxu0 0.0
    %2679 = vmatprep.subr.mxu0 0.0
    %2680 = vmatpush1.msra.mxu0 0.0
    %2681 = vmatprep.subr.mxu0 0.0
    %2682 = vmatpush1.msra.mxu0 0.0
    %2683 = vmatprep.subr.mxu0 0.0
    %2684 = vmatpush1.msra.mxu0 0.0
    %2685 = vmatprep.subr.mxu0 0.0
    %2686 = vmatpush1.msra.mxu0 0.0
    %2687 = vmatprep.subr.mxu0 0.0
    %2688 = vmatpush1.msra.mxu0 0.0
    %2689 = vmatprep.subr.mxu0 0.0
    %2690 = vmatpush1.msra.mxu0 0.0
    %2691 = vmatprep.subr.mxu0 0.0
    %2692 = vmatpush1.msra.mxu0 0.0
    %2693 = vmatprep.subr.mxu0 0.0
    %2694 = vmatpush1.msra.mxu0 0.0
    %2695 = vmatprep.subr.mxu0 0.0
    %2696 = vmatpush1.msra.mxu0 0.0
    %2697 = vmatprep.subr.mxu0 0.0
    %2698 = vmatpush1.msra.mxu0 0.0
    %2699 = vmatprep.subr.mxu0 0.0
    %2700 = vmatpush1.msra.mxu0 0.0
    %2701 = vmatprep.subr.mxu0 0.0
    %2702 = vmatpush1.msra.mxu0 0.0
    %2703 = vmatprep.subr.mxu0 0.0
    %2704 = vmatpush1.msra.mxu0 0.0
    %2705 = vmatprep.subr.mxu0 0.0
    %2706 = vmatpush1.msra.mxu0 0.0
    %2707 = vmatprep.subr.mxu0 0.0
    %2708 = vmatpush1.msra.mxu0 0.0
    %2709 = vmatprep.subr.mxu0 0.0
    %2710 = vmatpush1.msra.mxu0 0.0
    %2711 = vmatprep.subr.mxu0 0.0
    %2712 = vmatpush1.msra.mxu0 0.0
    %2713 = vmatprep.subr.mxu0 0.0
    %2714 = vmatpush1.msra.mxu0 0.0
    %2715 = vmatprep.subr.mxu0 0.0
    %2716 = vmatpush1.msra.mxu0 0.0
    %2717 = vmatprep.subr.mxu0 0.0
    %2718 = vmatpush1.msra.mxu0 0.0
    %2719 = vmatprep.subr.mxu0 0.0
    %2720 = vmatpush1.msra.mxu0 0.0
    %2721 = vmatprep.subr.mxu0 0.0
    %2722 = vmatpush1.msra.mxu0 0.0
    %2723 = vmatprep.subr.mxu0 0.0
    %2724 = vmatpush1.msra.mxu0 0.0
    %2725 = vmatprep.subr.mxu0 0.0
    %2726 = vmatpush1.msra.mxu0 0.0
    %2727 = vmatprep.mubr.f32.mxu0 0.0
    %2728 = vmatmul.mubr.f32.gmra.mrb[0].mxu0 %v2661
    %v2729 = vpop.f32.mrb[0].mxu0
    %v2730 = vadd.f32 0.0, %v2729
    %v2731 = vpop.f32.mrb[0].mxu0
    %2732 = vdwg.mxu0
    %2733 = vrot.lane.b32.xlu0 %v2059, 112
    %v2734 = vpop.permute.xlu0 %2733
    %2735 = vrot.lane.b32.xlu0 %v2059, 80
    %v2736 = vpop.permute.xlu0 %2735
    %v2737 = vsel %vm210, %v2734, 0
    %v2739 = vsel %vm210, %v2736, 0
    %2741 = vmatprep.subr.mxu0 0.0
    %2742 = vmatpush1.xpose.msra.mxu0 %v2739
    %2743 = vmatprep.subr.mxu0 0.0
    %2744 = vmatpush1.xpose.msra.mxu0 0.0
    %2745 = vmatprep.subr.mxu0 0.0
    %2746 = vmatpush1.xpose.msra.mxu0 0.0
    %2747 = vmatprep.subr.mxu0 0.0
    %2748 = vmatpush1.xpose.msra.mxu0 0.0
    %2749 = vmatprep.subr.mxu0 0.0
    %2750 = vmatpush1.xpose.msra.mxu0 0.0
    %2751 = vmatprep.subr.mxu0 0.0
    %2752 = vmatpush1.xpose.msra.mxu0 0.0
    %2753 = vmatprep.subr.mxu0 0.0
    %2754 = vmatpush1.xpose.msra.mxu0 0.0
    %2755 = vmatprep.subr.mxu0 0.0
    %2756 = vmatpush1.xpose.msra.mxu0 0.0
    %2757 = vmatprep.subr.mxu0 0.0
    %2758 = vmatpush1.xpose.msra.mxu0 0.0
    %2759 = vmatprep.subr.mxu0 0.0
    %2760 = vmatpush1.xpose.msra.mxu0 0.0
    %2761 = vmatprep.subr.mxu0 0.0
    %2762 = vmatpush1.xpose.msra.mxu0 0.0
    %2763 = vmatprep.subr.mxu0 0.0
    %2764 = vmatpush1.xpose.msra.mxu0 0.0
    %2765 = vmatprep.subr.mxu0 0.0
    %2766 = vmatpush1.xpose.msra.mxu0 0.0
    %2767 = vmatprep.subr.mxu0 0.0
    %2768 = vmatpush1.xpose.msra.mxu0 0.0
    %2769 = vmatprep.subr.mxu0 0.0
    %2770 = vmatpush1.xpose.msra.mxu0 0.0
    %2771 = vmatprep.subr.mxu0 0.0
    %2772 = vmatpush1.xpose.msra.mxu0 0.0
    %2773 = vmatprep.subr.mxu0 0.0
    %2774 = vmatpush1.xpose.msra.mxu0 0.0
    %2775 = vmatprep.subr.mxu0 0.0
    %2776 = vmatpush1.xpose.msra.mxu0 0.0
    %2777 = vmatprep.subr.mxu0 0.0
    %2778 = vmatpush1.xpose.msra.mxu0 0.0
    %2779 = vmatprep.subr.mxu0 0.0
    %2780 = vmatpush1.xpose.msra.mxu0 0.0
    %2781 = vmatprep.subr.mxu0 0.0
    %2782 = vmatpush1.xpose.msra.mxu0 0.0
    %2783 = vmatprep.subr.mxu0 0.0
    %2784 = vmatpush1.xpose.msra.mxu0 0.0
    %2785 = vmatprep.subr.mxu0 0.0
    %2786 = vmatpush1.xpose.msra.mxu0 0.0
    %2787 = vmatprep.subr.mxu0 0.0
    %2788 = vmatpush1.xpose.msra.mxu0 0.0
    %2789 = vmatprep.subr.mxu0 0.0
    %2790 = vmatpush1.xpose.msra.mxu0 0.0
    %2791 = vmatprep.subr.mxu0 0.0
    %2792 = vmatpush1.xpose.msra.mxu0 0.0
    %2793 = vmatprep.subr.mxu0 0.0
    %2794 = vmatpush1.xpose.msra.mxu0 0.0
    %2795 = vmatprep.subr.mxu0 0.0
    %2796 = vmatpush1.xpose.msra.mxu0 0.0
    %2797 = vmatprep.subr.mxu0 0.0
    %2798 = vmatpush1.xpose.msra.mxu0 0.0
    %2799 = vmatprep.subr.mxu0 0.0
    %2800 = vmatpush1.xpose.msra.mxu0 0.0
    %2801 = vmatprep.subr.mxu0 0.0
    %2802 = vmatpush1.xpose.msra.mxu0 0.0
    %2803 = vmatprep.subr.mxu0 0.0
    %2804 = vmatpush1.xpose.msra.mxu0 0.0
    %2805 = vmatprep.mubr.f32.mxu0 0.0
    %2806 = vmatmul.mubr.f32.gmra.mrb[0].mxu0 %v2737
    %v2807 = vpop.f32.mrb[0].mxu0
    %v2808 = vadd.f32 0.0, %v2807
    %v2809 = vpop.f32.mrb[0].mxu0
    %2810 = vdwg.mxu0
    %v2811 = vmul.f32 %v2808, 0.35355338
    %v2812 = vadd.f32 %v2811, %v289
    %v2813 = vsel %vm210, %v2812, -inf
    %2814 = vmax.xlane.f32.xlu0 %v2813
    %v2815 = vpop.xlane.xlu0 %2814
    %v2816 = vsub.f32 %v2812, %v2815
    %v2817 = vmul.f32 %v2816, 1.442695
    %v2818 = vpow.pop %v2817
    %v2819 = vsel %vm210, %v2818, 0.0
    %2820 = vadd.xlane.f32.xlu0 %v2819
    %v2821 = vpop.xlane.xlu0 %2820
    %v2822 = vrcp.pop %v2821
    %v2823 = vmul.f32 %v2818, %v2822
    %2824 = vrot.lane.b32.xlu0 %v2059, 48
    %v2825 = vpop.permute.xlu0 %2824
    %v2828 = vsel %vm210, %v2823, 0
    %2830 = vmatprep.subr.mxu0 0.0
    %2831 = vmatpush1.msra.mxu0 %v2825
    %2832 = vmatprep.subr.mxu0 0.0
    %2833 = vmatpush1.msra.mxu0 0.0
    %2834 = vmatprep.subr.mxu0 0.0
    %2835 = vmatpush1.msra.mxu0 0.0
    %2836 = vmatprep.subr.mxu0 0.0
    %2837 = vmatpush1.msra.mxu0 0.0
    %2838 = vmatprep.subr.mxu0 0.0
    %2839 = vmatpush1.msra.mxu0 0.0
    %2840 = vmatprep.subr.mxu0 0.0
    %2841 = vmatpush1.msra.mxu0 0.0
    %2842 = vmatprep.subr.mxu0 0.0
    %2843 = vmatpush1.msra.mxu0 0.0
    %2844 = vmatprep.subr.mxu0 0.0
    %2845 = vmatpush1.msra.mxu0 0.0
    %2846 = vmatprep.subr.mxu0 0.0
    %2847 = vmatpush1.msra.mxu0 0.0
    %2848 = vmatprep.subr.mxu0 0.0
    %2849 = vmatpush1.msra.mxu0 0.0
    %2850 = vmatprep.subr.mxu0 0.0
    %2851 = vmatpush1.msra.mxu0 0.0
    %2852 = vmatprep.subr.mxu0 0.0
    %2853 = vmatpush1.msra.mxu0 0.0
    %2854 = vmatprep.subr.mxu0 0.0
    %2855 = vmatpush1.msra.mxu0 0.0
    %2856 = vmatprep.subr.mxu0 0.0
    %2857 = vmatpush1.msra.mxu0 0.0
    %2858 = vmatprep.subr.mxu0 0.0
    %2859 = vmatpush1.msra.mxu0 0.0
    %2860 = vmatprep.subr.mxu0 0.0
    %2861 = vmatpush1.msra.mxu0 0.0
    %2862 = vmatprep.subr.mxu0 0.0
    %2863 = vmatpush1.msra.mxu0 0.0
    %2864 = vmatprep.subr.mxu0 0.0
    %2865 = vmatpush1.msra.mxu0 0.0
    %2866 = vmatprep.subr.mxu0 0.0
    %2867 = vmatpush1.msra.mxu0 0.0
    %2868 = vmatprep.subr.mxu0 0.0
    %2869 = vmatpush1.msra.mxu0 0.0
    %2870 = vmatprep.subr.mxu0 0.0
    %2871 = vmatpush1.msra.mxu0 0.0
    %2872 = vmatprep.subr.mxu0 0.0
    %2873 = vmatpush1.msra.mxu0 0.0
    %2874 = vmatprep.subr.mxu0 0.0
    %2875 = vmatpush1.msra.mxu0 0.0
    %2876 = vmatprep.subr.mxu0 0.0
    %2877 = vmatpush1.msra.mxu0 0.0
    %2878 = vmatprep.subr.mxu0 0.0
    %2879 = vmatpush1.msra.mxu0 0.0
    %2880 = vmatprep.subr.mxu0 0.0
    %2881 = vmatpush1.msra.mxu0 0.0
    %2882 = vmatprep.subr.mxu0 0.0
    %2883 = vmatpush1.msra.mxu0 0.0
    %2884 = vmatprep.subr.mxu0 0.0
    %2885 = vmatpush1.msra.mxu0 0.0
    %2886 = vmatprep.subr.mxu0 0.0
    %2887 = vmatpush1.msra.mxu0 0.0
    %2888 = vmatprep.subr.mxu0 0.0
    %2889 = vmatpush1.msra.mxu0 0.0
    %2890 = vmatprep.subr.mxu0 0.0
    %2891 = vmatpush1.msra.mxu0 0.0
    %2892 = vmatprep.subr.mxu0 0.0
    %2893 = vmatpush1.msra.mxu0 0.0
    %2894 = vmatprep.mubr.f32.mxu0 0.0
    %2895 = vmatmul.mubr.f32.gmra.mrb[0].mxu0 %v2828
    %v2896 = vpop.f32.mrb[0].mxu0
    %v2897 = vadd.f32 0.0, %v2896
    %v2898 = vpop.f32.mrb[0].mxu0
    %2899 = vdwg.mxu0
    %2900 = vrot.lane.b32.xlu0 %v2064, 112
    %v2901 = vpop.permute.xlu0 %2900
    %2902 = vrot.lane.b32.xlu0 %v2064, 80
    %v2903 = vpop.permute.xlu0 %2902
    %v2904 = vsel %vm210, %v2901, 0
    %v2906 = vsel %vm210, %v2903, 0
    %2908 = vmatprep.subr.mxu0 0.0
    %2909 = vmatpush1.xpose.msra.mxu0 %v2906
    %2910 = vmatprep.subr.mxu0 0.0
    %2911 = vmatpush1.xpose.msra.mxu0 0.0
    %2912 = vmatprep.subr.mxu0 0.0
    %2913 = vmatpush1.xpose.msra.mxu0 0.0
    %2914 = vmatprep.subr.mxu0 0.0
    %2915 = vmatpush1.xpose.msra.mxu0 0.0
    %2916 = vmatprep.subr.mxu0 0.0
    %2917 = vmatpush1.xpose.msra.mxu0 0.0
    %2918 = vmatprep.subr.mxu0 0.0
    %2919 = vmatpush1.xpose.msra.mxu0 0.0
    %2920 = vmatprep.subr.mxu0 0.0
    %2921 = vmatpush1.xpose.msra.mxu0 0.0
    %2922 = vmatprep.subr.mxu0 0.0
    %2923 = vmatpush1.xpose.msra.mxu0 0.0
    %2924 = vmatprep.subr.mxu0 0.0
    %2925 = vmatpush1.xpose.msra.mxu0 0.0
    %2926 = vmatprep.subr.mxu0 0.0
    %2927 = vmatpush1.xpose.msra.mxu0 0.0
    %2928 = vmatprep.subr.mxu0 0.0
    %2929 = vmatpush1.xpose.msra.mxu0 0.0
    %2930 = vmatprep.subr.mxu0 0.0
    %2931 = vmatpush1.xpose.msra.mxu0 0.0
    %2932 = vmatprep.subr.mxu0 0.0
    %2933 = vmatpush1.xpose.msra.mxu0 0.0
    %2934 = vmatprep.subr.mxu0 0.0
    %2935 = vmatpush1.xpose.msra.mxu0 0.0
    %2936 = vmatprep.subr.mxu0 0.0
    %2937 = vmatpush1.xpose.msra.mxu0 0.0
    %2938 = vmatprep.subr.mxu0 0.0
    %2939 = vmatpush1.xpose.msra.mxu0 0.0
    %2940 = vmatprep.subr.mxu0 0.0
    %2941 = vmatpush1.xpose.msra.mxu0 0.0
    %2942 = vmatprep.subr.mxu0 0.0
    %2943 = vmatpush1.xpose.msra.mxu0 0.0
    %2944 = vmatprep.subr.mxu0 0.0
    %2945 = vmatpush1.xpose.msra.mxu0 0.0
    %2946 = vmatprep.subr.mxu0 0.0
    %2947 = vmatpush1.xpose.msra.mxu0 0.0
    %2948 = vmatprep.subr.mxu0 0.0
    %2949 = vmatpush1.xpose.msra.mxu0 0.0
    %2950 = vmatprep.subr.mxu0 0.0
    %2951 = vmatpush1.xpose.msra.mxu0 0.0
    %2952 = vmatprep.subr.mxu0 0.0
    %2953 = vmatpush1.xpose.msra.mxu0 0.0
    %2954 = vmatprep.subr.mxu0 0.0
    %2955 = vmatpush1.xpose.msra.mxu0 0.0
    %2956 = vmatprep.subr.mxu0 0.0
    %2957 = vmatpush1.xpose.msra.mxu0 0.0
    %2958 = vmatprep.subr.mxu0 0.0
    %2959 = vmatpush1.xpose.msra.mxu0 0.0
    %2960 = vmatprep.subr.mxu0 0.0
    %2961 = vmatpush1.xpose.msra.mxu0 0.0
    %2962 = vmatprep.subr.mxu0 0.0
    %2963 = vmatpush1.xpose.msra.mxu0 0.0
    %2964 = vmatprep.subr.mxu0 0.0
    %2965 = vmatpush1.xpose.msra.mxu0 0.0
    %2966 = vmatprep.subr.mxu0 0.0
    %2967 = vmatpush1.xpose.msra.mxu0 0.0
    %2968 = vmatprep.subr.mxu0 0.0
    %2969 = vmatpush1.xpose.msra.mxu0 0.0
    %2970 = vmatprep.subr.mxu0 0.0
    %2971 = vmatpush1.xpose.msra.mxu0 0.0
    %2972 = vmatprep.mubr.f32.mxu0 0.0
    %2973 = vmatmul.mubr.f32.gmra.mrb[0].mxu0 %v2904
    %v2974 = vpop.f32.mrb[0].mxu0
    %v2975 = vadd.f32 0.0, %v2974
    %v2976 = vpop.f32.mrb[0].mxu0
    %2977 = vdwg.mxu0
    %v2978 = vmul.f32 %v2975, 0.35355338
    %v2979 = vadd.f32 %v2978, %v459
    %v2980 = vsel %vm210, %v2979, -inf
    %2981 = vmax.xlane.f32.xlu0 %v2980
    %v2982 = vpop.xlane.xlu0 %2981
    %v2983 = vsub.f32 %v2979, %v2982
    %v2984 = vmul.f32 %v2983, 1.442695
    %v2985 = vpow.pop %v2984
    %v2986 = vsel %vm210, %v2985, 0.0
    %2987 = vadd.xlane.f32.xlu0 %v2986
    %v2988 = vpop.xlane.xlu0 %2987
    %v2989 = vrcp.pop %v2988
    %v2990 = vmul.f32 %v2985, %v2989
    %2991 = vrot.lane.b32.xlu0 %v2064, 48
    %v2992 = vpop.permute.xlu0 %2991
    %v2995 = vsel %vm210, %v2990, 0
    %2997 = vmatprep.subr.mxu0 0.0
    %2998 = vmatpush1.msra.mxu0 %v2992
    %2999 = vmatprep.subr.mxu0 0.0
    %3000 = vmatpush1.msra.mxu0 0.0
    %3001 = vmatprep.subr.mxu0 0.0
    %3002 = vmatpush1.msra.mxu0 0.0
    %3003 = vmatprep.subr.mxu0 0.0
    %3004 = vmatpush1.msra.mxu0 0.0
    %3005 = vmatprep.subr.mxu0 0.0
    %3006 = vmatpush1.msra.mxu0 0.0
    %3007 = vmatprep.subr.mxu0 0.0
    %3008 = vmatpush1.msra.mxu0 0.0
    %3009 = vmatprep.subr.mxu0 0.0
    %3010 = vmatpush1.msra.mxu0 0.0
    %3011 = vmatprep.subr.mxu0 0.0
    %3012 = vmatpush1.msra.mxu0 0.0
    %3013 = vmatprep.subr.mxu0 0.0
    %3014 = vmatpush1.msra.mxu0 0.0
    %3015 = vmatprep.subr.mxu0 0.0
    %3016 = vmatpush1.msra.mxu0 0.0
    %3017 = vmatprep.subr.mxu0 0.0
    %3018 = vmatpush1.msra.mxu0 0.0
    %3019 = vmatprep.subr.mxu0 0.0
    %3020 = vmatpush1.msra.mxu0 0.0
    %3021 = vmatprep.subr.mxu0 0.0
    %3022 = vmatpush1.msra.mxu0 0.0
    %3023 = vmatprep.subr.mxu0 0.0
    %3024 = vmatpush1.msra.mxu0 0.0
    %3025 = vmatprep.subr.mxu0 0.0
    %3026 = vmatpush1.msra.mxu0 0.0
    %3027 = vmatprep.subr.mxu0 0.0
    %3028 = vmatpush1.msra.mxu0 0.0
    %3029 = vmatprep.subr.mxu0 0.0
    %3030 = vmatpush1.msra.mxu0 0.0
    %3031 = vmatprep.subr.mxu0 0.0
    %3032 = vmatpush1.msra.mxu0 0.0
    %3033 = vmatprep.subr.mxu0 0.0
    %3034 = vmatpush1.msra.mxu0 0.0
    %3035 = vmatprep.subr.mxu0 0.0
    %3036 = vmatpush1.msra.mxu0 0.0
    %3037 = vmatprep.subr.mxu0 0.0
    %3038 = vmatpush1.msra.mxu0 0.0
    %3039 = vmatprep.subr.mxu0 0.0
    %3040 = vmatpush1.msra.mxu0 0.0
    %3041 = vmatprep.subr.mxu0 0.0
    %3042 = vmatpush1.msra.mxu0 0.0
    %3043 = vmatprep.subr.mxu0 0.0
    %3044 = vmatpush1.msra.mxu0 0.0
    %3045 = vmatprep.subr.mxu0 0.0
    %3046 = vmatpush1.msra.mxu0 0.0
    %3047 = vmatprep.subr.mxu0 0.0
    %3048 = vmatpush1.msra.mxu0 0.0
    %3049 = vmatprep.subr.mxu0 0.0
    %3050 = vmatpush1.msra.mxu0 0.0
    %3051 = vmatprep.subr.mxu0 0.0
    %3052 = vmatpush1.msra.mxu0 0.0
    %3053 = vmatprep.subr.mxu0 0.0
    %3054 = vmatpush1.msra.mxu0 0.0
    %3055 = vmatprep.subr.mxu0 0.0
    %3056 = vmatpush1.msra.mxu0 0.0
    %3057 = vmatprep.subr.mxu0 0.0
    %3058 = vmatpush1.msra.mxu0 0.0
    %3059 = vmatprep.subr.mxu0 0.0
    %3060 = vmatpush1.msra.mxu0 0.0
    %3061 = vmatprep.mubr.f32.mxu0 0.0
    %3062 = vmatmul.mubr.f32.gmra.mrb[0].mxu0 %v2995
    %v3063 = vpop.f32.mrb[0].mxu0
    %v3064 = vadd.f32 0.0, %v3063
    %v3065 = vpop.f32.mrb[0].mxu0
    %3066 = vdwg.mxu0
    %3067 = vrot.lane.b32.xlu0 %v2059, 104
    %v3068 = vpop.permute.xlu0 %3067
    %3069 = vrot.lane.b32.xlu0 %v2059, 72
    %v3070 = vpop.permute.xlu0 %3069
    %v3071 = vsel %vm210, %v3068, 0
    %v3073 = vsel %vm210, %v3070, 0
    %3075 = vmatprep.subr.mxu0 0.0
    %3076 = vmatpush1.xpose.msra.mxu0 %v3073
    %3077 = vmatprep.subr.mxu0 0.0
    %3078 = vmatpush1.xpose.msra.mxu0 0.0
    %3079 = vmatprep.subr.mxu0 0.0
    %3080 = vmatpush1.xpose.msra.mxu0 0.0
    %3081 = vmatprep.subr.mxu0 0.0
    %3082 = vmatpush1.xpose.msra.mxu0 0.0
    %3083 = vmatprep.subr.mxu0 0.0
    %3084 = vmatpush1.xpose.msra.mxu0 0.0
    %3085 = vmatprep.subr.mxu0 0.0
    %3086 = vmatpush1.xpose.msra.mxu0 0.0
    %3087 = vmatprep.subr.mxu0 0.0
    %3088 = vmatpush1.xpose.msra.mxu0 0.0
    %3089 = vmatprep.subr.mxu0 0.0
    %3090 = vmatpush1.xpose.msra.mxu0 0.0
    %3091 = vmatprep.subr.mxu0 0.0
    %3092 = vmatpush1.xpose.msra.mxu0 0.0
    %3093 = vmatprep.subr.mxu0 0.0
    %3094 = vmatpush1.xpose.msra.mxu0 0.0
    %3095 = vmatprep.subr.mxu0 0.0
    %3096 = vmatpush1.xpose.msra.mxu0 0.0
    %3097 = vmatprep.subr.mxu0 0.0
    %3098 = vmatpush1.xpose.msra.mxu0 0.0
    %3099 = vmatprep.subr.mxu0 0.0
    %3100 = vmatpush1.xpose.msra.mxu0 0.0
    %3101 = vmatprep.subr.mxu0 0.0
    %3102 = vmatpush1.xpose.msra.mxu0 0.0
    %3103 = vmatprep.subr.mxu0 0.0
    %3104 = vmatpush1.xpose.msra.mxu0 0.0
    %3105 = vmatprep.subr.mxu0 0.0
    %3106 = vmatpush1.xpose.msra.mxu0 0.0
    %3107 = vmatprep.subr.mxu0 0.0
    %3108 = vmatpush1.xpose.msra.mxu0 0.0
    %3109 = vmatprep.subr.mxu0 0.0
    %3110 = vmatpush1.xpose.msra.mxu0 0.0
    %3111 = vmatprep.subr.mxu0 0.0
    %3112 = vmatpush1.xpose.msra.mxu0 0.0
    %3113 = vmatprep.subr.mxu0 0.0
    %3114 = vmatpush1.xpose.msra.mxu0 0.0
    %3115 = vmatprep.subr.mxu0 0.0
    %3116 = vmatpush1.xpose.msra.mxu0 0.0
    %3117 = vmatprep.subr.mxu0 0.0
    %3118 = vmatpush1.xpose.msra.mxu0 0.0
    %3119 = vmatprep.subr.mxu0 0.0
    %3120 = vmatpush1.xpose.msra.mxu0 0.0
    %3121 = vmatprep.subr.mxu0 0.0
    %3122 = vmatpush1.xpose.msra.mxu0 0.0
    %3123 = vmatprep.subr.mxu0 0.0
    %3124 = vmatpush1.xpose.msra.mxu0 0.0
    %3125 = vmatprep.subr.mxu0 0.0
    %3126 = vmatpush1.xpose.msra.mxu0 0.0
    %3127 = vmatprep.subr.mxu0 0.0
    %3128 = vmatpush1.xpose.msra.mxu0 0.0
    %3129 = vmatprep.subr.mxu0 0.0
    %3130 = vmatpush1.xpose.msra.mxu0 0.0
    %3131 = vmatprep.subr.mxu0 0.0
    %3132 = vmatpush1.xpose.msra.mxu0 0.0
    %3133 = vmatprep.subr.mxu0 0.0
    %3134 = vmatpush1.xpose.msra.mxu0 0.0
    %3135 = vmatprep.subr.mxu0 0.0
    %3136 = vmatpush1.xpose.msra.mxu0 0.0
    %3137 = vmatprep.subr.mxu0 0.0
    %3138 = vmatpush1.xpose.msra.mxu0 0.0
    %3139 = vmatprep.mubr.f32.mxu0 0.0
    %3140 = vmatmul.mubr.f32.gmra.mrb[0].mxu0 %v3071
    %v3141 = vpop.f32.mrb[0].mxu0
    %v3142 = vadd.f32 0.0, %v3141
    %v3143 = vpop.f32.mrb[0].mxu0
    %3144 = vdwg.mxu0
    %v3145 = vmul.f32 %v3142, 0.35355338
    %v3146 = vadd.f32 %v3145, %v289
    %v3147 = vsel %vm210, %v3146, -inf
    %3148 = vmax.xlane.f32.xlu0 %v3147
    %v3149 = vpop.xlane.xlu0 %3148
    %v3150 = vsub.f32 %v3146, %v3149
    %v3151 = vmul.f32 %v3150, 1.442695
    %v3152 = vpow.pop %v3151
    %v3153 = vsel %vm210, %v3152, 0.0
    %3154 = vadd.xlane.f32.xlu0 %v3153
    %v3155 = vpop.xlane.xlu0 %3154
    %v3156 = vrcp.pop %v3155
    %v3157 = vmul.f32 %v3152, %v3156
    %3158 = vrot.lane.b32.xlu0 %v2059, 40
    %v3159 = vpop.permute.xlu0 %3158
    %v3162 = vsel %vm210, %v3157, 0
    %3164 = vmatprep.subr.mxu0 0.0
    %3165 = vmatpush1.msra.mxu0 %v3159
    %3166 = vmatprep.subr.mxu0 0.0
    %3167 = vmatpush1.msra.mxu0 0.0
    %3168 = vmatprep.subr.mxu0 0.0
    %3169 = vmatpush1.msra.mxu0 0.0
    %3170 = vmatprep.subr.mxu0 0.0
    %3171 = vmatpush1.msra.mxu0 0.0
    %3172 = vmatprep.subr.mxu0 0.0
    %3173 = vmatpush1.msra.mxu0 0.0
    %3174 = vmatprep.subr.mxu0 0.0
    %3175 = vmatpush1.msra.mxu0 0.0
    %3176 = vmatprep.subr.mxu0 0.0
    %3177 = vmatpush1.msra.mxu0 0.0
    %3178 = vmatprep.subr.mxu0 0.0
    %3179 = vmatpush1.msra.mxu0 0.0
    %3180 = vmatprep.subr.mxu0 0.0
    %3181 = vmatpush1.msra.mxu0 0.0
    %3182 = vmatprep.subr.mxu0 0.0
    %3183 = vmatpush1.msra.mxu0 0.0
    %3184 = vmatprep.subr.mxu0 0.0
    %3185 = vmatpush1.msra.mxu0 0.0
    %3186 = vmatprep.subr.mxu0 0.0
    %3187 = vmatpush1.msra.mxu0 0.0
    %3188 = vmatprep.subr.mxu0 0.0
    %3189 = vmatpush1.msra.mxu0 0.0
    %3190 = vmatprep.subr.mxu0 0.0
    %3191 = vmatpush1.msra.mxu0 0.0
    %3192 = vmatprep.subr.mxu0 0.0
    %3193 = vmatpush1.msra.mxu0 0.0
    %3194 = vmatprep.subr.mxu0 0.0
    %3195 = vmatpush1.msra.mxu0 0.0
    %3196 = vmatprep.subr.mxu0 0.0
    %3197 = vmatpush1.msra.mxu0 0.0
    %3198 = vmatprep.subr.mxu0 0.0
    %3199 = vmatpush1.msra.mxu0 0.0
    %3200 = vmatprep.subr.mxu0 0.0
    %3201 = vmatpush1.msra.mxu0 0.0
    %3202 = vmatprep.subr.mxu0 0.0
    %3203 = vmatpush1.msra.mxu0 0.0
    %3204 = vmatprep.subr.mxu0 0.0
    %3205 = vmatpush1.msra.mxu0 0.0
    %3206 = vmatprep.subr.mxu0 0.0
    %3207 = vmatpush1.msra.mxu0 0.0
    %3208 = vmatprep.subr.mxu0 0.0
    %3209 = vmatpush1.msra.mxu0 0.0
    %3210 = vmatprep.subr.mxu0 0.0
    %3211 = vmatpush1.msra.mxu0 0.0
    %3212 = vmatprep.subr.mxu0 0.0
    %3213 = vmatpush1.msra.mxu0 0.0
    %3214 = vmatprep.subr.mxu0 0.0
    %3215 = vmatpush1.msra.mxu0 0.0
    %3216 = vmatprep.subr.mxu0 0.0
    %3217 = vmatpush1.msra.mxu0 0.0
    %3218 = vmatprep.subr.mxu0 0.0
    %3219 = vmatpush1.msra.mxu0 0.0
    %3220 = vmatprep.subr.mxu0 0.0
    %3221 = vmatpush1.msra.mxu0 0.0
    %3222 = vmatprep.subr.mxu0 0.0
    %3223 = vmatpush1.msra.mxu0 0.0
    %3224 = vmatprep.subr.mxu0 0.0
    %3225 = vmatpush1.msra.mxu0 0.0
    %3226 = vmatprep.subr.mxu0 0.0
    %3227 = vmatpush1.msra.mxu0 0.0
    %3228 = vmatprep.mubr.f32.mxu0 0.0
    %3229 = vmatmul.mubr.f32.gmra.mrb[0].mxu0 %v3162
    %v3230 = vpop.f32.mrb[0].mxu0
    %v3231 = vadd.f32 0.0, %v3230
    %v3232 = vpop.f32.mrb[0].mxu0
    %3233 = vdwg.mxu0
    %3234 = vrot.lane.b32.xlu0 %v2064, 104
    %v3235 = vpop.permute.xlu0 %3234
    %3236 = vrot.lane.b32.xlu0 %v2064, 72
    %v3237 = vpop.permute.xlu0 %3236
    %v3238 = vsel %vm210, %v3235, 0
    %v3240 = vsel %vm210, %v3237, 0
    %3242 = vmatprep.subr.mxu0 0.0
    %3243 = vmatpush1.xpose.msra.mxu0 %v3240
    %3244 = vmatprep.subr.mxu0 0.0
    %3245 = vmatpush1.xpose.msra.mxu0 0.0
    %3246 = vmatprep.subr.mxu0 0.0
    %3247 = vmatpush1.xpose.msra.mxu0 0.0
    %3248 = vmatprep.subr.mxu0 0.0
    %3249 = vmatpush1.xpose.msra.mxu0 0.0
    %3250 = vmatprep.subr.mxu0 0.0
    %3251 = vmatpush1.xpose.msra.mxu0 0.0
    %3252 = vmatprep.subr.mxu0 0.0
    %3253 = vmatpush1.xpose.msra.mxu0 0.0
    %3254 = vmatprep.subr.mxu0 0.0
    %3255 = vmatpush1.xpose.msra.mxu0 0.0
    %3256 = vmatprep.subr.mxu0 0.0
    %3257 = vmatpush1.xpose.msra.mxu0 0.0
    %3258 = vmatprep.subr.mxu0 0.0
    %3259 = vmatpush1.xpose.msra.mxu0 0.0
    %3260 = vmatprep.subr.mxu0 0.0
    %3261 = vmatpush1.xpose.msra.mxu0 0.0
    %3262 = vmatprep.subr.mxu0 0.0
    %3263 = vmatpush1.xpose.msra.mxu0 0.0
    %3264 = vmatprep.subr.mxu0 0.0
    %3265 = vmatpush1.xpose.msra.mxu0 0.0
    %3266 = vmatprep.subr.mxu0 0.0
    %3267 = vmatpush1.xpose.msra.mxu0 0.0
    %3268 = vmatprep.subr.mxu0 0.0
    %3269 = vmatpush1.xpose.msra.mxu0 0.0
    %3270 = vmatprep.subr.mxu0 0.0
    %3271 = vmatpush1.xpose.msra.mxu0 0.0
    %3272 = vmatprep.subr.mxu0 0.0
    %3273 = vmatpush1.xpose.msra.mxu0 0.0
    %3274 = vmatprep.subr.mxu0 0.0
    %3275 = vmatpush1.xpose.msra.mxu0 0.0
    %3276 = vmatprep.subr.mxu0 0.0
    %3277 = vmatpush1.xpose.msra.mxu0 0.0
    %3278 = vmatprep.subr.mxu0 0.0
    %3279 = vmatpush1.xpose.msra.mxu0 0.0
    %3280 = vmatprep.subr.mxu0 0.0
    %3281 = vmatpush1.xpose.msra.mxu0 0.0
    %3282 = vmatprep.subr.mxu0 0.0
    %3283 = vmatpush1.xpose.msra.mxu0 0.0
    %3284 = vmatprep.subr.mxu0 0.0
    %3285 = vmatpush1.xpose.msra.mxu0 0.0
    %3286 = vmatprep.subr.mxu0 0.0
    %3287 = vmatpush1.xpose.msra.mxu0 0.0
    %3288 = vmatprep.subr.mxu0 0.0
    %3289 = vmatpush1.xpose.msra.mxu0 0.0
    %3290 = vmatprep.subr.mxu0 0.0
    %3291 = vmatpush1.xpose.msra.mxu0 0.0
    %3292 = vmatprep.subr.mxu0 0.0
    %3293 = vmatpush1.xpose.msra.mxu0 0.0
    %3294 = vmatprep.subr.mxu0 0.0
    %3295 = vmatpush1.xpose.msra.mxu0 0.0
    %3296 = vmatprep.subr.mxu0 0.0
    %3297 = vmatpush1.xpose.msra.mxu0 0.0
    %3298 = vmatprep.subr.mxu0 0.0
    %3299 = vmatpush1.xpose.msra.mxu0 0.0
    %3300 = vmatprep.subr.mxu0 0.0
    %3301 = vmatpush1.xpose.msra.mxu0 0.0
    %3302 = vmatprep.subr.mxu0 0.0
    %3303 = vmatpush1.xpose.msra.mxu0 0.0
    %3304 = vmatprep.subr.mxu0 0.0
    %3305 = vmatpush1.xpose.msra.mxu0 0.0
    %3306 = vmatprep.mubr.f32.mxu0 0.0
    %3307 = vmatmul.mubr.f32.gmra.mrb[0].mxu0 %v3238
    %v3308 = vpop.f32.mrb[0].mxu0
    %v3309 = vadd.f32 0.0, %v3308
    %v3310 = vpop.f32.mrb[0].mxu0
    %3311 = vdwg.mxu0
    %v3312 = vmul.f32 %v3309, 0.35355338
    %v3313 = vadd.f32 %v3312, %v459
    %v3314 = vsel %vm210, %v3313, -inf
    %3315 = vmax.xlane.f32.xlu0 %v3314
    %v3316 = vpop.xlane.xlu0 %3315
    %v3317 = vsub.f32 %v3313, %v3316
    %v3318 = vmul.f32 %v3317, 1.442695
    %v3319 = vpow.pop %v3318
    %v3320 = vsel %vm210, %v3319, 0.0
    %3321 = vadd.xlane.f32.xlu0 %v3320
    %v3322 = vpop.xlane.xlu0 %3321
    %v3323 = vrcp.pop %v3322
    %v3324 = vmul.f32 %v3319, %v3323
    %3325 = vrot.lane.b32.xlu0 %v2064, 40
    %v3326 = vpop.permute.xlu0 %3325
    %v3329 = vsel %vm210, %v3324, 0
    %3331 = vmatprep.subr.mxu0 0.0
    %3332 = vmatpush1.msra.mxu0 %v3326
    %3333 = vmatprep.subr.mxu0 0.0
    %3334 = vmatpush1.msra.mxu0 0.0
    %3335 = vmatprep.subr.mxu0 0.0
    %3336 = vmatpush1.msra.mxu0 0.0
    %3337 = vmatprep.subr.mxu0 0.0
    %3338 = vmatpush1.msra.mxu0 0.0
    %3339 = vmatprep.subr.mxu0 0.0
    %3340 = vmatpush1.msra.mxu0 0.0
    %3341 = vmatprep.subr.mxu0 0.0
    %3342 = vmatpush1.msra.mxu0 0.0
    %3343 = vmatprep.subr.mxu0 0.0
    %3344 = vmatpush1.msra.mxu0 0.0
    %3345 = vmatprep.subr.mxu0 0.0
    %3346 = vmatpush1.msra.mxu0 0.0
    %3347 = vmatprep.subr.mxu0 0.0
    %3348 = vmatpush1.msra.mxu0 0.0
    %3349 = vmatprep.subr.mxu0 0.0
    %3350 = vmatpush1.msra.mxu0 0.0
    %3351 = vmatprep.subr.mxu0 0.0
    %3352 = vmatpush1.msra.mxu0 0.0
    %3353 = vmatprep.subr.mxu0 0.0
    %3354 = vmatpush1.msra.mxu0 0.0
    %3355 = vmatprep.subr.mxu0 0.0
    %3356 = vmatpush1.msra.mxu0 0.0
    %3357 = vmatprep.subr.mxu0 0.0
    %3358 = vmatpush1.msra.mxu0 0.0
    %3359 = vmatprep.subr.mxu0 0.0
    %3360 = vmatpush1.msra.mxu0 0.0
    %3361 = vmatprep.subr.mxu0 0.0
    %3362 = vmatpush1.msra.mxu0 0.0
    %3363 = vmatprep.subr.mxu0 0.0
    %3364 = vmatpush1.msra.mxu0 0.0
    %3365 = vmatprep.subr.mxu0 0.0
    %3366 = vmatpush1.msra.mxu0 0.0
    %3367 = vmatprep.subr.mxu0 0.0
    %3368 = vmatpush1.msra.mxu0 0.0
    %3369 = vmatprep.subr.mxu0 0.0
    %3370 = vmatpush1.msra.mxu0 0.0
    %3371 = vmatprep.subr.mxu0 0.0
    %3372 = vmatpush1.msra.mxu0 0.0
    %3373 = vmatprep.subr.mxu0 0.0
    %3374 = vmatpush1.msra.mxu0 0.0
    %3375 = vmatprep.subr.mxu0 0.0
    %3376 = vmatpush1.msra.mxu0 0.0
    %3377 = vmatprep.subr.mxu0 0.0
    %3378 = vmatpush1.msra.mxu0 0.0
    %3379 = vmatprep.subr.mxu0 0.0
    %3380 = vmatpush1.msra.mxu0 0.0
    %3381 = vmatprep.subr.mxu0 0.0
    %3382 = vmatpush1.msra.mxu0 0.0
    %3383 = vmatprep.subr.mxu0 0.0
    %3384 = vmatpush1.msra.mxu0 0.0
    %3385 = vmatprep.subr.mxu0 0.0
    %3386 = vmatpush1.msra.mxu0 0.0
    %3387 = vmatprep.subr.mxu0 0.0
    %3388 = vmatpush1.msra.mxu0 0.0
    %3389 = vmatprep.subr.mxu0 0.0
    %3390 = vmatpush1.msra.mxu0 0.0
    %3391 = vmatprep.subr.mxu0 0.0
    %3392 = vmatpush1.msra.mxu0 0.0
    %3393 = vmatprep.subr.mxu0 0.0
    %3394 = vmatpush1.msra.mxu0 0.0
    %3395 = vmatprep.mubr.f32.mxu0 0.0
    %3396 = vmatmul.mubr.f32.gmra.mrb[0].mxu0 %v3329
    %v3397 = vpop.f32.mrb[0].mxu0
    %v3398 = vadd.f32 0.0, %v3397
    %v3399 = vpop.f32.mrb[0].mxu0
    %3400 = vdwg.mxu0
    %3403 = vrot.lane.b32.xlu0 %v2563, 8
    %v3404 = vpop.permute.xlu0 %3403
    %3405 = vrot.lane.b32.xlu0 %v2730, 8
    %v3406 = vpop.permute.xlu0 %3405
    %3411 = vrot.lane.b32.xlu0 %v2897, 16
    %v3412 = vpop.permute.xlu0 %3411
    %3413 = vrot.lane.b32.xlu0 %v3064, 16
    %v3414 = vpop.permute.xlu0 %3413
    %3419 = vrot.lane.b32.xlu0 %v3231, 24
    %v3420 = vpop.permute.xlu0 %3419
    %3421 = vrot.lane.b32.xlu0 %v3398, 24
    %v3422 = vpop.permute.xlu0 %3421
    %v3425 = vsel %vm210, %v2230, %v3404
    %v3426 = vsel %vm210, %v2396, %v3406
    %v3427 = vsel %vm1576, %v3425, %v3412
    %v3428 = vsel %vm1576, %v3426, %v3414
    %v3429 = vsel %vm1579, %v3427, %v3420
    %v3430 = vsel %vm1579, %v3428, %v3422
    %s3431 = scalar_lea.vmem %s6, 32
    %v3432 = vld [vmem:[%s3431] sm:$0xff]
    %v3433 = vld [vmem:[%s3431 + $0x8] sm:$0xff]
    %v3434 = vld [vmem:[%s3431 + $0x10] sm:$0xff]
    %v3435 = vld [vmem:[%s3431 + $0x18] sm:$0xff]
    %s3436 = scalar_lea.vmem %s7, 1
    %v3437 = vld [vmem:[%s3436] sm:$0x1]
    %v3439 = vlaneseq
    %v3440 = vshrl.u32 %v3439, 7
    %v3441 = vsub.s32 0, %v3440
    %v3442 = vrot.slane %v3437, %v3441
    %v3445 = vsel %vm70, %v3429, 0
    %v3448 = vsel %vm70, %v3430, 0
    %3450 = vmatprep.subr.mxu0 0.0
    %3451 = vmatpush1.msra.mxu0 %v3432
    %3452 = vmatprep.subr.mxu0 0.0
    %3453 = vmatpush1.msra.mxu0 %v3433
    %3454 = vmatprep.subr.mxu0 0.0
    %3455 = vmatpush1.msra.mxu0 %v3434
    %3456 = vmatprep.subr.mxu0 0.0
    %3457 = vmatpush1.msra.mxu0 %v3435
    %3458 = vmatprep.subr.mxu0 0.0
    %3459 = vmatpush1.msra.mxu0 0.0
    %3460 = vmatprep.subr.mxu0 0.0
    %3461 = vmatpush1.msra.mxu0 0.0
    %3462 = vmatprep.subr.mxu0 0.0
    %3463 = vmatpush1.msra.mxu0 0.0
    %3464 = vmatprep.subr.mxu0 0.0
    %3465 = vmatpush1.msra.mxu0 0.0
    %3466 = vmatprep.subr.mxu0 0.0
    %3467 = vmatpush1.msra.mxu0 0.0
    %3468 = vmatprep.subr.mxu0 0.0
    %3469 = vmatpush1.msra.mxu0 0.0
    %3470 = vmatprep.subr.mxu0 0.0
    %3471 = vmatpush1.msra.mxu0 0.0
    %3472 = vmatprep.subr.mxu0 0.0
    %3473 = vmatpush1.msra.mxu0 0.0
    %3474 = vmatprep.subr.mxu0 0.0
    %3475 = vmatpush1.msra.mxu0 0.0
    %3476 = vmatprep.subr.mxu0 0.0
    %3477 = vmatpush1.msra.mxu0 0.0
    %3478 = vmatprep.subr.mxu0 0.0
    %3479 = vmatpush1.msra.mxu0 0.0
    %3480 = vmatprep.subr.mxu0 0.0
    %3481 = vmatpush1.msra.mxu0 0.0
    %3482 = vmatprep.subr.mxu0 0.0
    %3483 = vmatpush1.msra.mxu0 0.0
    %3484 = vmatprep.subr.mxu0 0.0
    %3485 = vmatpush1.msra.mxu0 0.0
    %3486 = vmatprep.subr.mxu0 0.0
    %3487 = vmatpush1.msra.mxu0 0.0
    %3488 = vmatprep.subr.mxu0 0.0
    %3489 = vmatpush1.msra.mxu0 0.0
    %3490 = vmatprep.subr.mxu0 0.0
    %3491 = vmatpush1.msra.mxu0 0.0
    %3492 = vmatprep.subr.mxu0 0.0
    %3493 = vmatpush1.msra.mxu0 0.0
    %3494 = vmatprep.subr.mxu0 0.0
    %3495 = vmatpush1.msra.mxu0 0.0
    %3496 = vmatprep.subr.mxu0 0.0
    %3497 = vmatpush1.msra.mxu0 0.0
    %3498 = vmatprep.subr.mxu0 0.0
    %3499 = vmatpush1.msra.mxu0 0.0
    %3500 = vmatprep.subr.mxu0 0.0
    %3501 = vmatpush1.msra.mxu0 0.0
    %3502 = vmatprep.subr.mxu0 0.0
    %3503 = vmatpush1.msra.mxu0 0.0
    %3504 = vmatprep.subr.mxu0 0.0
    %3505 = vmatpush1.msra.mxu0 0.0
    %3506 = vmatprep.subr.mxu0 0.0
    %3507 = vmatpush1.msra.mxu0 0.0
    %3508 = vmatprep.subr.mxu0 0.0
    %3509 = vmatpush1.msra.mxu0 0.0
    %3510 = vmatprep.subr.mxu0 0.0
    %3511 = vmatpush1.msra.mxu0 0.0
    %3512 = vmatprep.subr.mxu0 0.0
    %3513 = vmatpush1.msra.mxu0 0.0
    %3514 = vmatprep.mubr.f32.mxu0 0.0
    %3515 = vmatmul.mubr.f32.gmra.mrb[0].mxu0 %v3445
    %v3516 = vpop.f32.mrb[0].mxu0
    %v3517 = vadd.f32 %v3442, %v3516
    %v3518 = vpop.f32.mrb[0].mxu0
    %3519 = vmatprep.mubr.f32.mxu0 0.0
    %3520 = vmatmul.mubr.f32.gmra.mrb[0].mxu0 %v3448
    %v3521 = vpop.f32.mrb[0].mxu0
    %v3522 = vadd.f32 %v3442, %v3521
    %v3523 = vpop.f32.mrb[0].mxu0
    %3524 = vdwg.mxu0
    %v3525 = vadd.f32 %v3517, %v1971
    %v3526 = vadd.f32 %v3522, %v1972
    %s3527 = scalar_lea.vmem %s8, 1
    %v3528 = vld [vmem:[%s3527] sm:$0x1]
    %s3529 = scalar_lea.vmem %s9, 1
    %v3530 = vld [vmem:[%s3529] sm:$0x1]
    %v3531 = vsel %vm70, %v3525, 0.0
    %3532 = vadd.xlane.f32.xlu0 %v3531
    %v3533 = vpop.xlane.xlu0 %3532
    %v3534 = vsel %vm70, %v3526, 0.0
    %3535 = vadd.xlane.f32.xlu0 %v3534
    %v3536 = vpop.xlane.xlu0 %3535
    %v3537 = vmul.f32 %v3533, %v77
    %v3538 = vmul.f32 %v3536, %v77
    %v3539 = vsub.f32 %v3525, %v3537
    %v3540 = vsub.f32 %v3526, %v3538
    %v3541 = vmul.f32 %v3539, %v3539
    %v3542 = vmul.f32 %v3540, %v3540
    %v3543 = vsel %vm70, %v3541, 0.0
    %3544 = vadd.xlane.f32.xlu0 %v3543
    %v3545 = vpop.xlane.xlu0 %3544
    %v3546 = vsel %vm70, %v3542, 0.0
    %3547 = vadd.xlane.f32.xlu0 %v3546
    %v3548 = vpop.xlane.xlu0 %3547
    %v3549 = vmul.f32 %v3545, %v77
    %v3550 = vmul.f32 %v3548, %v77
    %v3551 = vadd.f32 %v3549, 1e-12
    %v3552 = vadd.f32 %v3550, 1e-12
    %v3553 = vrsqrt.pop %v3551
    %v3554 = vrsqrt.pop %v3552
    %v3555 = vmul.f32 %v3539, %v3553
    %v3556 = vmul.f32 %v3540, %v3554
    %v3558 = vlaneseq
    %v3559 = vshrl.u32 %v3558, 7
    %v3560 = vsub.s32 0, %v3559
    %v3561 = vrot.slane %v3528, %v3560
    %v3563 = vmul.f32 %v3555, %v3561
    %v3564 = vmul.f32 %v3556, %v3561
    %v3566 = vlaneseq
    %v3567 = vshrl.u32 %v3566, 7
    %v3568 = vsub.s32 0, %v3567
    %v3569 = vrot.slane %v3530, %v3568
    %v3571 = vadd.f32 %v3563, %v3569
    %v3572 = vadd.f32 %v3564, %v3569
    %s3573 = scalar_lea.vmem %s10, 32
    %v3574 = vld [vmem:[%s3573] sm:$0xff]
    %v3575 = vld [vmem:[%s3573 + $0x8] sm:$0xff]
    %v3576 = vld [vmem:[%s3573 + $0x10] sm:$0xff]
    %v3577 = vld [vmem:[%s3573 + $0x18] sm:$0xff]
    %s3578 = scalar_lea.vmem %s11, 1
    %v3579 = vld [vmem:[%s3578] sm:$0x1]
    %v3581 = vlaneseq
    %v3582 = vshrl.u32 %v3581, 7
    %v3583 = vsub.s32 0, %v3582
    %v3584 = vrot.slane %v3579, %v3583
    %v3587 = vsel %vm70, %v3571, 0
    %v3590 = vsel %vm70, %v3572, 0
    %3592 = vmatprep.subr.mxu0 0.0
    %3593 = vmatpush1.msra.mxu0 %v3574
    %3594 = vmatprep.subr.mxu0 0.0
    %3595 = vmatpush1.msra.mxu0 %v3575
    %3596 = vmatprep.subr.mxu0 0.0
    %3597 = vmatpush1.msra.mxu0 %v3576
    %3598 = vmatprep.subr.mxu0 0.0
    %3599 = vmatpush1.msra.mxu0 %v3577
    %3600 = vmatprep.subr.mxu0 0.0
    %3601 = vmatpush1.msra.mxu0 0.0
    %3602 = vmatprep.subr.mxu0 0.0
    %3603 = vmatpush1.msra.mxu0 0.0
    %3604 = vmatprep.subr.mxu0 0.0
    %3605 = vmatpush1.msra.mxu0 0.0
    %3606 = vmatprep.subr.mxu0 0.0
    %3607 = vmatpush1.msra.mxu0 0.0
    %3608 = vmatprep.subr.mxu0 0.0
    %3609 = vmatpush1.msra.mxu0 0.0
    %3610 = vmatprep.subr.mxu0 0.0
    %3611 = vmatpush1.msra.mxu0 0.0
    %3612 = vmatprep.subr.mxu0 0.0
    %3613 = vmatpush1.msra.mxu0 0.0
    %3614 = vmatprep.subr.mxu0 0.0
    %3615 = vmatpush1.msra.mxu0 0.0
    %3616 = vmatprep.subr.mxu0 0.0
    %3617 = vmatpush1.msra.mxu0 0.0
    %3618 = vmatprep.subr.mxu0 0.0
    %3619 = vmatpush1.msra.mxu0 0.0
    %3620 = vmatprep.subr.mxu0 0.0
    %3621 = vmatpush1.msra.mxu0 0.0
    %3622 = vmatprep.subr.mxu0 0.0
    %3623 = vmatpush1.msra.mxu0 0.0
    %3624 = vmatprep.subr.mxu0 0.0
    %3625 = vmatpush1.msra.mxu0 0.0
    %3626 = vmatprep.subr.mxu0 0.0
    %3627 = vmatpush1.msra.mxu0 0.0
    %3628 = vmatprep.subr.mxu0 0.0
    %3629 = vmatpush1.msra.mxu0 0.0
    %3630 = vmatprep.subr.mxu0 0.0
    %3631 = vmatpush1.msra.mxu0 0.0
    %3632 = vmatprep.subr.mxu0 0.0
    %3633 = vmatpush1.msra.mxu0 0.0
    %3634 = vmatprep.subr.mxu0 0.0
    %3635 = vmatpush1.msra.mxu0 0.0
    %3636 = vmatprep.subr.mxu0 0.0
    %3637 = vmatpush1.msra.mxu0 0.0
    %3638 = vmatprep.subr.mxu0 0.0
    %3639 = vmatpush1.msra.mxu0 0.0
    %3640 = vmatprep.subr.mxu0 0.0
    %3641 = vmatpush1.msra.mxu0 0.0
    %3642 = vmatprep.subr.mxu0 0.0
    %3643 = vmatpush1.msra.mxu0 0.0
    %3644 = vmatprep.subr.mxu0 0.0
    %3645 = vmatpush1.msra.mxu0 0.0
    %3646 = vmatprep.subr.mxu0 0.0
    %3647 = vmatpush1.msra.mxu0 0.0
    %3648 = vmatprep.subr.mxu0 0.0
    %3649 = vmatpush1.msra.mxu0 0.0
    %3650 = vmatprep.subr.mxu0 0.0
    %3651 = vmatpush1.msra.mxu0 0.0
    %3652 = vmatprep.subr.mxu0 0.0
    %3653 = vmatpush1.msra.mxu0 0.0
    %3654 = vmatprep.subr.mxu0 0.0
    %3655 = vmatpush1.msra.mxu0 0.0
    %3656 = vmatprep.mubr.f32.mxu0 0.0
    %3657 = vmatmul.mubr.f32.gmra.mrb[0].mxu0 %v3587
    %v3658 = vpop.f32.mrb[0].mxu0
    %v3659 = vadd.f32 %v3584, %v3658
    %v3660 = vpop.f32.mrb[0].mxu0
    %3661 = vmatprep.mubr.f32.mxu0 0.0
    %3662 = vmatmul.mubr.f32.gmra.mrb[0].mxu0 %v3590
    %v3663 = vpop.f32.mrb[0].mxu0
    %v3664 = vadd.f32 %v3584, %v3663
    %v3665 = vpop.f32.mrb[0].mxu0
    %3666 = vdwg.mxu0
    %v3667 = vmul.f32 %v3659, 0.5
    %v3668 = vmul.f32 %v3664, 0.5
    %v3669 = vmul.f32 %v3659, 0.044715
    %v3670 = vmul.f32 %v3664, 0.044715
    %v3671 = vmul.f32 %v3669, %v3659
    %v3672 = vmul.f32 %v3670, %v3664
    %v3673 = vmul.f32 %v3671, %v3659
    %v3674 = vmul.f32 %v3672, %v3664
    %v3675 = vadd.f32 %v3659, %v3673
    %v3676 = vadd.f32 %v3664, %v3674
    %v3677 = vmul.f32 %v3675, 0.7978846
    %v3678 = vmul.f32 %v3676, 0.7978846
    %v3679 = vtanh.pop %v3677
    %v3680 = vtanh.pop %v3678
    %v3681 = vadd.f32 %v3679, 1.0
    %v3682 = vadd.f32 %v3680, 1.0
    %v3683 = vmul.f32 %v3667, %v3681
    %v3684 = vmul.f32 %v3668, %v3682
    %s3685 = scalar_lea.vmem %s12, 64
    %v3686 = vld [vmem:[%s3685] sm:$0xff]
    %v3687 = vld [vmem:[%s3685 + $0x8] sm:$0xff]
    %v3688 = vld [vmem:[%s3685 + $0x10] sm:$0xff]
    %v3689 = vld [vmem:[%s3685 + $0x18] sm:$0xff]
    %v3690 = vld [vmem:[%s3685 + $0x20] sm:$0xff]
    %v3691 = vld [vmem:[%s3685 + $0x28] sm:$0xff]
    %v3692 = vld [vmem:[%s3685 + $0x30] sm:$0xff]
    %v3693 = vld [vmem:[%s3685 + $0x38] sm:$0xff]
    %s3694 = scalar_lea.vmem %s13, 1
    %v3695 = vld [vmem:[%s3694] sm:$0x1]
    %v3697 = vlaneseq
    %v3698 = vshrl.u32 %v3697, 7
    %v3699 = vsub.s32 0, %v3698
    %v3700 = vrot.slane %v3695, %v3699
    %v3703 = vsel %vm1845, %v3683, 0
    %v3706 = vsel %vm1845, %v3684, 0
    %3708 = vmatprep.subr.mxu0 0.0
    %3709 = vmatpush1.msra.mxu0 %v3686
    %3710 = vmatprep.subr.mxu0 0.0
    %3711 = vmatpush1.msra.mxu0 %v3687
    %3712 = vmatprep.subr.mxu0 0.0
    %3713 = vmatpush1.msra.mxu0 %v3688
    %3714 = vmatprep.subr.mxu0 0.0
    %3715 = vmatpush1.msra.mxu0 %v3689
    %3716 = vmatprep.subr.mxu0 0.0
    %3717 = vmatpush1.msra.mxu0 %v3690
    %3718 = vmatprep.subr.mxu0 0.0
    %3719 = vmatpush1.msra.mxu0 %v3691
    %3720 = vmatprep.subr.mxu0 0.0
    %3721 = vmatpush1.msra.mxu0 %v3692
    %3722 = vmatprep.subr.mxu0 0.0
    %3723 = vmatpush1.msra.mxu0 %v3693
    %3724 = vmatprep.subr.mxu0 0.0
    %3725 = vmatpush1.msra.mxu0 0.0
    %3726 = vmatprep.subr.mxu0 0.0
    %3727 = vmatpush1.msra.mxu0 0.0
    %3728 = vmatprep.subr.mxu0 0.0
    %3729 = vmatpush1.msra.mxu0 0.0
    %3730 = vmatprep.subr.mxu0 0.0
    %3731 = vmatpush1.msra.mxu0 0.0
    %3732 = vmatprep.subr.mxu0 0.0
    %3733 = vmatpush1.msra.mxu0 0.0
    %3734 = vmatprep.subr.mxu0 0.0
    %3735 = vmatpush1.msra.mxu0 0.0
    %3736 = vmatprep.subr.mxu0 0.0
    %3737 = vmatpush1.msra.mxu0 0.0
    %3738 = vmatprep.subr.mxu0 0.0
    %3739 = vmatpush1.msra.mxu0 0.0
    %3740 = vmatprep.subr.mxu0 0.0
    %3741 = vmatpush1.msra.mxu0 0.0
    %3742 = vmatprep.subr.mxu0 0.0
    %3743 = vmatpush1.msra.mxu0 0.0
    %3744 = vmatprep.subr.mxu0 0.0
    %3745 = vmatpush1.msra.mxu0 0.0
    %3746 = vmatprep.subr.mxu0 0.0
    %3747 = vmatpush1.msra.mxu0 0.0
    %3748 = vmatprep.subr.mxu0 0.0
    %3749 = vmatpush1.msra.mxu0 0.0
    %3750 = vmatprep.subr.mxu0 0.0
    %3751 = vmatpush1.msra.mxu0 0.0
    %3752 = vmatprep.subr.mxu0 0.0
    %3753 = vmatpush1.msra.mxu0 0.0
    %3754 = vmatprep.subr.mxu0 0.0
    %3755 = vmatpush1.msra.mxu0 0.0
    %3756 = vmatprep.subr.mxu0 0.0
    %3757 = vmatpush1.msra.mxu0 0.0
    %3758 = vmatprep.subr.mxu0 0.0
    %3759 = vmatpush1.msra.mxu0 0.0
    %3760 = vmatprep.subr.mxu0 0.0
    %3761 = vmatpush1.msra.mxu0 0.0
    %3762 = vmatprep.subr.mxu0 0.0
    %3763 = vmatpush1.msra.mxu0 0.0
    %3764 = vmatprep.subr.mxu0 0.0
    %3765 = vmatpush1.msra.mxu0 0.0
    %3766 = vmatprep.subr.mxu0 0.0
    %3767 = vmatpush1.msra.mxu0 0.0
    %3768 = vmatprep.subr.mxu0 0.0
    %3769 = vmatpush1.msra.mxu0 0.0
    %3770 = vmatprep.subr.mxu0 0.0
    %3771 = vmatpush1.msra.mxu0 0.0
    %3772 = vmatprep.mubr.f32.mxu0 0.0
    %3773 = vmatmul.mubr.f32.gmra.mrb[0].mxu0 %v3703
    %v3774 = vpop.f32.mrb[0].mxu0
    %v3775 = vadd.f32 %v3700, %v3774
    %v3776 = vpop.f32.mrb[0].mxu0
    %3777 = vmatprep.mubr.f32.mxu0 0.0
    %3778 = vmatmul.mubr.f32.gmra.mrb[0].mxu0 %v3706
    %v3779 = vpop.f32.mrb[0].mxu0
    %v3780 = vadd.f32 %v3700, %v3779
    %v3781 = vpop.f32.mrb[0].mxu0
    %3782 = vdwg.mxu0
    %v3783 = vadd.f32 %v3775, %v3571
    %v3784 = vadd.f32 %v3780, %v3572
    %s3785 = scalar_lea.vmem %s14, 1
    %v3786 = vld [vmem:[%s3785] sm:$0x1]
    %s3787 = scalar_lea.vmem %s15, 1
    %v3788 = vld [vmem:[%s3787] sm:$0x1]
    %v3789 = vsel %vm70, %v3783, 0.0
    %3790 = vadd.xlane.f32.xlu0 %v3789
    %v3791 = vpop.xlane.xlu0 %3790
    %v3792 = vsel %vm70, %v3784, 0.0
    %3793 = vadd.xlane.f32.xlu0 %v3792
    %v3794 = vpop.xlane.xlu0 %3793
    %v3795 = vmul.f32 %v3791, %v77
    %v3796 = vmul.f32 %v3794, %v77
    %v3797 = vsub.f32 %v3783, %v3795
    %v3798 = vsub.f32 %v3784, %v3796
    %v3799 = vmul.f32 %v3797, %v3797
    %v3800 = vmul.f32 %v3798, %v3798
    %v3801 = vsel %vm70, %v3799, 0.0
    %3802 = vadd.xlane.f32.xlu0 %v3801
    %v3803 = vpop.xlane.xlu0 %3802
    %v3804 = vsel %vm70, %v3800, 0.0
    %3805 = vadd.xlane.f32.xlu0 %v3804
    %v3806 = vpop.xlane.xlu0 %3805
    %v3807 = vmul.f32 %v3803, %v77
    %v3808 = vmul.f32 %v3806, %v77
    %v3809 = vadd.f32 %v3807, 1e-12
    %v3810 = vadd.f32 %v3808, 1e-12
    %v3811 = vrsqrt.pop %v3809
    %v3812 = vrsqrt.pop %v3810
    %v3813 = vmul.f32 %v3797, %v3811
    %v3814 = vmul.f32 %v3798, %v3812
    %v3816 = vlaneseq
    %v3817 = vshrl.u32 %v3816, 7
    %v3818 = vsub.s32 0, %v3817
    %v3819 = vrot.slane %v3786, %v3818
    %v3821 = vmul.f32 %v3813, %v3819
    %v3822 = vmul.f32 %v3814, %v3819
    %v3824 = vlaneseq
    %v3825 = vshrl.u32 %v3824, 7
    %v3826 = vsub.s32 0, %v3825
    %v3827 = vrot.slane %v3788, %v3826
    %v3829 = vadd.f32 %v3821, %v3827
    %v3830 = vadd.f32 %v3822, %v3827
    %v3832 = vrot.slane %v3830, 7
    %vm3834 = vcmask 1040384
    %v3835 = vsel %vm3834, %v3829, %v3832
    %v3836 = vld [vmem:[%s16] sm:$0xff]
    %v3837 = vld [vmem:[%s16 + $0x8] sm:$0xff]
    %v3838 = vld [vmem:[%s16 + $0x10] sm:$0xff]
    %v3839 = vld [vmem:[%s16 + $0x18] sm:$0xff]
    %v3840 = vld [vmem:[%s17] sm:$0x1]
    %v3842 = vlaneseq
    %v3843 = vshrl.u32 %v3842, 7
    %v3844 = vsub.s32 0, %v3843
    %v3845 = vrot.slane %v3840, %v3844
    %v3848 = vsel %vm70, %v3835, 0
    %3850 = vmatprep.subr.mxu0 0.0
    %3851 = vmatpush1.msra.mxu0 %v3836
    %3852 = vmatprep.subr.mxu0 0.0
    %3853 = vmatpush1.msra.mxu0 %v3837
    %3854 = vmatprep.subr.mxu0 0.0
    %3855 = vmatpush1.msra.mxu0 %v3838
    %3856 = vmatprep.subr.mxu0 0.0
    %3857 = vmatpush1.msra.mxu0 %v3839
    %3858 = vmatprep.subr.mxu0 0.0
    %3859 = vmatpush1.msra.mxu0 0.0
    %3860 = vmatprep.subr.mxu0 0.0
    %3861 = vmatpush1.msra.mxu0 0.0
    %3862 = vmatprep.subr.mxu0 0.0
    %3863 = vmatpush1.msra.mxu0 0.0
    %3864 = vmatprep.subr.mxu0 0.0
    %3865 = vmatpush1.msra.mxu0 0.0
    %3866 = vmatprep.subr.mxu0 0.0
    %3867 = vmatpush1.msra.mxu0 0.0
    %3868 = vmatprep.subr.mxu0 0.0
    %3869 = vmatpush1.msra.mxu0 0.0
    %3870 = vmatprep.subr.mxu0 0.0
    %3871 = vmatpush1.msra.mxu0 0.0
    %3872 = vmatprep.subr.mxu0 0.0
    %3873 = vmatpush1.msra.mxu0 0.0
    %3874 = vmatprep.subr.mxu0 0.0
    %3875 = vmatpush1.msra.mxu0 0.0
    %3876 = vmatprep.subr.mxu0 0.0
    %3877 = vmatpush1.msra.mxu0 0.0
    %3878 = vmatprep.subr.mxu0 0.0
    %3879 = vmatpush1.msra.mxu0 0.0
    %3880 = vmatprep.subr.mxu0 0.0
    %3881 = vmatpush1.msra.mxu0 0.0
    %3882 = vmatprep.subr.mxu0 0.0
    %3883 = vmatpush1.msra.mxu0 0.0
    %3884 = vmatprep.subr.mxu0 0.0
    %3885 = vmatpush1.msra.mxu0 0.0
    %3886 = vmatprep.subr.mxu0 0.0
    %3887 = vmatpush1.msra.mxu0 0.0
    %3888 = vmatprep.subr.mxu0 0.0
    %3889 = vmatpush1.msra.mxu0 0.0
    %3890 = vmatprep.subr.mxu0 0.0
    %3891 = vmatpush1.msra.mxu0 0.0
    %3892 = vmatprep.subr.mxu0 0.0
    %3893 = vmatpush1.msra.mxu0 0.0
    %3894 = vmatprep.subr.mxu0 0.0
    %3895 = vmatpush1.msra.mxu0 0.0
    %3896 = vmatprep.subr.mxu0 0.0
    %3897 = vmatpush1.msra.mxu0 0.0
    %3898 = vmatprep.subr.mxu0 0.0
    %3899 = vmatpush1.msra.mxu0 0.0
    %3900 = vmatprep.subr.mxu0 0.0
    %3901 = vmatpush1.msra.mxu0 0.0
    %3902 = vmatprep.subr.mxu0 0.0
    %3903 = vmatpush1.msra.mxu0 0.0
    %3904 = vmatprep.subr.mxu0 0.0
    %3905 = vmatpush1.msra.mxu0 0.0
    %3906 = vmatprep.subr.mxu0 0.0
    %3907 = vmatpush1.msra.mxu0 0.0
    %3908 = vmatprep.subr.mxu0 0.0
    %3909 = vmatpush1.msra.mxu0 0.0
    %3910 = vmatprep.subr.mxu0 0.0
    %3911 = vmatpush1.msra.mxu0 0.0
    %3912 = vmatprep.subr.mxu0 0.0
    %3913 = vmatpush1.msra.mxu0 0.0
    %3914 = vmatprep.mubr.f32.mxu0 0.0
    %3915 = vmatmul.mubr.f32.gmra.mrb[0].mxu0 %v3848
    %v3916 = vpop.f32.mrb[0].mxu0
    %v3917 = vadd.f32 %v3845, %v3916
    %v3918 = vpop.f32.mrb[0].mxu0
    %3919 = vdwg.mxu0
    %v3920 = vtanh.pop %v3917
    %v3921 = vld [vmem:[%s18] sm:$0xff]
    %v3922 = vld [vmem:[%s18 + $0x8] sm:$0xff]
    %v3923 = vld [vmem:[%s18 + $0x10] sm:$0xff]
    %v3924 = vld [vmem:[%s18 + $0x18] sm:$0xff]
    %v3925 = vld [vmem:[%s19] sm:$0x1]
    %v3927 = vlaneseq
    %v3928 = vshrl.u32 %v3927, 7
    %v3929 = vsub.s32 0, %v3928
    %v3930 = vrot.slane %v3925, %v3929
    %v3933 = vsel %vm70, %v3920, 0
    %3935 = vmatprep.subr.mxu0 0.0
    %3936 = vmatpush1.msra.mxu0 %v3921
    %3937 = vmatprep.subr.mxu0 0.0
    %3938 = vmatpush1.msra.mxu0 %v3922
    %3939 = vmatprep.subr.mxu0 0.0
    %3940 = vmatpush1.msra.mxu0 %v3923
    %3941 = vmatprep.subr.mxu0 0.0
    %3942 = vmatpush1.msra.mxu0 %v3924
    %3943 = vmatprep.subr.mxu0 0.0
    %3944 = vmatpush1.msra.mxu0 0.0
    %3945 = vmatprep.subr.mxu0 0.0
    %3946 = vmatpush1.msra.mxu0 0.0
    %3947 = vmatprep.subr.mxu0 0.0
    %3948 = vmatpush1.msra.mxu0 0.0
    %3949 = vmatprep.subr.mxu0 0.0
    %3950 = vmatpush1.msra.mxu0 0.0
    %3951 = vmatprep.subr.mxu0 0.0
    %3952 = vmatpush1.msra.mxu0 0.0
    %3953 = vmatprep.subr.mxu0 0.0
    %3954 = vmatpush1.msra.mxu0 0.0
    %3955 = vmatprep.subr.mxu0 0.0
    %3956 = vmatpush1.msra.mxu0 0.0
    %3957 = vmatprep.subr.mxu0 0.0
    %3958 = vmatpush1.msra.mxu0 0.0
    %3959 = vmatprep.subr.mxu0 0.0
    %3960 = vmatpush1.msra.mxu0 0.0
    %3961 = vmatprep.subr.mxu0 0.0
    %3962 = vmatpush1.msra.mxu0 0.0
    %3963 = vmatprep.subr.mxu0 0.0
    %3964 = vmatpush1.msra.mxu0 0.0
    %3965 = vmatprep.subr.mxu0 0.0
    %3966 = vmatpush1.msra.mxu0 0.0
    %3967 = vmatprep.subr.mxu0 0.0
    %3968 = vmatpush1.msra.mxu0 0.0
    %3969 = vmatprep.subr.mxu0 0.0
    %3970 = vmatpush1.msra.mxu0 0.0
    %3971 = vmatprep.subr.mxu0 0.0
    %3972 = vmatpush1.msra.mxu0 0.0
    %3973 = vmatprep.subr.mxu0 0.0
    %3974 = vmatpush1.msra.mxu0 0.0
    %3975 = vmatprep.subr.mxu0 0.0
    %3976 = vmatpush1.msra.mxu0 0.0
    %3977 = vmatprep.subr.mxu0 0.0
    %3978 = vmatpush1.msra.mxu0 0.0
    %3979 = vmatprep.subr.mxu0 0.0
    %3980 = vmatpush1.msra.mxu0 0.0
    %3981 = vmatprep.subr.mxu0 0.0
    %3982 = vmatpush1.msra.mxu0 0.0
    %3983 = vmatprep.subr.mxu0 0.0
    %3984 = vmatpush1.msra.mxu0 0.0
    %3985 = vmatprep.subr.mxu0 0.0
    %3986 = vmatpush1.msra.mxu0 0.0
    %3987 = vmatprep.subr.mxu0 0.0
    %3988 = vmatpush1.msra.mxu0 0.0
    %3989 = vmatprep.subr.mxu0 0.0
    %3990 = vmatpush1.msra.mxu0 0.0
    %3991 = vmatprep.subr.mxu0 0.0
    %3992 = vmatpush1.msra.mxu0 0.0
    %3993 = vmatprep.subr.mxu0 0.0
    %3994 = vmatpush1.msra.mxu0 0.0
    %3995 = vmatprep.subr.mxu0 0.0
    %3996 = vmatpush1.msra.mxu0 0.0
    %3997 = vmatprep.subr.mxu0 0.0
    %3998 = vmatpush1.msra.mxu0 0.0
    %3999 = vmatprep.mubr.f32.mxu0 0.0
    %4000 = vmatmul.mubr.f32.gmra.mrb[0].mxu0 %v3933
    %v4001 = vpop.f32.mrb[0].mxu0
    %v4002 = vadd.f32 %v3930, %v4001
    %v4003 = vpop.f32.mrb[0].mxu0
    %4004 = vdwg.mxu0
    %vm4005 = vcmask 17408
    %4006 = vst.msk [vmem:[#allocation2] sm:$0x3] %vm4005, %v4002
    // Predicated region
    $region82: #{bert_classifier_forward.1} parent=1 // pred_check
      _
    $region83: #{bert_classifier_forward.1} parent=1 // pred_check_branch
      %4008 = sbr.rel (0) target = $region85
    $region84: #{bert_classifier_forward.1} parent=1 // pred_region
      %s4010 = ssub.s32 32, 32
      %4011 = vsyncadd [#allocation3], %s4010
      %s4013 = sshll.u32 [#allocation2], 4
      %s4014 = int_to_ptr.vmem [resolvable:$true] %s4013
      %4016 = dma.vmem_to_hbm [thread:$0]  %s4014, 32, %s20, [#allocation3]
    $region85: #{bert_classifier_forward.1} parent=1 // pred_fallthru
      _
    // Predicated region
    $region86: #{bert_classifier_forward.1} parent=1 // pred_check
      _
    $region87: #{bert_classifier_forward.1} parent=1 // pred_check_branch
      %4018 = sbr.rel (0) target = $region89
    $region88: #{bert_classifier_forward.1} parent=1 // pred_region
      %4019 = dma.done [#allocation3], 32
    $region89: #{bert_classifier_forward.1} parent=1 // pred_fallthru
      _
    %4020 = vsyncpa [#allocation3], 1

</llo_original>
